<compile_context>
chip_gen: v6e
topology: v6e:2x2x1
jax: 0.10.0
libtpu: 0.0.40
codegen_flags: <defaults>
</compile_context>

<pallas_src>
import numpy as np
import jax
import jax.numpy as jnp
from jax import lax
from jax.experimental import pallas as pl
from jax.experimental.pallas import tpu as pltpu


def _pick_chunk(total, cap, row_mult=None):
    """Largest divisor of `total` <= cap; if row_mult is given, prefer chunks
    whose (chunk * row_mult) is a multiple of 8 (sublane-aligned blocks)."""
    best = None
    for c in range(min(total, max(cap, 1)), 0, -1):
        if total % c:
            continue
        if best is None:
            best = c
        if row_mult is None or c == total or (c * row_mult) % 8 == 0:
            return c
    return best if best is not None else 1


def _vmem_limit_bytes():
    """Per-kernel VMEM budget derived from the actual chip (v7x: 64 MiB per TC,
    v5e/v6e: 128 MiB). Conservative fallback if the query is unavailable."""
    cap = 64 * 1024 * 1024
    try:
        cap = int(pltpu.get_tpu_info().vmem_capacity_bytes)
    except Exception:
        pass
    return min(int(cap * 3 // 4), 100 * 1024 * 1024)


# ----------------------------------------------------------------------------
# Fused bidirectional LSTM recurrence (input projection fused in-kernel).
#
#   x2d  : (T*B, Hin) bf16  time-major inputs, rows ordered (t, b)
#   wih  : (2, Hin, 4H) bf16   input->gate weights per direction
#   whh  : (2, H,   4H) bf16   recurrent weights per direction
#   bias : (2, 4H)      f32    folded b_ih + b_hh per direction
#   out  : (out_f, out_b), each (T, B, H) bf16
#
# grid = (T // tblk,), sequential ("arbitrary").  Each grid step:
#   1. one dense chunk matmul per direction -> gate inputs in f32 VMEM scratch
#   2. fori_loop over tblk steps, fwd and bwd interleaved (independent chains)
#   3. dense bf16 writeback of the chunk's hidden states.
# Forward walks chunks 0..nc-1 / local time 0..tblk-1; backward walks chunks
# nc-1..0 / local time tblk-1..0.  h/c carries live in VMEM scratch across
# grid steps (re-initialised at chunk 0); this relies on the single grid axis
# being executed sequentially in order, which "arbitrary" guarantees.
# ----------------------------------------------------------------------------
def bilstm_recurrence_pallas(x2d, wih, whh, bias, *, batch, seq_len,
                             max_time_chunk=256):
    B, T = batch, seq_len
    TB, Hin = x2d.shape
    assert TB == T * B
    H = whh.shape[1]
    G = 4 * H

    vmem_limit = _vmem_limit_bytes()
    # Per-time-step VMEM bytes: double-buffered x blocks (2 dirs, bf16),
    # double-buffered out blocks (2 dirs, bf16), gi + h-chunk f32 scratch.
    per_t = (2 * 2 * B * Hin * 2) + (2 * 2 * B * H * 2) \
        + (2 * B * G * 4) + (2 * B * H * 4)
    w_bytes = (2 * Hin * G + 2 * H * G) * 2                # wih + whh (bf16)
    fixed = 2 * w_bytes + 2 * (2 * G * 4) + 4 * B * H * 4  # dbl-buf weights+bias, carries
    cap = max(1, min(max_time_chunk, (int(vmem_limit * 0.6) - fixed) // per_t))
    tblk = _pick_chunk(T, cap, row_mult=B)
    nc = T // tblk
    rows = tblk * B
    unroll = min(tblk, 8)

    def kernel(xf_ref, xb_ref, wih_ref, whh_ref, b_ref, of_ref, ob_ref,
               gif_scr, gib_scr, ofs_scr, obs_scr,
               hf_scr, cf_scr, hb_scr, cb_scr):
        ci = pl.program_id(0)

        @pl.when(ci == 0)
        def _():
            hf_scr[...] = jnp.zeros_like(hf_scr)
            cf_scr[...] = jnp.zeros_like(cf_scr)
            hb_scr[...] = jnp.zeros_like(hb_scr)
            cb_scr[...] = jnp.zeros_like(cb_scr)

        # Fused input projection: one dense MXU matmul per direction per chunk
        # (replaces the (2,T,B,4H) f32 gate-input HBM round trip).
        bb = b_ref[...]                                             # (2, G) f32
        gif_scr[...] = jnp.dot(xf_ref[...], wih_ref[0],
                               preferred_element_type=jnp.float32) + bb[0:1, :]
        gib_scr[...] = jnp.dot(xb_ref[...], wih_ref[1],
                               preferred_element_type=jnp.float32) + bb[1:2, :]

        wf = whh_ref[0]                        # (H, G) bf16, resident weights
        wb = whh_ref[1]

        def cell(pre, h, c):
            i = jax.nn.sigmoid(pre[:, 0 * H:1 * H])    # PyTorch gate order
            f = jax.nn.sigmoid(pre[:, 1 * H:2 * H])    # [i, f, g, o]
            g = jnp.tanh(pre[:, 2 * H:3 * H])
            o = jax.nn.sigmoid(pre[:, 3 * H:4 * H])
            c_new = f * c + i * g
            return o * jnp.tanh(c_new), c_new

        def step(j, carry):
            h_f, c_f, h_b, c_b = carry
            jb = tblk - 1 - j
            # Interleaved fwd/bwd updates: independent dependency chains, so
            # one direction's MXU/EUP latency hides under the other's compute.
            pre_f = gif_scr[pl.ds(j * B, B), :] + jnp.dot(
                h_f.astype(jnp.bfloat16), wf, preferred_element_type=jnp.float32)
            pre_b = gib_scr[pl.ds(jb * B, B), :] + jnp.dot(
                h_b.astype(jnp.bfloat16), wb, preferred_element_type=jnp.float32)
            h_f, c_f = cell(pre_f, h_f, c_f)
            h_b, c_b = cell(pre_b, h_b, c_b)
            ofs_scr[j] = h_f
            obs_scr[jb] = h_b
            return h_f, c_f, h_b, c_b

        carry0 = (hf_scr[...], cf_scr[...], hb_scr[...], cb_scr[...])
        h_f, c_f, h_b, c_b = lax.fori_loop(0, tblk, step, carry0, unroll=unroll)
        hf_scr[...] = h_f
        cf_scr[...] = c_f
        hb_scr[...] = h_b
        cb_scr[...] = c_b

        # Dense once-per-chunk bf16 writeback (halves the y2 HBM stream).
        of_ref[...] = ofs_scr[...].astype(of_ref.dtype)
        ob_ref[...] = obs_scr[...].astype(ob_ref.dtype)

    out_shape = (jax.ShapeDtypeStruct((T, B, H), jnp.bfloat16),
                 jax.ShapeDtypeStruct((T, B, H), jnp.bfloat16))

    return pl.pallas_call(
        kernel,
        out_shape=out_shape,
        grid_spec=pltpu.PrefetchScalarGridSpec(
            num_scalar_prefetch=0,
            grid=(nc,),
            in_specs=[
                pl.BlockSpec((rows, Hin), lambda c: (c, 0)),           # x fwd chunk
                pl.BlockSpec((rows, Hin), lambda c: (nc - 1 - c, 0)),  # x bwd chunk
                pl.BlockSpec((2, Hin, G), lambda c: (0, 0, 0)),        # W_ih (resident)
                pl.BlockSpec((2, H, G), lambda c: (0, 0, 0)),          # W_hh (resident)
                pl.BlockSpec((2, G), lambda c: (0, 0)),                # bias (resident)
            ],
            out_specs=[
                pl.BlockSpec((tblk, B, H), lambda c: (c, 0, 0)),            # fwd h
                pl.BlockSpec((tblk, B, H), lambda c: (nc - 1 - c, 0, 0)),   # bwd h
            ],
            scratch_shapes=[
                pltpu.VMEM((rows, G), jnp.float32),      # gate inputs fwd
                pltpu.VMEM((rows, G), jnp.float32),      # gate inputs bwd
                pltpu.VMEM((tblk, B, H), jnp.float32),   # h chunk fwd
                pltpu.VMEM((tblk, B, H), jnp.float32),   # h chunk bwd
                pltpu.VMEM((B, H), jnp.float32),         # h carry fwd
                pltpu.VMEM((B, H), jnp.float32),         # c carry fwd
                pltpu.VMEM((B, H), jnp.float32),         # h carry bwd
                pltpu.VMEM((B, H), jnp.float32),         # c carry bwd
            ],
        ),
        compiler_params=pltpu.CompilerParams(
            dimension_semantics=("arbitrary",),
            vmem_limit_bytes=vmem_limit,
        ),
    )(x2d, x2d, wih, whh, bias)


# ----------------------------------------------------------------------------
# Fused concat(fwd,bwd) + LayerNorm (eps=1e-5) + ReLU, tiled over time.
# No lane-axis concat: mean/var from per-direction partial sums; the two
# normalized halves are written to o[..., :H] and o[..., H:].
# ----------------------------------------------------------------------------
def layernorm_relu_pallas(y_f, y_b, gamma, beta):
    T, B, H = y_f.shape
    C = 2 * H
    vmem_limit = _vmem_limit_bytes()
    per_t = 2 * 2 * B * H * 2 + 2 * B * C * 4
    cap = max(1, min(512, int(vmem_limit * 0.6) // per_t))
    tblk = _pick_chunk(T, cap)
    nt = T // tblk

    def kernel(yf_ref, yb_ref, g_ref, b_ref, o_ref):
        yf = yf_ref[...].astype(jnp.float32)     # (tblk, B, H)
        yb = yb_ref[...].astype(jnp.float32)
        s = jnp.sum(yf, axis=-1, keepdims=True) + jnp.sum(yb, axis=-1, keepdims=True)
        ss = (jnp.sum(yf * yf, axis=-1, keepdims=True)
              + jnp.sum(yb * yb, axis=-1, keepdims=True))
        mean = s * (1.0 / C)
        var = ss * (1.0 / C) - mean * mean
        inv = lax.rsqrt(var + 1e-5)
        g = g_ref[...]                           # (1, 1, C)
        be = b_ref[...]
        o_ref[:, :, :H] = jnp.maximum(
            (yf - mean) * inv * g[:, :, :H] + be[:, :, :H], 0.0)
        o_ref[:, :, H:] = jnp.maximum(
            (yb - mean) * inv * g[:, :, H:] + be[:, :, H:], 0.0)

    return pl.pallas_call(
        kernel,
        out_shape=jax.ShapeDtypeStruct((T, B, C), jnp.float32),
        grid_spec=pltpu.PrefetchScalarGridSpec(
            num_scalar_prefetch=0,
            grid=(nt,),
            in_specs=[
                pl.BlockSpec((tblk, B, H), lambda c: (c, 0, 0)),
                pl.BlockSpec((tblk, B, H), lambda c: (c, 0, 0)),
                pl.BlockSpec((1, 1, C), lambda c: (0, 0, 0)),
                pl.BlockSpec((1, 1, C), lambda c: (0, 0, 0)),
            ],
            out_specs=pl.BlockSpec((tblk, B, C), lambda c: (c, 0, 0)),
        ),
        compiler_params=pltpu.CompilerParams(
            dimension_semantics=("parallel",),
            vmem_limit_bytes=vmem_limit,
        ),
    )(y_f, y_b, gamma, beta)


# ----------------------------------------------------------------------------
# Module wrapper.
# ----------------------------------------------------------------------------
@jax.jit
def lstm_module_forward(x, params):
    """x: (B, T, hidden_size) batch_first, like the PyTorch module."""
    B, T, Hin = x.shape
    # Time-major bf16 inputs, flattened to (T*B, Hin) rows ordered (t, b) so
    # the recurrence kernel can run one dense chunk matmul per direction.
    x2d = jnp.transpose(x, (1, 0, 2)).astype(jnp.bfloat16).reshape(T * B, Hin)
    out_f, out_b = bilstm_recurrence_pallas(
        x2d, params["wih"], params["whh"], params["b"], batch=B, seq_len=T)
    y_tm = layernorm_relu_pallas(out_f, out_b,
                                 params["ln_gamma"], params["ln_beta"])
    # TODO(synk): the final (T,B,C)->(B,T,C) transpose stays in XLA; folding it
    # into the LN kernel would need an in-kernel cross-sublane transpose.
    return jnp.transpose(y_tm, (1, 0, 2))                     # (B, T, 2H)


# ----------------------------------------------------------------------------
# Pure-JAX reference for validation (same bf16 x / W_ih / W_hh / y2 semantics).
# ----------------------------------------------------------------------------
def _lstm_scan_ref(gi, whh_bf16):
    H = whh_bf16.shape[0]
    B = gi.shape[1]

    def step(carry, g_t):
        h, c = carry
        gates = g_t + jnp.dot(h.astype(jnp.bfloat16), whh_bf16,
                              preferred_element_type=jnp.float32)
        i = jax.nn.sigmoid(gates[:, :H])
        f = jax.nn.sigmoid(gates[:, H:2 * H])
        g = jnp.tanh(gates[:, 2 * H:3 * H])
        o = jax.nn.sigmoid(gates[:, 3 * H:])
        c = f * c + i * g
        h = o * jnp.tanh(c)
        return (h, c), h

    init = (jnp.zeros((B, H), jnp.float32), jnp.zeros((B, H), jnp.float32))
    _, hs = lax.scan(step, init, gi)
    return hs


def lstm_module_ref(x, params):
    x_tm = jnp.transpose(x, (1, 0, 2)).astype(jnp.bfloat16)
    gi_f = jnp.dot(x_tm, params["wih"][0],
                   preferred_element_type=jnp.float32) + params["b"][0]
    gi_b = jnp.dot(x_tm[::-1], params["wih"][1],
                   preferred_element_type=jnp.float32) + params["b"][1]
    out_f = _lstm_scan_ref(gi_f, params["whh"][0])
    out_b = _lstm_scan_ref(gi_b, params["whh"][1])[::-1]
    y = jnp.concatenate([out_f, out_b], axis=-1)
    y = y.astype(jnp.bfloat16).astype(jnp.float32)   # kernel emits bf16 h states
    mean = jnp.mean(y, axis=-1, keepdims=True)
    var = jnp.mean((y - mean) ** 2, axis=-1, keepdims=True)
    yn = (y - mean) * lax.rsqrt(var + 1e-5)
    y = jnp.maximum(yn * params["ln_gamma"] + params["ln_beta"], 0.0)
    return jnp.transpose(y, (1, 0, 2))


# ----------------------------------------------------------------------------
# Deterministic parameter init (PyTorch LSTM-style U(-k, k), k = 1/sqrt(Hout)).
# b = b_ih + b_hh folded; weights stacked over the 2 directions (0=fwd, 1=bwd).
# ----------------------------------------------------------------------------
def init_params(key, hidden_size, shrink_ratio=0.5):
    Hin = hidden_size
    Hout = int(hidden_size * shrink_ratio)
    k = 1.0 / np.sqrt(Hout)
    keys = jax.random.split(key, 3)
    u = lambda kk, shape: jax.random.uniform(kk, shape, jnp.float32, -k, k)
    return {
        "wih": u(keys[0], (2, Hin, 4 * Hout)).astype(jnp.bfloat16),
        "whh": u(keys[1], (2, Hout, 4 * Hout)).astype(jnp.bfloat16),
        "b":   u(keys[2], (2, 4 * Hout)),                     # folded bias, f32
        "ln_gamma": jnp.ones((1, 1, 2 * Hout), jnp.float32),
        "ln_beta":  jnp.zeros((1, 1, 2 * Hout), jnp.float32),
    }


if __name__ == "__main__":
    B, T, hidden_size = 2, 8, 32   # -> hidden_out = 16, output feature dim = 32

    key = jax.random.PRNGKey(0)
    kx, kp = jax.random.split(key)
    x = jax.random.normal(kx, (B, T, hidden_size), jnp.float32)
    params = init_params(kp, hidden_size)

    out = jax.block_until_ready(lstm_module_forward(x, params))

    ref = lstm_module_ref(x, params)
    np.testing.assert_allclose(np.asarray(out), np.asarray(ref),
                               rtol=2e-3, atol=2e-3)
    assert out.shape == (B, T, 2 * int(hidden_size * 0.5))

    print("KERNEL_OK")
</pallas_src>

<mosaic_0001>
module attributes {stable_mosaic.version = 11 : i64} {
  func.func @kernel(%arg0: i32, %arg1: memref<8x2x16xbf16, #tpu.memory_space<vmem>>, %arg2: memref<8x2x16xbf16, #tpu.memory_space<vmem>>, %arg3: memref<1x1x32xf32, #tpu.memory_space<vmem>>, %arg4: memref<1x1x32xf32, #tpu.memory_space<vmem>>, %arg5: memref<8x2x32xf32, #tpu.memory_space<vmem>>) attributes {dimension_semantics = [#tpu.dimension_semantics<parallel>], iteration_bounds = array<i64: 1>, scalar_prefetch = 0 : i64, scratch_operands = 0 : i64, tpu.core_type = #tpu.core_type<tc>, window_params = [{transform_indices = @transform_0, window_bounds = array<i64: 8, 2, 16>}, {transform_indices = @transform_1, window_bounds = array<i64: 8, 2, 16>}, {pipeline_mode = #tpu.pipeline_mode<synchronous>, transform_indices = @transform_2, window_bounds = array<i64: 1, 1, 32>}, {pipeline_mode = #tpu.pipeline_mode<synchronous>, transform_indices = @transform_3, window_bounds = array<i64: 1, 1, 32>}, {transform_indices = @transform_4, window_bounds = array<i64: 8, 2, 32>}]} {
    %c0 = arith.constant 0 : index
    %c0_0 = arith.constant 0 : index
    %c0_1 = arith.constant 0 : index
    %0 = vector.load %arg1[%c0, %c0_0, %c0_1] : memref<8x2x16xbf16, #tpu.memory_space<vmem>>, vector<8x2x16xbf16>
    %1 = arith.extf %0 : vector<8x2x16xbf16> to vector<8x2x16xf32>
    %c0_2 = arith.constant 0 : index
    %c0_3 = arith.constant 0 : index
    %c0_4 = arith.constant 0 : index
    %2 = vector.load %arg2[%c0_2, %c0_3, %c0_4] : memref<8x2x16xbf16, #tpu.memory_space<vmem>>, vector<8x2x16xbf16>
    %3 = arith.extf %2 : vector<8x2x16xbf16> to vector<8x2x16xf32>
    %cst = arith.constant dense<0.000000e+00> : vector<8x2xf32>
    %4 = vector.multi_reduction <add>, %1, %cst [2] : vector<8x2x16xf32> to vector<8x2xf32>
    %5 = vector.shape_cast %4 : vector<8x2xf32> to vector<8x2x1xf32>
    %cst_5 = arith.constant dense<0.000000e+00> : vector<8x2xf32>
    %6 = vector.multi_reduction <add>, %3, %cst_5 [2] : vector<8x2x16xf32> to vector<8x2xf32>
    %7 = vector.shape_cast %6 : vector<8x2xf32> to vector<8x2x1xf32>
    %8 = arith.addf %5, %7 : vector<8x2x1xf32>
    %9 = arith.mulf %1, %1 : vector<8x2x16xf32>
    %cst_6 = arith.constant dense<0.000000e+00> : vector<8x2xf32>
    %10 = vector.multi_reduction <add>, %9, %cst_6 [2] : vector<8x2x16xf32> to vector<8x2xf32>
    %11 = vector.shape_cast %10 : vector<8x2xf32> to vector<8x2x1xf32>
    %12 = arith.mulf %3, %3 : vector<8x2x16xf32>
    %cst_7 = arith.constant dense<0.000000e+00> : vector<8x2xf32>
    %13 = vector.multi_reduction <add>, %12, %cst_7 [2] : vector<8x2x16xf32> to vector<8x2xf32>
    %14 = vector.shape_cast %13 : vector<8x2xf32> to vector<8x2x1xf32>
    %15 = arith.addf %11, %14 : vector<8x2x1xf32>
    %cst_8 = arith.constant 3.125000e-02 : f32
    %16 = vector.broadcast %cst_8 : f32 to vector<8x2x1xf32>
    %17 = arith.mulf %8, %16 : vector<8x2x1xf32>
    %cst_9 = arith.constant 3.125000e-02 : f32
    %18 = vector.broadcast %cst_9 : f32 to vector<8x2x1xf32>
    %19 = arith.mulf %15, %18 : vector<8x2x1xf32>
    %20 = arith.mulf %17, %17 : vector<8x2x1xf32>
    %21 = arith.subf %19, %20 : vector<8x2x1xf32>
    %cst_10 = arith.constant 9.99999974E-6 : f32
    %22 = vector.broadcast %cst_10 : f32 to vector<8x2x1xf32>
    %23 = arith.addf %21, %22 : vector<8x2x1xf32>
    %24 = math.rsqrt %23 : vector<8x2x1xf32>
    %c0_11 = arith.constant 0 : index
    %c0_12 = arith.constant 0 : index
    %c0_13 = arith.constant 0 : index
    %25 = vector.load %arg3[%c0_11, %c0_12, %c0_13] : memref<1x1x32xf32, #tpu.memory_space<vmem>>, vector<1x1x32xf32>
    %c0_14 = arith.constant 0 : index
    %c0_15 = arith.constant 0 : index
    %c0_16 = arith.constant 0 : index
    %26 = vector.load %arg4[%c0_14, %c0_15, %c0_16] : memref<1x1x32xf32, #tpu.memory_space<vmem>>, vector<1x1x32xf32>
    %27 = vector.broadcast %17 : vector<8x2x1xf32> to vector<8x2x16xf32>
    %28 = arith.subf %1, %27 : vector<8x2x16xf32>
    %29 = vector.broadcast %24 : vector<8x2x1xf32> to vector<8x2x16xf32>
    %30 = arith.mulf %28, %29 : vector<8x2x16xf32>
    %31 = vector.extract_strided_slice %25 {offsets = [0, 0, 0], sizes = [1, 1, 16], strides = [1, 1, 1]} : vector<1x1x32xf32> to vector<1x1x16xf32>
    %32 = vector.broadcast %31 : vector<1x1x16xf32> to vector<8x2x16xf32>
    %33 = arith.mulf %30, %32 : vector<8x2x16xf32>
    %34 = vector.extract_strided_slice %26 {offsets = [0, 0, 0], sizes = [1, 1, 16], strides = [1, 1, 1]} : vector<1x1x32xf32> to vector<1x1x16xf32>
    %35 = vector.broadcast %34 : vector<1x1x16xf32> to vector<8x2x16xf32>
    %36 = arith.addf %33, %35 : vector<8x2x16xf32>
    %cst_17 = arith.constant 0.000000e+00 : f32
    %37 = vector.broadcast %cst_17 : f32 to vector<8x2x16xf32>
    %38 = arith.maximumf %36, %37 : vector<8x2x16xf32>
    %c0_18 = arith.constant 0 : index
    %c0_19 = arith.constant 0 : index
    %c0_20 = arith.constant 0 : index
    %39 = vector.load %arg5[%c0_18, %c0_19, %c0_20] : memref<8x2x32xf32, #tpu.memory_space<vmem>>, vector<8x2x16xf32>
    tpu.vector_store %arg5[%c0_18, %c0_19, %c0_20], %38 {strides = array<i32>} : memref<8x2x32xf32, #tpu.memory_space<vmem>>, vector<8x2x16xf32>,
    %40 = vector.broadcast %17 : vector<8x2x1xf32> to vector<8x2x16xf32>
    %41 = arith.subf %3, %40 : vector<8x2x16xf32>
    %42 = vector.broadcast %24 : vector<8x2x1xf32> to vector<8x2x16xf32>
    %43 = arith.mulf %41, %42 : vector<8x2x16xf32>
    %44 = vector.extract_strided_slice %25 {offsets = [0, 0, 16], sizes = [1, 1, 16], strides = [1, 1, 1]} : vector<1x1x32xf32> to vector<1x1x16xf32>
    %45 = vector.broadcast %44 : vector<1x1x16xf32> to vector<8x2x16xf32>
    %46 = arith.mulf %43, %45 : vector<8x2x16xf32>
    %47 = vector.extract_strided_slice %26 {offsets = [0, 0, 16], sizes = [1, 1, 16], strides = [1, 1, 1]} : vector<1x1x32xf32> to vector<1x1x16xf32>
    %48 = vector.broadcast %47 : vector<1x1x16xf32> to vector<8x2x16xf32>
    %49 = arith.addf %46, %48 : vector<8x2x16xf32>
    %cst_21 = arith.constant 0.000000e+00 : f32
    %50 = vector.broadcast %cst_21 : f32 to vector<8x2x16xf32>
    %51 = arith.maximumf %49, %50 : vector<8x2x16xf32>
    %c0_22 = arith.constant 0 : index
    %c0_23 = arith.constant 0 : index
    %c16 = arith.constant 16 : index
    %52 = vector.load %arg5[%c0_22, %c0_23, %c16] : memref<8x2x32xf32, #tpu.memory_space<vmem>>, vector<8x2x16xf32>
    tpu.vector_store %arg5[%c0_22, %c0_23, %c16], %51 {strides = array<i32>} : memref<8x2x32xf32, #tpu.memory_space<vmem>>, vector<8x2x16xf32>,
    return
  }
  func.func @transform_0(%arg0: i32) -> (i32, i32, i32) {
    %c0_i32 = arith.constant 0 : i32
    %c0_i32_0 = arith.constant 0 : i32
    %c0_i32_1 = arith.constant 0 : i32
    return %arg0, %c0_i32, %c0_i32_0 : i32, i32, i32
  }
  func.func @transform_1(%arg0: i32) -> (i32, i32, i32) {
    %c0_i32 = arith.constant 0 : i32
    %c0_i32_0 = arith.constant 0 : i32
    %c0_i32_1 = arith.constant 0 : i32
    return %arg0, %c0_i32, %c0_i32_0 : i32, i32, i32
  }
  func.func @transform_2(%arg0: i32) -> (i32, i32, i32) {
    %c0_i32 = arith.constant 0 : i32
    %c0_i32_0 = arith.constant 0 : i32
    %c0_i32_1 = arith.constant 0 : i32
    %c0_i32_2 = arith.constant 0 : i32
    return %c0_i32, %c0_i32_0, %c0_i32_1 : i32, i32, i32
  }
  func.func @transform_3(%arg0: i32) -> (i32, i32, i32) {
    %c0_i32 = arith.constant 0 : i32
    %c0_i32_0 = arith.constant 0 : i32
    %c0_i32_1 = arith.constant 0 : i32
    %c0_i32_2 = arith.constant 0 : i32
    return %c0_i32, %c0_i32_0, %c0_i32_1 : i32, i32, i32
  }
  func.func @transform_4(%arg0: i32) -> (i32, i32, i32) {
    %c0_i32 = arith.constant 0 : i32
    %c0_i32_0 = arith.constant 0 : i32
    %c0_i32_1 = arith.constant 0 : i32
    return %arg0, %c0_i32, %c0_i32_0 : i32, i32, i32
  }
}

module attributes {stable_mosaic.version = 11 : i64} {
  func.func @kernel(%arg0: i32, %arg1: memref<16x32xbf16, #tpu.memory_space<vmem>>, %arg2: memref<16x32xbf16, #tpu.memory_space<vmem>>, %arg3: memref<2x32x64xbf16, #tpu.memory_space<vmem>>, %arg4: memref<2x16x64xbf16, #tpu.memory_space<vmem>>, %arg5: memref<2x64xf32, #tpu.memory_space<vmem>>, %arg6: memref<8x2x16xbf16, #tpu.memory_space<vmem>>, %arg7: memref<8x2x16xbf16, #tpu.memory_space<vmem>>, %arg8: memref<16x64xf32, #tpu.memory_space<vmem>>, %arg9: memref<16x64xf32, #tpu.memory_space<vmem>>, %arg10: memref<8x2x16xf32, #tpu.memory_space<vmem>>, %arg11: memref<8x2x16xf32, #tpu.memory_space<vmem>>, %arg12: memref<2x16xf32, #tpu.memory_space<vmem>>, %arg13: memref<2x16xf32, #tpu.memory_space<vmem>>, %arg14: memref<2x16xf32, #tpu.memory_space<vmem>>, %arg15: memref<2x16xf32, #tpu.memory_space<vmem>>) attributes {dimension_semantics = [#tpu.dimension_semantics<arbitrary>], iteration_bounds = array<i64: 1>, scalar_prefetch = 0 : i64, scratch_operands = 8 : i64, tpu.core_type = #tpu.core_type<tc>, window_params = [{transform_indices = @transform_0, window_bounds = array<i64: 16, 32>}, {transform_indices = @transform_1, window_bounds = array<i64: 16, 32>}, {pipeline_mode = #tpu.pipeline_mode<synchronous>, transform_indices = @transform_2, window_bounds = array<i64: 2, 32, 64>}, {pipeline_mode = #tpu.pipeline_mode<synchronous>, transform_indices = @transform_3, window_bounds = array<i64: 2, 16, 64>}, {pipeline_mode = #tpu.pipeline_mode<synchronous>, transform_indices = @transform_4, window_bounds = array<i64: 2, 64>}, {transform_indices = @transform_5, window_bounds = array<i64: 8, 2, 16>}, {transform_indices = @transform_6, window_bounds = array<i64: 8, 2, 16>}]} {
    %c0_i32 = arith.constant 0 : i32
    %0 = arith.cmpi eq, %arg0, %c0_i32 : i32
    %1 = arith.extui %0 : i1 to i32
    %c0_i32_0 = arith.constant 0 : i32
    %2 = arith.cmpi ne, %1, %c0_i32_0 : i32
    scf.if %2 {
      %cst_187 = arith.constant 0.000000e+00 : f32
      %606 = vector.broadcast %cst_187 : f32 to vector<2x16xf32>
      %c0_188 = arith.constant 0 : index
      %c0_189 = arith.constant 0 : index
      %607 = vector.load %arg12[%c0_188, %c0_189] : memref<2x16xf32, #tpu.memory_space<vmem>>, vector<2x16xf32>
      tpu.vector_store %arg12[%c0_188, %c0_189], %606 {strides = array<i32>} : memref<2x16xf32, #tpu.memory_space<vmem>>, vector<2x16xf32>,
      %cst_190 = arith.constant 0.000000e+00 : f32
      %608 = vector.broadcast %cst_190 : f32 to vector<2x16xf32>
      %c0_191 = arith.constant 0 : index
      %c0_192 = arith.constant 0 : index
      %609 = vector.load %arg13[%c0_191, %c0_192] : memref<2x16xf32, #tpu.memory_space<vmem>>, vector<2x16xf32>
      tpu.vector_store %arg13[%c0_191, %c0_192], %608 {strides = array<i32>} : memref<2x16xf32, #tpu.memory_space<vmem>>, vector<2x16xf32>,
      %cst_193 = arith.constant 0.000000e+00 : f32
      %610 = vector.broadcast %cst_193 : f32 to vector<2x16xf32>
      %c0_194 = arith.constant 0 : index
      %c0_195 = arith.constant 0 : index
      %611 = vector.load %arg14[%c0_194, %c0_195] : memref<2x16xf32, #tpu.memory_space<vmem>>, vector<2x16xf32>
      tpu.vector_store %arg14[%c0_194, %c0_195], %610 {strides = array<i32>} : memref<2x16xf32, #tpu.memory_space<vmem>>, vector<2x16xf32>,
      %cst_196 = arith.constant 0.000000e+00 : f32
      %612 = vector.broadcast %cst_196 : f32 to vector<2x16xf32>
      %c0_197 = arith.constant 0 : index
      %c0_198 = arith.constant 0 : index
      %613 = vector.load %arg15[%c0_197, %c0_198] : memref<2x16xf32, #tpu.memory_space<vmem>>, vector<2x16xf32>
      tpu.vector_store %arg15[%c0_197, %c0_198], %612 {strides = array<i32>} : memref<2x16xf32, #tpu.memory_space<vmem>>, vector<2x16xf32>,
    } else {
    }
    %c0 = arith.constant 0 : index
    %c0_1 = arith.constant 0 : index
    %3 = vector.load %arg5[%c0, %c0_1] : memref<2x64xf32, #tpu.memory_space<vmem>>, vector<2x64xf32>
    %c0_2 = arith.constant 0 : index
    %c0_3 = arith.constant 0 : index
    %4 = vector.load %arg1[%c0_2, %c0_3] : memref<16x32xbf16, #tpu.memory_space<vmem>>, vector<16x32xbf16>
    %c0_4 = arith.constant 0 : index
    %c0_5 = arith.constant 0 : index
    %c0_6 = arith.constant 0 : index
    %5 = vector.load %arg3[%c0_4, %c0_5, %c0_6] : memref<2x32x64xbf16, #tpu.memory_space<vmem>>, vector<1x32x64xbf16>
    %6 = vector.shape_cast %5 : vector<1x32x64xbf16> to vector<32x64xbf16>
    %cst = arith.constant dense<0.000000e+00> : vector<16x64xf32>
    %7 = tpu.matmul %4, %6, %cst {dimension_numbers = #tpu.dot_dimension_numbers<[1], [0], [0], [1], [0, 0, 1, 1], [], []>} : vector<16x32xbf16>, vector<32x64xbf16>, vector<16x64xf32> -> vector<16x64xf32>
    %8 = vector.extract_strided_slice %3 {offsets = [0, 0], sizes = [1, 64], strides = [1, 1]} : vector<2x64xf32> to vector<1x64xf32>
    %9 = vector.broadcast %8 : vector<1x64xf32> to vector<16x64xf32>
    %10 = arith.addf %7, %9 : vector<16x64xf32>
    %c0_7 = arith.constant 0 : index
    %c0_8 = arith.constant 0 : index
    %11 = vector.load %arg8[%c0_7, %c0_8] : memref<16x64xf32, #tpu.memory_space<vmem>>, vector<16x64xf32>
    tpu.vector_store %arg8[%c0_7, %c0_8], %10 {strides = array<i32>} : memref<16x64xf32, #tpu.memory_space<vmem>>, vector<16x64xf32>,
    %c0_9 = arith.constant 0 : index
    %c0_10 = arith.constant 0 : index
    %12 = vector.load %arg2[%c0_9, %c0_10] : memref<16x32xbf16, #tpu.memory_space<vmem>>, vector<16x32xbf16>
    %c1 = arith.constant 1 : index
    %c0_11 = arith.constant 0 : index
    %c0_12 = arith.constant 0 : index
    %13 = vector.load %arg3[%c1, %c0_11, %c0_12] : memref<2x32x64xbf16, #tpu.memory_space<vmem>>, vector<1x32x64xbf16>
    %14 = vector.shape_cast %13 : vector<1x32x64xbf16> to vector<32x64xbf16>
    %cst_13 = arith.constant dense<0.000000e+00> : vector<16x64xf32>
    %15 = tpu.matmul %12, %14, %cst_13 {dimension_numbers = #tpu.dot_dimension_numbers<[1], [0], [0], [1], [0, 0, 1, 1], [], []>} : vector<16x32xbf16>, vector<32x64xbf16>, vector<16x64xf32> -> vector<16x64xf32>
    %16 = vector.extract_strided_slice %3 {offsets = [1, 0], sizes = [1, 64], strides = [1, 1]} : vector<2x64xf32> to vector<1x64xf32>
    %17 = vector.broadcast %16 : vector<1x64xf32> to vector<16x64xf32>
    %18 = arith.addf %15, %17 : vector<16x64xf32>
    %c0_14 = arith.constant 0 : index
    %c0_15 = arith.constant 0 : index
    %19 = vector.load %arg9[%c0_14, %c0_15] : memref<16x64xf32, #tpu.memory_space<vmem>>, vector<16x64xf32>
    tpu.vector_store %arg9[%c0_14, %c0_15], %18 {strides = array<i32>} : memref<16x64xf32, #tpu.memory_space<vmem>>, vector<16x64xf32>,
    %c0_16 = arith.constant 0 : index
    %c0_17 = arith.constant 0 : index
    %c0_18 = arith.constant 0 : index
    %20 = vector.load %arg4[%c0_16, %c0_17, %c0_18] : memref<2x16x64xbf16, #tpu.memory_space<vmem>>, vector<1x16x64xbf16>
    %21 = vector.shape_cast %20 : vector<1x16x64xbf16> to vector<16x64xbf16>
    %c1_19 = arith.constant 1 : index
    %c0_20 = arith.constant 0 : index
    %c0_21 = arith.constant 0 : index
    %22 = vector.load %arg4[%c1_19, %c0_20, %c0_21] : memref<2x16x64xbf16, #tpu.memory_space<vmem>>, vector<1x16x64xbf16>
    %23 = vector.shape_cast %22 : vector<1x16x64xbf16> to vector<16x64xbf16>
    %c0_22 = arith.constant 0 : index
    %c0_23 = arith.constant 0 : index
    %24 = vector.load %arg12[%c0_22, %c0_23] : memref<2x16xf32, #tpu.memory_space<vmem>>, vector<2x16xf32>
    %c0_24 = arith.constant 0 : index
    %c0_25 = arith.constant 0 : index
    %25 = vector.load %arg13[%c0_24, %c0_25] : memref<2x16xf32, #tpu.memory_space<vmem>>, vector<2x16xf32>
    %c0_26 = arith.constant 0 : index
    %c0_27 = arith.constant 0 : index
    %26 = vector.load %arg14[%c0_26, %c0_27] : memref<2x16xf32, #tpu.memory_space<vmem>>, vector<2x16xf32>
    %c0_28 = arith.constant 0 : index
    %c0_29 = arith.constant 0 : index
    %27 = vector.load %arg15[%c0_28, %c0_29] : memref<2x16xf32, #tpu.memory_space<vmem>>, vector<2x16xf32>
    %c0_i32_30 = arith.constant 0 : i32
    %c7_i32 = arith.constant 7 : i32
    %28 = arith.subi %c7_i32, %c0_i32_30 : i32
    %c2_i32 = arith.constant 2 : i32
    %29 = arith.muli %c0_i32_30, %c2_i32 : i32
    %30 = arith.index_cast %29 : i32 to index
    %c0_31 = arith.constant 0 : index
    %31 = vector.load %arg8[%30, %c0_31] : memref<16x64xf32, #tpu.memory_space<vmem>>, vector<2x64xf32>
    %32 = arith.truncf %24 : vector<2x16xf32> to vector<2x16xbf16>
    %cst_32 = arith.constant dense<0.000000e+00> : vector<2x64xf32>
    %33 = tpu.matmul %32, %21, %cst_32 {dimension_numbers = #tpu.dot_dimension_numbers<[1], [0], [0], [1], [0, 0, 1, 1], [], []>} : vector<2x16xbf16>, vector<16x64xbf16>, vector<2x64xf32> -> vector<2x64xf32>
    %34 = arith.addf %31, %33 : vector<2x64xf32>
    %c2_i32_33 = arith.constant 2 : i32
    %35 = arith.muli %28, %c2_i32_33 : i32
    %36 = arith.index_cast %35 : i32 to index
    %c0_34 = arith.constant 0 : index
    %37 = vector.load %arg9[%36, %c0_34] : memref<16x64xf32, #tpu.memory_space<vmem>>, vector<2x64xf32>
    %38 = arith.truncf %26 : vector<2x16xf32> to vector<2x16xbf16>
    %cst_35 = arith.constant dense<0.000000e+00> : vector<2x64xf32>
    %39 = tpu.matmul %38, %23, %cst_35 {dimension_numbers = #tpu.dot_dimension_numbers<[1], [0], [0], [1], [0, 0, 1, 1], [], []>} : vector<2x16xbf16>, vector<16x64xbf16>, vector<2x64xf32> -> vector<2x64xf32>
    %40 = arith.addf %37, %39 : vector<2x64xf32>
    %41 = vector.extract_strided_slice %34 {offsets = [0, 0], sizes = [2, 16], strides = [1, 1]} : vector<2x64xf32> to vector<2x16xf32>
    %42 = arith.negf %41 : vector<2x16xf32>
    %43 = math.exp %42 : vector<2x16xf32>
    %cst_36 = arith.constant 1.000000e+00 : f32
    %44 = vector.broadcast %cst_36 : f32 to vector<2x16xf32>
    %45 = arith.addf %44, %43 : vector<2x16xf32>
    %46 = arith.divf %44, %45 : vector<2x16xf32>
    %47 = vector.extract_strided_slice %34 {offsets = [0, 16], sizes = [2, 16], strides = [1, 1]} : vector<2x64xf32> to vector<2x16xf32>
    %48 = arith.negf %47 : vector<2x16xf32>
    %49 = math.exp %48 : vector<2x16xf32>
    %cst_37 = arith.constant 1.000000e+00 : f32
    %50 = vector.broadcast %cst_37 : f32 to vector<2x16xf32>
    %51 = arith.addf %50, %49 : vector<2x16xf32>
    %52 = arith.divf %50, %51 : vector<2x16xf32>
    %53 = vector.extract_strided_slice %34 {offsets = [0, 32], sizes = [2, 16], strides = [1, 1]} : vector<2x64xf32> to vector<2x16xf32>
    %54 = math.tanh %53 : vector<2x16xf32>
    %55 = vector.extract_strided_slice %34 {offsets = [0, 48], sizes = [2, 16], strides = [1, 1]} : vector<2x64xf32> to vector<2x16xf32>
    %56 = arith.negf %55 : vector<2x16xf32>
    %57 = math.exp %56 : vector<2x16xf32>
    %cst_38 = arith.constant 1.000000e+00 : f32
    %58 = vector.broadcast %cst_38 : f32 to vector<2x16xf32>
    %59 = arith.addf %58, %57 : vector<2x16xf32>
    %60 = arith.divf %58, %59 : vector<2x16xf32>
    %61 = arith.mulf %52, %25 : vector<2x16xf32>
    %62 = arith.mulf %46, %54 : vector<2x16xf32>
    %63 = arith.addf %61, %62 : vector<2x16xf32>
    %64 = math.tanh %63 : vector<2x16xf32>
    %65 = arith.mulf %60, %64 : vector<2x16xf32>
    %66 = vector.extract_strided_slice %40 {offsets = [0, 0], sizes = [2, 16], strides = [1, 1]} : vector<2x64xf32> to vector<2x16xf32>
    %67 = arith.negf %66 : vector<2x16xf32>
    %68 = math.exp %67 : vector<2x16xf32>
    %cst_39 = arith.constant 1.000000e+00 : f32
    %69 = vector.broadcast %cst_39 : f32 to vector<2x16xf32>
    %70 = arith.addf %69, %68 : vector<2x16xf32>
    %71 = arith.divf %69, %70 : vector<2x16xf32>
    %72 = vector.extract_strided_slice %40 {offsets = [0, 16], sizes = [2, 16], strides = [1, 1]} : vector<2x64xf32> to vector<2x16xf32>
    %73 = arith.negf %72 : vector<2x16xf32>
    %74 = math.exp %73 : vector<2x16xf32>
    %cst_40 = arith.constant 1.000000e+00 : f32
    %75 = vector.broadcast %cst_40 : f32 to vector<2x16xf32>
    %76 = arith.addf %75, %74 : vector<2x16xf32>
    %77 = arith.divf %75, %76 : vector<2x16xf32>
    %78 = vector.extract_strided_slice %40 {offsets = [0, 32], sizes = [2, 16], strides = [1, 1]} : vector<2x64xf32> to vector<2x16xf32>
    %79 = math.tanh %78 : vector<2x16xf32>
    %80 = vector.extract_strided_slice %40 {offsets = [0, 48], sizes = [2, 16], strides = [1, 1]} : vector<2x64xf32> to vector<2x16xf32>
    %81 = arith.negf %80 : vector<2x16xf32>
    %82 = math.exp %81 : vector<2x16xf32>
    %cst_41 = arith.constant 1.000000e+00 : f32
    %83 = vector.broadcast %cst_41 : f32 to vector<2x16xf32>
    %84 = arith.addf %83, %82 : vector<2x16xf32>
    %85 = arith.divf %83, %84 : vector<2x16xf32>
    %86 = arith.mulf %77, %27 : vector<2x16xf32>
    %87 = arith.mulf %71, %79 : vector<2x16xf32>
    %88 = arith.addf %86, %87 : vector<2x16xf32>
    %89 = math.tanh %88 : vector<2x16xf32>
    %90 = arith.mulf %85, %89 : vector<2x16xf32>
    %91 = arith.index_cast %c0_i32_30 : i32 to index
    %c0_42 = arith.constant 0 : index
    %c0_43 = arith.constant 0 : index
    %92 = vector.load %arg10[%91, %c0_42, %c0_43] : memref<8x2x16xf32, #tpu.memory_space<vmem>>, vector<1x2x16xf32>
    %93 = vector.shape_cast %92 : vector<1x2x16xf32> to vector<2x16xf32>
    %94 = vector.shape_cast %65 : vector<2x16xf32> to vector<1x2x16xf32>
    tpu.vector_store %arg10[%91, %c0_42, %c0_43], %94 {strides = array<i32>} : memref<8x2x16xf32, #tpu.memory_space<vmem>>, vector<1x2x16xf32>,
    %95 = arith.index_cast %28 : i32 to index
    %c0_44 = arith.constant 0 : index
    %c0_45 = arith.constant 0 : index
    %96 = vector.load %arg11[%95, %c0_44, %c0_45] : memref<8x2x16xf32, #tpu.memory_space<vmem>>, vector<1x2x16xf32>
    %97 = vector.shape_cast %96 : vector<1x2x16xf32> to vector<2x16xf32>
    %98 = vector.shape_cast %90 : vector<2x16xf32> to vector<1x2x16xf32>
    tpu.vector_store %arg11[%95, %c0_44, %c0_45], %98 {strides = array<i32>} : memref<8x2x16xf32, #tpu.memory_space<vmem>>, vector<1x2x16xf32>,
    %c1_i32 = arith.constant 1 : i32
    %c7_i32_46 = arith.constant 7 : i32
    %99 = arith.subi %c7_i32_46, %c1_i32 : i32
    %c2_i32_47 = arith.constant 2 : i32
    %100 = arith.muli %c1_i32, %c2_i32_47 : i32
    %101 = arith.index_cast %100 : i32 to index
    %c0_48 = arith.constant 0 : index
    %102 = vector.load %arg8[%101, %c0_48] : memref<16x64xf32, #tpu.memory_space<vmem>>, vector<2x64xf32>
    %103 = arith.truncf %65 : vector<2x16xf32> to vector<2x16xbf16>
    %cst_49 = arith.constant dense<0.000000e+00> : vector<2x64xf32>
    %104 = tpu.matmul %103, %21, %cst_49 {dimension_numbers = #tpu.dot_dimension_numbers<[1], [0], [0], [1], [0, 0, 1, 1], [], []>} : vector<2x16xbf16>, vector<16x64xbf16>, vector<2x64xf32> -> vector<2x64xf32>
    %105 = arith.addf %102, %104 : vector<2x64xf32>
    %c2_i32_50 = arith.constant 2 : i32
    %106 = arith.muli %99, %c2_i32_50 : i32
    %107 = arith.index_cast %106 : i32 to index
    %c0_51 = arith.constant 0 : index
    %108 = vector.load %arg9[%107, %c0_51] : memref<16x64xf32, #tpu.memory_space<vmem>>, vector<2x64xf32>
    %109 = arith.truncf %90 : vector<2x16xf32> to vector<2x16xbf16>
    %cst_52 = arith.constant dense<0.000000e+00> : vector<2x64xf32>
    %110 = tpu.matmul %109, %23, %cst_52 {dimension_numbers = #tpu.dot_dimension_numbers<[1], [0], [0], [1], [0, 0, 1, 1], [], []>} : vector<2x16xbf16>, vector<16x64xbf16>, vector<2x64xf32> -> vector<2x64xf32>
    %111 = arith.addf %108, %110 : vector<2x64xf32>
    %112 = vector.extract_strided_slice %105 {offsets = [0, 0], sizes = [2, 16], strides = [1, 1]} : vector<2x64xf32> to vector<2x16xf32>
    %113 = arith.negf %112 : vector<2x16xf32>
    %114 = math.exp %113 : vector<2x16xf32>
    %cst_53 = arith.constant 1.000000e+00 : f32
    %115 = vector.broadcast %cst_53 : f32 to vector<2x16xf32>
    %116 = arith.addf %115, %114 : vector<2x16xf32>
    %117 = arith.divf %115, %116 : vector<2x16xf32>
    %118 = vector.extract_strided_slice %105 {offsets = [0, 16], sizes = [2, 16], strides = [1, 1]} : vector<2x64xf32> to vector<2x16xf32>
    %119 = arith.negf %118 : vector<2x16xf32>
    %120 = math.exp %119 : vector<2x16xf32>
    %cst_54 = arith.constant 1.000000e+00 : f32
    %121 = vector.broadcast %cst_54 : f32 to vector<2x16xf32>
    %122 = arith.addf %121, %120 : vector<2x16xf32>
    %123 = arith.divf %121, %122 : vector<2x16xf32>
    %124 = vector.extract_strided_slice %105 {offsets = [0, 32], sizes = [2, 16], strides = [1, 1]} : vector<2x64xf32> to vector<2x16xf32>
    %125 = math.tanh %124 : vector<2x16xf32>
    %126 = vector.extract_strided_slice %105 {offsets = [0, 48], sizes = [2, 16], strides = [1, 1]} : vector<2x64xf32> to vector<2x16xf32>
    %127 = arith.negf %126 : vector<2x16xf32>
    %128 = math.exp %127 : vector<2x16xf32>
    %cst_55 = arith.constant 1.000000e+00 : f32
    %129 = vector.broadcast %cst_55 : f32 to vector<2x16xf32>
    %130 = arith.addf %129, %128 : vector<2x16xf32>
    %131 = arith.divf %129, %130 : vector<2x16xf32>
    %132 = arith.mulf %123, %63 : vector<2x16xf32>
    %133 = arith.mulf %117, %125 : vector<2x16xf32>
    %134 = arith.addf %132, %133 : vector<2x16xf32>
    %135 = math.tanh %134 : vector<2x16xf32>
    %136 = arith.mulf %131, %135 : vector<2x16xf32>
    %137 = vector.extract_strided_slice %111 {offsets = [0, 0], sizes = [2, 16], strides = [1, 1]} : vector<2x64xf32> to vector<2x16xf32>
    %138 = arith.negf %137 : vector<2x16xf32>
    %139 = math.exp %138 : vector<2x16xf32>
    %cst_56 = arith.constant 1.000000e+00 : f32
    %140 = vector.broadcast %cst_56 : f32 to vector<2x16xf32>
    %141 = arith.addf %140, %139 : vector<2x16xf32>
    %142 = arith.divf %140, %141 : vector<2x16xf32>
    %143 = vector.extract_strided_slice %111 {offsets = [0, 16], sizes = [2, 16], strides = [1, 1]} : vector<2x64xf32> to vector<2x16xf32>
    %144 = arith.negf %143 : vector<2x16xf32>
    %145 = math.exp %144 : vector<2x16xf32>
    %cst_57 = arith.constant 1.000000e+00 : f32
    %146 = vector.broadcast %cst_57 : f32 to vector<2x16xf32>
    %147 = arith.addf %146, %145 : vector<2x16xf32>
    %148 = arith.divf %146, %147 : vector<2x16xf32>
    %149 = vector.extract_strided_slice %111 {offsets = [0, 32], sizes = [2, 16], strides = [1, 1]} : vector<2x64xf32> to vector<2x16xf32>
    %150 = math.tanh %149 : vector<2x16xf32>
    %151 = vector.extract_strided_slice %111 {offsets = [0, 48], sizes = [2, 16], strides = [1, 1]} : vector<2x64xf32> to vector<2x16xf32>
    %152 = arith.negf %151 : vector<2x16xf32>
    %153 = math.exp %152 : vector<2x16xf32>
    %cst_58 = arith.constant 1.000000e+00 : f32
    %154 = vector.broadcast %cst_58 : f32 to vector<2x16xf32>
    %155 = arith.addf %154, %153 : vector<2x16xf32>
    %156 = arith.divf %154, %155 : vector<2x16xf32>
    %157 = arith.mulf %148, %88 : vector<2x16xf32>
    %158 = arith.mulf %142, %150 : vector<2x16xf32>
    %159 = arith.addf %157, %158 : vector<2x16xf32>
    %160 = math.tanh %159 : vector<2x16xf32>
    %161 = arith.mulf %156, %160 : vector<2x16xf32>
    %162 = arith.index_cast %c1_i32 : i32 to index
    %c0_59 = arith.constant 0 : index
    %c0_60 = arith.constant 0 : index
    %163 = vector.load %arg10[%162, %c0_59, %c0_60] : memref<8x2x16xf32, #tpu.memory_space<vmem>>, vector<1x2x16xf32>
    %164 = vector.shape_cast %163 : vector<1x2x16xf32> to vector<2x16xf32>
    %165 = vector.shape_cast %136 : vector<2x16xf32> to vector<1x2x16xf32>
    tpu.vector_store %arg10[%162, %c0_59, %c0_60], %165 {strides = array<i32>} : memref<8x2x16xf32, #tpu.memory_space<vmem>>, vector<1x2x16xf32>,
    %166 = arith.index_cast %99 : i32 to index
    %c0_61 = arith.constant 0 : index
    %c0_62 = arith.constant 0 : index
    %167 = vector.load %arg11[%166, %c0_61, %c0_62] : memref<8x2x16xf32, #tpu.memory_space<vmem>>, vector<1x2x16xf32>
    %168 = vector.shape_cast %167 : vector<1x2x16xf32> to vector<2x16xf32>
    %169 = vector.shape_cast %161 : vector<2x16xf32> to vector<1x2x16xf32>
    tpu.vector_store %arg11[%166, %c0_61, %c0_62], %169 {strides = array<i32>} : memref<8x2x16xf32, #tpu.memory_space<vmem>>, vector<1x2x16xf32>,
    %c2_i32_63 = arith.constant 2 : i32
    %c7_i32_64 = arith.constant 7 : i32
    %170 = arith.subi %c7_i32_64, %c2_i32_63 : i32
    %c2_i32_65 = arith.constant 2 : i32
    %171 = arith.muli %c2_i32_63, %c2_i32_65 : i32
    %172 = arith.index_cast %171 : i32 to index
    %c0_66 = arith.constant 0 : index
    %173 = vector.load %arg8[%172, %c0_66] : memref<16x64xf32, #tpu.memory_space<vmem>>, vector<2x64xf32>
    %174 = arith.truncf %136 : vector<2x16xf32> to vector<2x16xbf16>
    %cst_67 = arith.constant dense<0.000000e+00> : vector<2x64xf32>
    %175 = tpu.matmul %174, %21, %cst_67 {dimension_numbers = #tpu.dot_dimension_numbers<[1], [0], [0], [1], [0, 0, 1, 1], [], []>} : vector<2x16xbf16>, vector<16x64xbf16>, vector<2x64xf32> -> vector<2x64xf32>
    %176 = arith.addf %173, %175 : vector<2x64xf32>
    %c2_i32_68 = arith.constant 2 : i32
    %177 = arith.muli %170, %c2_i32_68 : i32
    %178 = arith.index_cast %177 : i32 to index
    %c0_69 = arith.constant 0 : index
    %179 = vector.load %arg9[%178, %c0_69] : memref<16x64xf32, #tpu.memory_space<vmem>>, vector<2x64xf32>
    %180 = arith.truncf %161 : vector<2x16xf32> to vector<2x16xbf16>
    %cst_70 = arith.constant dense<0.000000e+00> : vector<2x64xf32>
    %181 = tpu.matmul %180, %23, %cst_70 {dimension_numbers = #tpu.dot_dimension_numbers<[1], [0], [0], [1], [0, 0, 1, 1], [], []>} : vector<2x16xbf16>, vector<16x64xbf16>, vector<2x64xf32> -> vector<2x64xf32>
    %182 = arith.addf %179, %181 : vector<2x64xf32>
    %183 = vector.extract_strided_slice %176 {offsets = [0, 0], sizes = [2, 16], strides = [1, 1]} : vector<2x64xf32> to vector<2x16xf32>
    %184 = arith.negf %183 : vector<2x16xf32>
    %185 = math.exp %184 : vector<2x16xf32>
    %cst_71 = arith.constant 1.000000e+00 : f32
    %186 = vector.broadcast %cst_71 : f32 to vector<2x16xf32>
    %187 = arith.addf %186, %185 : vector<2x16xf32>
    %188 = arith.divf %186, %187 : vector<2x16xf32>
    %189 = vector.extract_strided_slice %176 {offsets = [0, 16], sizes = [2, 16], strides = [1, 1]} : vector<2x64xf32> to vector<2x16xf32>
    %190 = arith.negf %189 : vector<2x16xf32>
    %191 = math.exp %190 : vector<2x16xf32>
    %cst_72 = arith.constant 1.000000e+00 : f32
    %192 = vector.broadcast %cst_72 : f32 to vector<2x16xf32>
    %193 = arith.addf %192, %191 : vector<2x16xf32>
    %194 = arith.divf %192, %193 : vector<2x16xf32>
    %195 = vector.extract_strided_slice %176 {offsets = [0, 32], sizes = [2, 16], strides = [1, 1]} : vector<2x64xf32> to vector<2x16xf32>
    %196 = math.tanh %195 : vector<2x16xf32>
    %197 = vector.extract_strided_slice %176 {offsets = [0, 48], sizes = [2, 16], strides = [1, 1]} : vector<2x64xf32> to vector<2x16xf32>
    %198 = arith.negf %197 : vector<2x16xf32>
    %199 = math.exp %198 : vector<2x16xf32>
    %cst_73 = arith.constant 1.000000e+00 : f32
    %200 = vector.broadcast %cst_73 : f32 to vector<2x16xf32>
    %201 = arith.addf %200, %199 : vector<2x16xf32>
    %202 = arith.divf %200, %201 : vector<2x16xf32>
    %203 = arith.mulf %194, %134 : vector<2x16xf32>
    %204 = arith.mulf %188, %196 : vector<2x16xf32>
    %205 = arith.addf %203, %204 : vector<2x16xf32>
    %206 = math.tanh %205 : vector<2x16xf32>
    %207 = arith.mulf %202, %206 : vector<2x16xf32>
    %208 = vector.extract_strided_slice %182 {offsets = [0, 0], sizes = [2, 16], strides = [1, 1]} : vector<2x64xf32> to vector<2x16xf32>
    %209 = arith.negf %208 : vector<2x16xf32>
    %210 = math.exp %209 : vector<2x16xf32>
    %cst_74 = arith.constant 1.000000e+00 : f32
    %211 = vector.broadcast %cst_74 : f32 to vector<2x16xf32>
    %212 = arith.addf %211, %210 : vector<2x16xf32>
    %213 = arith.divf %211, %212 : vector<2x16xf32>
    %214 = vector.extract_strided_slice %182 {offsets = [0, 16], sizes = [2, 16], strides = [1, 1]} : vector<2x64xf32> to vector<2x16xf32>
    %215 = arith.negf %214 : vector<2x16xf32>
    %216 = math.exp %215 : vector<2x16xf32>
    %cst_75 = arith.constant 1.000000e+00 : f32
    %217 = vector.broadcast %cst_75 : f32 to vector<2x16xf32>
    %218 = arith.addf %217, %216 : vector<2x16xf32>
    %219 = arith.divf %217, %218 : vector<2x16xf32>
    %220 = vector.extract_strided_slice %182 {offsets = [0, 32], sizes = [2, 16], strides = [1, 1]} : vector<2x64xf32> to vector<2x16xf32>
    %221 = math.tanh %220 : vector<2x16xf32>
    %222 = vector.extract_strided_slice %182 {offsets = [0, 48], sizes = [2, 16], strides = [1, 1]} : vector<2x64xf32> to vector<2x16xf32>
    %223 = arith.negf %222 : vector<2x16xf32>
    %224 = math.exp %223 : vector<2x16xf32>
    %cst_76 = arith.constant 1.000000e+00 : f32
    %225 = vector.broadcast %cst_76 : f32 to vector<2x16xf32>
    %226 = arith.addf %225, %224 : vector<2x16xf32>
    %227 = arith.divf %225, %226 : vector<2x16xf32>
    %228 = arith.mulf %219, %159 : vector<2x16xf32>
    %229 = arith.mulf %213, %221 : vector<2x16xf32>
    %230 = arith.addf %228, %229 : vector<2x16xf32>
    %231 = math.tanh %230 : vector<2x16xf32>
    %232 = arith.mulf %227, %231 : vector<2x16xf32>
    %233 = arith.index_cast %c2_i32_63 : i32 to index
    %c0_77 = arith.constant 0 : index
    %c0_78 = arith.constant 0 : index
    %234 = vector.load %arg10[%233, %c0_77, %c0_78] : memref<8x2x16xf32, #tpu.memory_space<vmem>>, vector<1x2x16xf32>
    %235 = vector.shape_cast %234 : vector<1x2x16xf32> to vector<2x16xf32>
    %236 = vector.shape_cast %207 : vector<2x16xf32> to vector<1x2x16xf32>
    tpu.vector_store %arg10[%233, %c0_77, %c0_78], %236 {strides = array<i32>} : memref<8x2x16xf32, #tpu.memory_space<vmem>>, vector<1x2x16xf32>,
    %237 = arith.index_cast %170 : i32 to index
    %c0_79 = arith.constant 0 : index
    %c0_80 = arith.constant 0 : index
    %238 = vector.load %arg11[%237, %c0_79, %c0_80] : memref<8x2x16xf32, #tpu.memory_space<vmem>>, vector<1x2x16xf32>
    %239 = vector.shape_cast %238 : vector<1x2x16xf32> to vector<2x16xf32>
    %240 = vector.shape_cast %232 : vector<2x16xf32> to vector<1x2x16xf32>
    tpu.vector_store %arg11[%237, %c0_79, %c0_80], %240 {strides = array<i32>} : memref<8x2x16xf32, #tpu.memory_space<vmem>>, vector<1x2x16xf32>,
    %c3_i32 = arith.constant 3 : i32
    %c7_i32_81 = arith.constant 7 : i32
    %241 = arith.subi %c7_i32_81, %c3_i32 : i32
    %c2_i32_82 = arith.constant 2 : i32
    %242 = arith.muli %c3_i32, %c2_i32_82 : i32
    %243 = arith.index_cast %242 : i32 to index
    %c0_83 = arith.constant 0 : index
    %244 = vector.load %arg8[%243, %c0_83] : memref<16x64xf32, #tpu.memory_space<vmem>>, vector<2x64xf32>
    %245 = arith.truncf %207 : vector<2x16xf32> to vector<2x16xbf16>
    %cst_84 = arith.constant dense<0.000000e+00> : vector<2x64xf32>
    %246 = tpu.matmul %245, %21, %cst_84 {dimension_numbers = #tpu.dot_dimension_numbers<[1], [0], [0], [1], [0, 0, 1, 1], [], []>} : vector<2x16xbf16>, vector<16x64xbf16>, vector<2x64xf32> -> vector<2x64xf32>
    %247 = arith.addf %244, %246 : vector<2x64xf32>
    %c2_i32_85 = arith.constant 2 : i32
    %248 = arith.muli %241, %c2_i32_85 : i32
    %249 = arith.index_cast %248 : i32 to index
    %c0_86 = arith.constant 0 : index
    %250 = vector.load %arg9[%249, %c0_86] : memref<16x64xf32, #tpu.memory_space<vmem>>, vector<2x64xf32>
    %251 = arith.truncf %232 : vector<2x16xf32> to vector<2x16xbf16>
    %cst_87 = arith.constant dense<0.000000e+00> : vector<2x64xf32>
    %252 = tpu.matmul %251, %23, %cst_87 {dimension_numbers = #tpu.dot_dimension_numbers<[1], [0], [0], [1], [0, 0, 1, 1], [], []>} : vector<2x16xbf16>, vector<16x64xbf16>, vector<2x64xf32> -> vector<2x64xf32>
    %253 = arith.addf %250, %252 : vector<2x64xf32>
    %254 = vector.extract_strided_slice %247 {offsets = [0, 0], sizes = [2, 16], strides = [1, 1]} : vector<2x64xf32> to vector<2x16xf32>
    %255 = arith.negf %254 : vector<2x16xf32>
    %256 = math.exp %255 : vector<2x16xf32>
    %cst_88 = arith.constant 1.000000e+00 : f32
    %257 = vector.broadcast %cst_88 : f32 to vector<2x16xf32>
    %258 = arith.addf %257, %256 : vector<2x16xf32>
    %259 = arith.divf %257, %258 : vector<2x16xf32>
    %260 = vector.extract_strided_slice %247 {offsets = [0, 16], sizes = [2, 16], strides = [1, 1]} : vector<2x64xf32> to vector<2x16xf32>
    %261 = arith.negf %260 : vector<2x16xf32>
    %262 = math.exp %261 : vector<2x16xf32>
    %cst_89 = arith.constant 1.000000e+00 : f32
    %263 = vector.broadcast %cst_89 : f32 to vector<2x16xf32>
    %264 = arith.addf %263, %262 : vector<2x16xf32>
    %265 = arith.divf %263, %264 : vector<2x16xf32>
    %266 = vector.extract_strided_slice %247 {offsets = [0, 32], sizes = [2, 16], strides = [1, 1]} : vector<2x64xf32> to vector<2x16xf32>
    %267 = math.tanh %266 : vector<2x16xf32>
    %268 = vector.extract_strided_slice %247 {offsets = [0, 48], sizes = [2, 16], strides = [1, 1]} : vector<2x64xf32> to vector<2x16xf32>
    %269 = arith.negf %268 : vector<2x16xf32>
    %270 = math.exp %269 : vector<2x16xf32>
    %cst_90 = arith.constant 1.000000e+00 : f32
    %271 = vector.broadcast %cst_90 : f32 to vector<2x16xf32>
    %272 = arith.addf %271, %270 : vector<2x16xf32>
    %273 = arith.divf %271, %272 : vector<2x16xf32>
    %274 = arith.mulf %265, %205 : vector<2x16xf32>
    %275 = arith.mulf %259, %267 : vector<2x16xf32>
    %276 = arith.addf %274, %275 : vector<2x16xf32>
    %277 = math.tanh %276 : vector<2x16xf32>
    %278 = arith.mulf %273, %277 : vector<2x16xf32>
    %279 = vector.extract_strided_slice %253 {offsets = [0, 0], sizes = [2, 16], strides = [1, 1]} : vector<2x64xf32> to vector<2x16xf32>
    %280 = arith.negf %279 : vector<2x16xf32>
    %281 = math.exp %280 : vector<2x16xf32>
    %cst_91 = arith.constant 1.000000e+00 : f32
    %282 = vector.broadcast %cst_91 : f32 to vector<2x16xf32>
    %283 = arith.addf %282, %281 : vector<2x16xf32>
    %284 = arith.divf %282, %283 : vector<2x16xf32>
    %285 = vector.extract_strided_slice %253 {offsets = [0, 16], sizes = [2, 16], strides = [1, 1]} : vector<2x64xf32> to vector<2x16xf32>
    %286 = arith.negf %285 : vector<2x16xf32>
    %287 = math.exp %286 : vector<2x16xf32>
    %cst_92 = arith.constant 1.000000e+00 : f32
    %288 = vector.broadcast %cst_92 : f32 to vector<2x16xf32>
    %289 = arith.addf %288, %287 : vector<2x16xf32>
    %290 = arith.divf %288, %289 : vector<2x16xf32>
    %291 = vector.extract_strided_slice %253 {offsets = [0, 32], sizes = [2, 16], strides = [1, 1]} : vector<2x64xf32> to vector<2x16xf32>
    %292 = math.tanh %291 : vector<2x16xf32>
    %293 = vector.extract_strided_slice %253 {offsets = [0, 48], sizes = [2, 16], strides = [1, 1]} : vector<2x64xf32> to vector<2x16xf32>
    %294 = arith.negf %293 : vector<2x16xf32>
    %295 = math.exp %294 : vector<2x16xf32>
    %cst_93 = arith.constant 1.000000e+00 : f32
    %296 = vector.broadcast %cst_93 : f32 to vector<2x16xf32>
    %297 = arith.addf %296, %295 : vector<2x16xf32>
    %298 = arith.divf %296, %297 : vector<2x16xf32>
    %299 = arith.mulf %290, %230 : vector<2x16xf32>
    %300 = arith.mulf %284, %292 : vector<2x16xf32>
    %301 = arith.addf %299, %300 : vector<2x16xf32>
    %302 = math.tanh %301 : vector<2x16xf32>
    %303 = arith.mulf %298, %302 : vector<2x16xf32>
    %304 = arith.index_cast %c3_i32 : i32 to index
    %c0_94 = arith.constant 0 : index
    %c0_95 = arith.constant 0 : index
    %305 = vector.load %arg10[%304, %c0_94, %c0_95] : memref<8x2x16xf32, #tpu.memory_space<vmem>>, vector<1x2x16xf32>
    %306 = vector.shape_cast %305 : vector<1x2x16xf32> to vector<2x16xf32>
    %307 = vector.shape_cast %278 : vector<2x16xf32> to vector<1x2x16xf32>
    tpu.vector_store %arg10[%304, %c0_94, %c0_95], %307 {strides = array<i32>} : memref<8x2x16xf32, #tpu.memory_space<vmem>>, vector<1x2x16xf32>,
    %308 = arith.index_cast %241 : i32 to index
    %c0_96 = arith.constant 0 : index
    %c0_97 = arith.constant 0 : index
    %309 = vector.load %arg11[%308, %c0_96, %c0_97] : memref<8x2x16xf32, #tpu.memory_space<vmem>>, vector<1x2x16xf32>
    %310 = vector.shape_cast %309 : vector<1x2x16xf32> to vector<2x16xf32>
    %311 = vector.shape_cast %303 : vector<2x16xf32> to vector<1x2x16xf32>
    tpu.vector_store %arg11[%308, %c0_96, %c0_97], %311 {strides = array<i32>} : memref<8x2x16xf32, #tpu.memory_space<vmem>>, vector<1x2x16xf32>,
    %c4_i32 = arith.constant 4 : i32
    %c7_i32_98 = arith.constant 7 : i32
    %312 = arith.subi %c7_i32_98, %c4_i32 : i32
    %c2_i32_99 = arith.constant 2 : i32
    %313 = arith.muli %c4_i32, %c2_i32_99 : i32
    %314 = arith.index_cast %313 : i32 to index
    %c0_100 = arith.constant 0 : index
    %315 = vector.load %arg8[%314, %c0_100] : memref<16x64xf32, #tpu.memory_space<vmem>>, vector<2x64xf32>
    %316 = arith.truncf %278 : vector<2x16xf32> to vector<2x16xbf16>
    %cst_101 = arith.constant dense<0.000000e+00> : vector<2x64xf32>
    %317 = tpu.matmul %316, %21, %cst_101 {dimension_numbers = #tpu.dot_dimension_numbers<[1], [0], [0], [1], [0, 0, 1, 1], [], []>} : vector<2x16xbf16>, vector<16x64xbf16>, vector<2x64xf32> -> vector<2x64xf32>
    %318 = arith.addf %315, %317 : vector<2x64xf32>
    %c2_i32_102 = arith.constant 2 : i32
    %319 = arith.muli %312, %c2_i32_102 : i32
    %320 = arith.index_cast %319 : i32 to index
    %c0_103 = arith.constant 0 : index
    %321 = vector.load %arg9[%320, %c0_103] : memref<16x64xf32, #tpu.memory_space<vmem>>, vector<2x64xf32>
    %322 = arith.truncf %303 : vector<2x16xf32> to vector<2x16xbf16>
    %cst_104 = arith.constant dense<0.000000e+00> : vector<2x64xf32>
    %323 = tpu.matmul %322, %23, %cst_104 {dimension_numbers = #tpu.dot_dimension_numbers<[1], [0], [0], [1], [0, 0, 1, 1], [], []>} : vector<2x16xbf16>, vector<16x64xbf16>, vector<2x64xf32> -> vector<2x64xf32>
    %324 = arith.addf %321, %323 : vector<2x64xf32>
    %325 = vector.extract_strided_slice %318 {offsets = [0, 0], sizes = [2, 16], strides = [1, 1]} : vector<2x64xf32> to vector<2x16xf32>
    %326 = arith.negf %325 : vector<2x16xf32>
    %327 = math.exp %326 : vector<2x16xf32>
    %cst_105 = arith.constant 1.000000e+00 : f32
    %328 = vector.broadcast %cst_105 : f32 to vector<2x16xf32>
    %329 = arith.addf %328, %327 : vector<2x16xf32>
    %330 = arith.divf %328, %329 : vector<2x16xf32>
    %331 = vector.extract_strided_slice %318 {offsets = [0, 16], sizes = [2, 16], strides = [1, 1]} : vector<2x64xf32> to vector<2x16xf32>
    %332 = arith.negf %331 : vector<2x16xf32>
    %333 = math.exp %332 : vector<2x16xf32>
    %cst_106 = arith.constant 1.000000e+00 : f32
    %334 = vector.broadcast %cst_106 : f32 to vector<2x16xf32>
    %335 = arith.addf %334, %333 : vector<2x16xf32>
    %336 = arith.divf %334, %335 : vector<2x16xf32>
    %337 = vector.extract_strided_slice %318 {offsets = [0, 32], sizes = [2, 16], strides = [1, 1]} : vector<2x64xf32> to vector<2x16xf32>
    %338 = math.tanh %337 : vector<2x16xf32>
    %339 = vector.extract_strided_slice %318 {offsets = [0, 48], sizes = [2, 16], strides = [1, 1]} : vector<2x64xf32> to vector<2x16xf32>
    %340 = arith.negf %339 : vector<2x16xf32>
    %341 = math.exp %340 : vector<2x16xf32>
    %cst_107 = arith.constant 1.000000e+00 : f32
    %342 = vector.broadcast %cst_107 : f32 to vector<2x16xf32>
    %343 = arith.addf %342, %341 : vector<2x16xf32>
    %344 = arith.divf %342, %343 : vector<2x16xf32>
    %345 = arith.mulf %336, %276 : vector<2x16xf32>
    %346 = arith.mulf %330, %338 : vector<2x16xf32>
    %347 = arith.addf %345, %346 : vector<2x16xf32>
    %348 = math.tanh %347 : vector<2x16xf32>
    %349 = arith.mulf %344, %348 : vector<2x16xf32>
    %350 = vector.extract_strided_slice %324 {offsets = [0, 0], sizes = [2, 16], strides = [1, 1]} : vector<2x64xf32> to vector<2x16xf32>
    %351 = arith.negf %350 : vector<2x16xf32>
    %352 = math.exp %351 : vector<2x16xf32>
    %cst_108 = arith.constant 1.000000e+00 : f32
    %353 = vector.broadcast %cst_108 : f32 to vector<2x16xf32>
    %354 = arith.addf %353, %352 : vector<2x16xf32>
    %355 = arith.divf %353, %354 : vector<2x16xf32>
    %356 = vector.extract_strided_slice %324 {offsets = [0, 16], sizes = [2, 16], strides = [1, 1]} : vector<2x64xf32> to vector<2x16xf32>
    %357 = arith.negf %356 : vector<2x16xf32>
    %358 = math.exp %357 : vector<2x16xf32>
    %cst_109 = arith.constant 1.000000e+00 : f32
    %359 = vector.broadcast %cst_109 : f32 to vector<2x16xf32>
    %360 = arith.addf %359, %358 : vector<2x16xf32>
    %361 = arith.divf %359, %360 : vector<2x16xf32>
    %362 = vector.extract_strided_slice %324 {offsets = [0, 32], sizes = [2, 16], strides = [1, 1]} : vector<2x64xf32> to vector<2x16xf32>
    %363 = math.tanh %362 : vector<2x16xf32>
    %364 = vector.extract_strided_slice %324 {offsets = [0, 48], sizes = [2, 16], strides = [1, 1]} : vector<2x64xf32> to vector<2x16xf32>
    %365 = arith.negf %364 : vector<2x16xf32>
    %366 = math.exp %365 : vector<2x16xf32>
    %cst_110 = arith.constant 1.000000e+00 : f32
    %367 = vector.broadcast %cst_110 : f32 to vector<2x16xf32>
    %368 = arith.addf %367, %366 : vector<2x16xf32>
    %369 = arith.divf %367, %368 : vector<2x16xf32>
    %370 = arith.mulf %361, %301 : vector<2x16xf32>
    %371 = arith.mulf %355, %363 : vector<2x16xf32>
    %372 = arith.addf %370, %371 : vector<2x16xf32>
    %373 = math.tanh %372 : vector<2x16xf32>
    %374 = arith.mulf %369, %373 : vector<2x16xf32>
    %375 = arith.index_cast %c4_i32 : i32 to index
    %c0_111 = arith.constant 0 : index
    %c0_112 = arith.constant 0 : index
    %376 = vector.load %arg10[%375, %c0_111, %c0_112] : memref<8x2x16xf32, #tpu.memory_space<vmem>>, vector<1x2x16xf32>
    %377 = vector.shape_cast %376 : vector<1x2x16xf32> to vector<2x16xf32>
    %378 = vector.shape_cast %349 : vector<2x16xf32> to vector<1x2x16xf32>
    tpu.vector_store %arg10[%375, %c0_111, %c0_112], %378 {strides = array<i32>} : memref<8x2x16xf32, #tpu.memory_space<vmem>>, vector<1x2x16xf32>,
    %379 = arith.index_cast %312 : i32 to index
    %c0_113 = arith.constant 0 : index
    %c0_114 = arith.constant 0 : index
    %380 = vector.load %arg11[%379, %c0_113, %c0_114] : memref<8x2x16xf32, #tpu.memory_space<vmem>>, vector<1x2x16xf32>
    %381 = vector.shape_cast %380 : vector<1x2x16xf32> to vector<2x16xf32>
    %382 = vector.shape_cast %374 : vector<2x16xf32> to vector<1x2x16xf32>
    tpu.vector_store %arg11[%379, %c0_113, %c0_114], %382 {strides = array<i32>} : memref<8x2x16xf32, #tpu.memory_space<vmem>>, vector<1x2x16xf32>,
    %c5_i32 = arith.constant 5 : i32
    %c7_i32_115 = arith.constant 7 : i32
    %383 = arith.subi %c7_i32_115, %c5_i32 : i32
    %c2_i32_116 = arith.constant 2 : i32
    %384 = arith.muli %c5_i32, %c2_i32_116 : i32
    %385 = arith.index_cast %384 : i32 to index
    %c0_117 = arith.constant 0 : index
    %386 = vector.load %arg8[%385, %c0_117] : memref<16x64xf32, #tpu.memory_space<vmem>>, vector<2x64xf32>
    %387 = arith.truncf %349 : vector<2x16xf32> to vector<2x16xbf16>
    %cst_118 = arith.constant dense<0.000000e+00> : vector<2x64xf32>
    %388 = tpu.matmul %387, %21, %cst_118 {dimension_numbers = #tpu.dot_dimension_numbers<[1], [0], [0], [1], [0, 0, 1, 1], [], []>} : vector<2x16xbf16>, vector<16x64xbf16>, vector<2x64xf32> -> vector<2x64xf32>
    %389 = arith.addf %386, %388 : vector<2x64xf32>
    %c2_i32_119 = arith.constant 2 : i32
    %390 = arith.muli %383, %c2_i32_119 : i32
    %391 = arith.index_cast %390 : i32 to index
    %c0_120 = arith.constant 0 : index
    %392 = vector.load %arg9[%391, %c0_120] : memref<16x64xf32, #tpu.memory_space<vmem>>, vector<2x64xf32>
    %393 = arith.truncf %374 : vector<2x16xf32> to vector<2x16xbf16>
    %cst_121 = arith.constant dense<0.000000e+00> : vector<2x64xf32>
    %394 = tpu.matmul %393, %23, %cst_121 {dimension_numbers = #tpu.dot_dimension_numbers<[1], [0], [0], [1], [0, 0, 1, 1], [], []>} : vector<2x16xbf16>, vector<16x64xbf16>, vector<2x64xf32> -> vector<2x64xf32>
    %395 = arith.addf %392, %394 : vector<2x64xf32>
    %396 = vector.extract_strided_slice %389 {offsets = [0, 0], sizes = [2, 16], strides = [1, 1]} : vector<2x64xf32> to vector<2x16xf32>
    %397 = arith.negf %396 : vector<2x16xf32>
    %398 = math.exp %397 : vector<2x16xf32>
    %cst_122 = arith.constant 1.000000e+00 : f32
    %399 = vector.broadcast %cst_122 : f32 to vector<2x16xf32>
    %400 = arith.addf %399, %398 : vector<2x16xf32>
    %401 = arith.divf %399, %400 : vector<2x16xf32>
    %402 = vector.extract_strided_slice %389 {offsets = [0, 16], sizes = [2, 16], strides = [1, 1]} : vector<2x64xf32> to vector<2x16xf32>
    %403 = arith.negf %402 : vector<2x16xf32>
    %404 = math.exp %403 : vector<2x16xf32>
    %cst_123 = arith.constant 1.000000e+00 : f32
    %405 = vector.broadcast %cst_123 : f32 to vector<2x16xf32>
    %406 = arith.addf %405, %404 : vector<2x16xf32>
    %407 = arith.divf %405, %406 : vector<2x16xf32>
    %408 = vector.extract_strided_slice %389 {offsets = [0, 32], sizes = [2, 16], strides = [1, 1]} : vector<2x64xf32> to vector<2x16xf32>
    %409 = math.tanh %408 : vector<2x16xf32>
    %410 = vector.extract_strided_slice %389 {offsets = [0, 48], sizes = [2, 16], strides = [1, 1]} : vector<2x64xf32> to vector<2x16xf32>
    %411 = arith.negf %410 : vector<2x16xf32>
    %412 = math.exp %411 : vector<2x16xf32>
    %cst_124 = arith.constant 1.000000e+00 : f32
    %413 = vector.broadcast %cst_124 : f32 to vector<2x16xf32>
    %414 = arith.addf %413, %412 : vector<2x16xf32>
    %415 = arith.divf %413, %414 : vector<2x16xf32>
    %416 = arith.mulf %407, %347 : vector<2x16xf32>
    %417 = arith.mulf %401, %409 : vector<2x16xf32>
    %418 = arith.addf %416, %417 : vector<2x16xf32>
    %419 = math.tanh %418 : vector<2x16xf32>
    %420 = arith.mulf %415, %419 : vector<2x16xf32>
    %421 = vector.extract_strided_slice %395 {offsets = [0, 0], sizes = [2, 16], strides = [1, 1]} : vector<2x64xf32> to vector<2x16xf32>
    %422 = arith.negf %421 : vector<2x16xf32>
    %423 = math.exp %422 : vector<2x16xf32>
    %cst_125 = arith.constant 1.000000e+00 : f32
    %424 = vector.broadcast %cst_125 : f32 to vector<2x16xf32>
    %425 = arith.addf %424, %423 : vector<2x16xf32>
    %426 = arith.divf %424, %425 : vector<2x16xf32>
    %427 = vector.extract_strided_slice %395 {offsets = [0, 16], sizes = [2, 16], strides = [1, 1]} : vector<2x64xf32> to vector<2x16xf32>
    %428 = arith.negf %427 : vector<2x16xf32>
    %429 = math.exp %428 : vector<2x16xf32>
    %cst_126 = arith.constant 1.000000e+00 : f32
    %430 = vector.broadcast %cst_126 : f32 to vector<2x16xf32>
    %431 = arith.addf %430, %429 : vector<2x16xf32>
    %432 = arith.divf %430, %431 : vector<2x16xf32>
    %433 = vector.extract_strided_slice %395 {offsets = [0, 32], sizes = [2, 16], strides = [1, 1]} : vector<2x64xf32> to vector<2x16xf32>
    %434 = math.tanh %433 : vector<2x16xf32>
    %435 = vector.extract_strided_slice %395 {offsets = [0, 48], sizes = [2, 16], strides = [1, 1]} : vector<2x64xf32> to vector<2x16xf32>
    %436 = arith.negf %435 : vector<2x16xf32>
    %437 = math.exp %436 : vector<2x16xf32>
    %cst_127 = arith.constant 1.000000e+00 : f32
    %438 = vector.broadcast %cst_127 : f32 to vector<2x16xf32>
    %439 = arith.addf %438, %437 : vector<2x16xf32>
    %440 = arith.divf %438, %439 : vector<2x16xf32>
    %441 = arith.mulf %432, %372 : vector<2x16xf32>
    %442 = arith.mulf %426, %434 : vector<2x16xf32>
    %443 = arith.addf %441, %442 : vector<2x16xf32>
    %444 = math.tanh %443 : vector<2x16xf32>
    %445 = arith.mulf %440, %444 : vector<2x16xf32>
    %446 = arith.index_cast %c5_i32 : i32 to index
    %c0_128 = arith.constant 0 : index
    %c0_129 = arith.constant 0 : index
    %447 = vector.load %arg10[%446, %c0_128, %c0_129] : memref<8x2x16xf32, #tpu.memory_space<vmem>>, vector<1x2x16xf32>
    %448 = vector.shape_cast %447 : vector<1x2x16xf32> to vector<2x16xf32>
    %449 = vector.shape_cast %420 : vector<2x16xf32> to vector<1x2x16xf32>
    tpu.vector_store %arg10[%446, %c0_128, %c0_129], %449 {strides = array<i32>} : memref<8x2x16xf32, #tpu.memory_space<vmem>>, vector<1x2x16xf32>,
    %450 = arith.index_cast %383 : i32 to index
    %c0_130 = arith.constant 0 : index
    %c0_131 = arith.constant 0 : index
    %451 = vector.load %arg11[%450, %c0_130, %c0_131] : memref<8x2x16xf32, #tpu.memory_space<vmem>>, vector<1x2x16xf32>
    %452 = vector.shape_cast %451 : vector<1x2x16xf32> to vector<2x16xf32>
    %453 = vector.shape_cast %445 : vector<2x16xf32> to vector<1x2x16xf32>
    tpu.vector_store %arg11[%450, %c0_130, %c0_131], %453 {strides = array<i32>} : memref<8x2x16xf32, #tpu.memory_space<vmem>>, vector<1x2x16xf32>,
    %c6_i32 = arith.constant 6 : i32
    %c7_i32_132 = arith.constant 7 : i32
    %454 = arith.subi %c7_i32_132, %c6_i32 : i32
    %c2_i32_133 = arith.constant 2 : i32
    %455 = arith.muli %c6_i32, %c2_i32_133 : i32
    %456 = arith.index_cast %455 : i32 to index
    %c0_134 = arith.constant 0 : index
    %457 = vector.load %arg8[%456, %c0_134] : memref<16x64xf32, #tpu.memory_space<vmem>>, vector<2x64xf32>
    %458 = arith.truncf %420 : vector<2x16xf32> to vector<2x16xbf16>
    %cst_135 = arith.constant dense<0.000000e+00> : vector<2x64xf32>
    %459 = tpu.matmul %458, %21, %cst_135 {dimension_numbers = #tpu.dot_dimension_numbers<[1], [0], [0], [1], [0, 0, 1, 1], [], []>} : vector<2x16xbf16>, vector<16x64xbf16>, vector<2x64xf32> -> vector<2x64xf32>
    %460 = arith.addf %457, %459 : vector<2x64xf32>
    %c2_i32_136 = arith.constant 2 : i32
    %461 = arith.muli %454, %c2_i32_136 : i32
    %462 = arith.index_cast %461 : i32 to index
    %c0_137 = arith.constant 0 : index
    %463 = vector.load %arg9[%462, %c0_137] : memref<16x64xf32, #tpu.memory_space<vmem>>, vector<2x64xf32>
    %464 = arith.truncf %445 : vector<2x16xf32> to vector<2x16xbf16>
    %cst_138 = arith.constant dense<0.000000e+00> : vector<2x64xf32>
    %465 = tpu.matmul %464, %23, %cst_138 {dimension_numbers = #tpu.dot_dimension_numbers<[1], [0], [0], [1], [0, 0, 1, 1], [], []>} : vector<2x16xbf16>, vector<16x64xbf16>, vector<2x64xf32> -> vector<2x64xf32>
    %466 = arith.addf %463, %465 : vector<2x64xf32>
    %467 = vector.extract_strided_slice %460 {offsets = [0, 0], sizes = [2, 16], strides = [1, 1]} : vector<2x64xf32> to vector<2x16xf32>
    %468 = arith.negf %467 : vector<2x16xf32>
    %469 = math.exp %468 : vector<2x16xf32>
    %cst_139 = arith.constant 1.000000e+00 : f32
    %470 = vector.broadcast %cst_139 : f32 to vector<2x16xf32>
    %471 = arith.addf %470, %469 : vector<2x16xf32>
    %472 = arith.divf %470, %471 : vector<2x16xf32>
    %473 = vector.extract_strided_slice %460 {offsets = [0, 16], sizes = [2, 16], strides = [1, 1]} : vector<2x64xf32> to vector<2x16xf32>
    %474 = arith.negf %473 : vector<2x16xf32>
    %475 = math.exp %474 : vector<2x16xf32>
    %cst_140 = arith.constant 1.000000e+00 : f32
    %476 = vector.broadcast %cst_140 : f32 to vector<2x16xf32>
    %477 = arith.addf %476, %475 : vector<2x16xf32>
    %478 = arith.divf %476, %477 : vector<2x16xf32>
    %479 = vector.extract_strided_slice %460 {offsets = [0, 32], sizes = [2, 16], strides = [1, 1]} : vector<2x64xf32> to vector<2x16xf32>
    %480 = math.tanh %479 : vector<2x16xf32>
    %481 = vector.extract_strided_slice %460 {offsets = [0, 48], sizes = [2, 16], strides = [1, 1]} : vector<2x64xf32> to vector<2x16xf32>
    %482 = arith.negf %481 : vector<2x16xf32>
    %483 = math.exp %482 : vector<2x16xf32>
    %cst_141 = arith.constant 1.000000e+00 : f32
    %484 = vector.broadcast %cst_141 : f32 to vector<2x16xf32>
    %485 = arith.addf %484, %483 : vector<2x16xf32>
    %486 = arith.divf %484, %485 : vector<2x16xf32>
    %487 = arith.mulf %478, %418 : vector<2x16xf32>
    %488 = arith.mulf %472, %480 : vector<2x16xf32>
    %489 = arith.addf %487, %488 : vector<2x16xf32>
    %490 = math.tanh %489 : vector<2x16xf32>
    %491 = arith.mulf %486, %490 : vector<2x16xf32>
    %492 = vector.extract_strided_slice %466 {offsets = [0, 0], sizes = [2, 16], strides = [1, 1]} : vector<2x64xf32> to vector<2x16xf32>
    %493 = arith.negf %492 : vector<2x16xf32>
    %494 = math.exp %493 : vector<2x16xf32>
    %cst_142 = arith.constant 1.000000e+00 : f32
    %495 = vector.broadcast %cst_142 : f32 to vector<2x16xf32>
    %496 = arith.addf %495, %494 : vector<2x16xf32>
    %497 = arith.divf %495, %496 : vector<2x16xf32>
    %498 = vector.extract_strided_slice %466 {offsets = [0, 16], sizes = [2, 16], strides = [1, 1]} : vector<2x64xf32> to vector<2x16xf32>
    %499 = arith.negf %498 : vector<2x16xf32>
    %500 = math.exp %499 : vector<2x16xf32>
    %cst_143 = arith.constant 1.000000e+00 : f32
    %501 = vector.broadcast %cst_143 : f32 to vector<2x16xf32>
    %502 = arith.addf %501, %500 : vector<2x16xf32>
    %503 = arith.divf %501, %502 : vector<2x16xf32>
    %504 = vector.extract_strided_slice %466 {offsets = [0, 32], sizes = [2, 16], strides = [1, 1]} : vector<2x64xf32> to vector<2x16xf32>
    %505 = math.tanh %504 : vector<2x16xf32>
    %506 = vector.extract_strided_slice %466 {offsets = [0, 48], sizes = [2, 16], strides = [1, 1]} : vector<2x64xf32> to vector<2x16xf32>
    %507 = arith.negf %506 : vector<2x16xf32>
    %508 = math.exp %507 : vector<2x16xf32>
    %cst_144 = arith.constant 1.000000e+00 : f32
    %509 = vector.broadcast %cst_144 : f32 to vector<2x16xf32>
    %510 = arith.addf %509, %508 : vector<2x16xf32>
    %511 = arith.divf %509, %510 : vector<2x16xf32>
    %512 = arith.mulf %503, %443 : vector<2x16xf32>
    %513 = arith.mulf %497, %505 : vector<2x16xf32>
    %514 = arith.addf %512, %513 : vector<2x16xf32>
    %515 = math.tanh %514 : vector<2x16xf32>
    %516 = arith.mulf %511, %515 : vector<2x16xf32>
    %517 = arith.index_cast %c6_i32 : i32 to index
    %c0_145 = arith.constant 0 : index
    %c0_146 = arith.constant 0 : index
    %518 = vector.load %arg10[%517, %c0_145, %c0_146] : memref<8x2x16xf32, #tpu.memory_space<vmem>>, vector<1x2x16xf32>
    %519 = vector.shape_cast %518 : vector<1x2x16xf32> to vector<2x16xf32>
    %520 = vector.shape_cast %491 : vector<2x16xf32> to vector<1x2x16xf32>
    tpu.vector_store %arg10[%517, %c0_145, %c0_146], %520 {strides = array<i32>} : memref<8x2x16xf32, #tpu.memory_space<vmem>>, vector<1x2x16xf32>,
    %521 = arith.index_cast %454 : i32 to index
    %c0_147 = arith.constant 0 : index
    %c0_148 = arith.constant 0 : index
    %522 = vector.load %arg11[%521, %c0_147, %c0_148] : memref<8x2x16xf32, #tpu.memory_space<vmem>>, vector<1x2x16xf32>
    %523 = vector.shape_cast %522 : vector<1x2x16xf32> to vector<2x16xf32>
    %524 = vector.shape_cast %516 : vector<2x16xf32> to vector<1x2x16xf32>
    tpu.vector_store %arg11[%521, %c0_147, %c0_148], %524 {strides = array<i32>} : memref<8x2x16xf32, #tpu.memory_space<vmem>>, vector<1x2x16xf32>,
    %c7_i32_149 = arith.constant 7 : i32
    %c7_i32_150 = arith.constant 7 : i32
    %525 = arith.subi %c7_i32_150, %c7_i32_149 : i32
    %c2_i32_151 = arith.constant 2 : i32
    %526 = arith.muli %c7_i32_149, %c2_i32_151 : i32
    %527 = arith.index_cast %526 : i32 to index
    %c0_152 = arith.constant 0 : index
    %528 = vector.load %arg8[%527, %c0_152] : memref<16x64xf32, #tpu.memory_space<vmem>>, vector<2x64xf32>
    %529 = arith.truncf %491 : vector<2x16xf32> to vector<2x16xbf16>
    %cst_153 = arith.constant dense<0.000000e+00> : vector<2x64xf32>
    %530 = tpu.matmul %529, %21, %cst_153 {dimension_numbers = #tpu.dot_dimension_numbers<[1], [0], [0], [1], [0, 0, 1, 1], [], []>} : vector<2x16xbf16>, vector<16x64xbf16>, vector<2x64xf32> -> vector<2x64xf32>
    %531 = arith.addf %528, %530 : vector<2x64xf32>
    %c2_i32_154 = arith.constant 2 : i32
    %532 = arith.muli %525, %c2_i32_154 : i32
    %533 = arith.index_cast %532 : i32 to index
    %c0_155 = arith.constant 0 : index
    %534 = vector.load %arg9[%533, %c0_155] : memref<16x64xf32, #tpu.memory_space<vmem>>, vector<2x64xf32>
    %535 = arith.truncf %516 : vector<2x16xf32> to vector<2x16xbf16>
    %cst_156 = arith.constant dense<0.000000e+00> : vector<2x64xf32>
    %536 = tpu.matmul %535, %23, %cst_156 {dimension_numbers = #tpu.dot_dimension_numbers<[1], [0], [0], [1], [0, 0, 1, 1], [], []>} : vector<2x16xbf16>, vector<16x64xbf16>, vector<2x64xf32> -> vector<2x64xf32>
    %537 = arith.addf %534, %536 : vector<2x64xf32>
    %538 = vector.extract_strided_slice %531 {offsets = [0, 0], sizes = [2, 16], strides = [1, 1]} : vector<2x64xf32> to vector<2x16xf32>
    %539 = arith.negf %538 : vector<2x16xf32>
    %540 = math.exp %539 : vector<2x16xf32>
    %cst_157 = arith.constant 1.000000e+00 : f32
    %541 = vector.broadcast %cst_157 : f32 to vector<2x16xf32>
    %542 = arith.addf %541, %540 : vector<2x16xf32>
    %543 = arith.divf %541, %542 : vector<2x16xf32>
    %544 = vector.extract_strided_slice %531 {offsets = [0, 16], sizes = [2, 16], strides = [1, 1]} : vector<2x64xf32> to vector<2x16xf32>
    %545 = arith.negf %544 : vector<2x16xf32>
    %546 = math.exp %545 : vector<2x16xf32>
    %cst_158 = arith.constant 1.000000e+00 : f32
    %547 = vector.broadcast %cst_158 : f32 to vector<2x16xf32>
    %548 = arith.addf %547, %546 : vector<2x16xf32>
    %549 = arith.divf %547, %548 : vector<2x16xf32>
    %550 = vector.extract_strided_slice %531 {offsets = [0, 32], sizes = [2, 16], strides = [1, 1]} : vector<2x64xf32> to vector<2x16xf32>
    %551 = math.tanh %550 : vector<2x16xf32>
    %552 = vector.extract_strided_slice %531 {offsets = [0, 48], sizes = [2, 16], strides = [1, 1]} : vector<2x64xf32> to vector<2x16xf32>
    %553 = arith.negf %552 : vector<2x16xf32>
    %554 = math.exp %553 : vector<2x16xf32>
    %cst_159 = arith.constant 1.000000e+00 : f32
    %555 = vector.broadcast %cst_159 : f32 to vector<2x16xf32>
    %556 = arith.addf %555, %554 : vector<2x16xf32>
    %557 = arith.divf %555, %556 : vector<2x16xf32>
    %558 = arith.mulf %549, %489 : vector<2x16xf32>
    %559 = arith.mulf %543, %551 : vector<2x16xf32>
    %560 = arith.addf %558, %559 : vector<2x16xf32>
    %561 = math.tanh %560 : vector<2x16xf32>
    %562 = arith.mulf %557, %561 : vector<2x16xf32>
    %563 = vector.extract_strided_slice %537 {offsets = [0, 0], sizes = [2, 16], strides = [1, 1]} : vector<2x64xf32> to vector<2x16xf32>
    %564 = arith.negf %563 : vector<2x16xf32>
    %565 = math.exp %564 : vector<2x16xf32>
    %cst_160 = arith.constant 1.000000e+00 : f32
    %566 = vector.broadcast %cst_160 : f32 to vector<2x16xf32>
    %567 = arith.addf %566, %565 : vector<2x16xf32>
    %568 = arith.divf %566, %567 : vector<2x16xf32>
    %569 = vector.extract_strided_slice %537 {offsets = [0, 16], sizes = [2, 16], strides = [1, 1]} : vector<2x64xf32> to vector<2x16xf32>
    %570 = arith.negf %569 : vector<2x16xf32>
    %571 = math.exp %570 : vector<2x16xf32>
    %cst_161 = arith.constant 1.000000e+00 : f32
    %572 = vector.broadcast %cst_161 : f32 to vector<2x16xf32>
    %573 = arith.addf %572, %571 : vector<2x16xf32>
    %574 = arith.divf %572, %573 : vector<2x16xf32>
    %575 = vector.extract_strided_slice %537 {offsets = [0, 32], sizes = [2, 16], strides = [1, 1]} : vector<2x64xf32> to vector<2x16xf32>
    %576 = math.tanh %575 : vector<2x16xf32>
    %577 = vector.extract_strided_slice %537 {offsets = [0, 48], sizes = [2, 16], strides = [1, 1]} : vector<2x64xf32> to vector<2x16xf32>
    %578 = arith.negf %577 : vector<2x16xf32>
    %579 = math.exp %578 : vector<2x16xf32>
    %cst_162 = arith.constant 1.000000e+00 : f32
    %580 = vector.broadcast %cst_162 : f32 to vector<2x16xf32>
    %581 = arith.addf %580, %579 : vector<2x16xf32>
    %582 = arith.divf %580, %581 : vector<2x16xf32>
    %583 = arith.mulf %574, %514 : vector<2x16xf32>
    %584 = arith.mulf %568, %576 : vector<2x16xf32>
    %585 = arith.addf %583, %584 : vector<2x16xf32>
    %586 = math.tanh %585 : vector<2x16xf32>
    %587 = arith.mulf %582, %586 : vector<2x16xf32>
    %588 = arith.index_cast %c7_i32_149 : i32 to index
    %c0_163 = arith.constant 0 : index
    %c0_164 = arith.constant 0 : index
    %589 = vector.load %arg10[%588, %c0_163, %c0_164] : memref<8x2x16xf32, #tpu.memory_space<vmem>>, vector<1x2x16xf32>
    %590 = vector.shape_cast %589 : vector<1x2x16xf32> to vector<2x16xf32>
    %591 = vector.shape_cast %562 : vector<2x16xf32> to vector<1x2x16xf32>
    tpu.vector_store %arg10[%588, %c0_163, %c0_164], %591 {strides = array<i32>} : memref<8x2x16xf32, #tpu.memory_space<vmem>>, vector<1x2x16xf32>,
    %592 = arith.index_cast %525 : i32 to index
    %c0_165 = arith.constant 0 : index
    %c0_166 = arith.constant 0 : index
    %593 = vector.load %arg11[%592, %c0_165, %c0_166] : memref<8x2x16xf32, #tpu.memory_space<vmem>>, vector<1x2x16xf32>
    %594 = vector.shape_cast %593 : vector<1x2x16xf32> to vector<2x16xf32>
    %595 = vector.shape_cast %587 : vector<2x16xf32> to vector<1x2x16xf32>
    tpu.vector_store %arg11[%592, %c0_165, %c0_166], %595 {strides = array<i32>} : memref<8x2x16xf32, #tpu.memory_space<vmem>>, vector<1x2x16xf32>,
    %c8_i32 = arith.constant 8 : i32
    %c0_167 = arith.constant 0 : index
    %c0_168 = arith.constant 0 : index
    %596 = vector.load %arg12[%c0_167, %c0_168] : memref<2x16xf32, #tpu.memory_space<vmem>>, vector<2x16xf32>
    tpu.vector_store %arg12[%c0_167, %c0_168], %562 {strides = array<i32>} : memref<2x16xf32, #tpu.memory_space<vmem>>, vector<2x16xf32>,
    %c0_169 = arith.constant 0 : index
    %c0_170 = arith.constant 0 : index
    %597 = vector.load %arg13[%c0_169, %c0_170] : memref<2x16xf32, #tpu.memory_space<vmem>>, vector<2x16xf32>
    tpu.vector_store %arg13[%c0_169, %c0_170], %560 {strides = array<i32>} : memref<2x16xf32, #tpu.memory_space<vmem>>, vector<2x16xf32>,
    %c0_171 = arith.constant 0 : index
    %c0_172 = arith.constant 0 : index
    %598 = vector.load %arg14[%c0_171, %c0_172] : memref<2x16xf32, #tpu.memory_space<vmem>>, vector<2x16xf32>
    tpu.vector_store %arg14[%c0_171, %c0_172], %587 {strides = array<i32>} : memref<2x16xf32, #tpu.memory_space<vmem>>, vector<2x16xf32>,
    %c0_173 = arith.constant 0 : index
    %c0_174 = arith.constant 0 : index
    %599 = vector.load %arg15[%c0_173, %c0_174] : memref<2x16xf32, #tpu.memory_space<vmem>>, vector<2x16xf32>
    tpu.vector_store %arg15[%c0_173, %c0_174], %585 {strides = array<i32>} : memref<2x16xf32, #tpu.memory_space<vmem>>, vector<2x16xf32>,
    %c0_175 = arith.constant 0 : index
    %c0_176 = arith.constant 0 : index
    %c0_177 = arith.constant 0 : index
    %600 = vector.load %arg10[%c0_175, %c0_176, %c0_177] : memref<8x2x16xf32, #tpu.memory_space<vmem>>, vector<8x2x16xf32>
    %601 = arith.truncf %600 : vector<8x2x16xf32> to vector<8x2x16xbf16>
    %c0_178 = arith.constant 0 : index
    %c0_179 = arith.constant 0 : index
    %c0_180 = arith.constant 0 : index
    %602 = vector.load %arg6[%c0_178, %c0_179, %c0_180] : memref<8x2x16xbf16, #tpu.memory_space<vmem>>, vector<8x2x16xbf16>
    tpu.vector_store %arg6[%c0_178, %c0_179, %c0_180], %601 {strides = array<i32>} : memref<8x2x16xbf16, #tpu.memory_space<vmem>>, vector<8x2x16xbf16>,
    %c0_181 = arith.constant 0 : index
    %c0_182 = arith.constant 0 : index
    %c0_183 = arith.constant 0 : index
    %603 = vector.load %arg11[%c0_181, %c0_182, %c0_183] : memref<8x2x16xf32, #tpu.memory_space<vmem>>, vector<8x2x16xf32>
    %604 = arith.truncf %603 : vector<8x2x16xf32> to vector<8x2x16xbf16>
    %c0_184 = arith.constant 0 : index
    %c0_185 = arith.constant 0 : index
    %c0_186 = arith.constant 0 : index
    %605 = vector.load %arg7[%c0_184, %c0_185, %c0_186] : memref<8x2x16xbf16, #tpu.memory_space<vmem>>, vector<8x2x16xbf16>
    tpu.vector_store %arg7[%c0_184, %c0_185, %c0_186], %604 {strides = array<i32>} : memref<8x2x16xbf16, #tpu.memory_space<vmem>>, vector<8x2x16xbf16>,
    return
  }
  func.func @transform_0(%arg0: i32) -> (i32, i32) {
    %c0_i32 = arith.constant 0 : i32
    %c0_i32_0 = arith.constant 0 : i32
    return %arg0, %c0_i32 : i32, i32
  }
  func.func @transform_1(%arg0: i32) -> (i32, i32) {
    %c0_i32 = arith.constant 0 : i32
    %0 = arith.subi %c0_i32, %arg0 : i32
    %c0_i32_0 = arith.constant 0 : i32
    %c0_i32_1 = arith.constant 0 : i32
    return %0, %c0_i32_0 : i32, i32
  }
  func.func @transform_2(%arg0: i32) -> (i32, i32, i32) {
    %c0_i32 = arith.constant 0 : i32
    %c0_i32_0 = arith.constant 0 : i32
    %c0_i32_1 = arith.constant 0 : i32
    %c0_i32_2 = arith.constant 0 : i32
    return %c0_i32, %c0_i32_0, %c0_i32_1 : i32, i32, i32
  }
  func.func @transform_3(%arg0: i32) -> (i32, i32, i32) {
    %c0_i32 = arith.constant 0 : i32
    %c0_i32_0 = arith.constant 0 : i32
    %c0_i32_1 = arith.constant 0 : i32
    %c0_i32_2 = arith.constant 0 : i32
    return %c0_i32, %c0_i32_0, %c0_i32_1 : i32, i32, i32
  }
  func.func @transform_4(%arg0: i32) -> (i32, i32) {
    %c0_i32 = arith.constant 0 : i32
    %c0_i32_0 = arith.constant 0 : i32
    %c0_i32_1 = arith.constant 0 : i32
    return %c0_i32, %c0_i32_0 : i32, i32
  }
  func.func @transform_5(%arg0: i32) -> (i32, i32, i32) {
    %c0_i32 = arith.constant 0 : i32
    %c0_i32_0 = arith.constant 0 : i32
    %c0_i32_1 = arith.constant 0 : i32
    return %arg0, %c0_i32, %c0_i32_0 : i32, i32, i32
  }
  func.func @transform_6(%arg0: i32) -> (i32, i32, i32) {
    %c0_i32 = arith.constant 0 : i32
    %0 = arith.subi %c0_i32, %arg0 : i32
    %c0_i32_0 = arith.constant 0 : i32
    %c0_i32_1 = arith.constant 0 : i32
    %c0_i32_2 = arith.constant 0 : i32
    return %0, %c0_i32_0, %c0_i32_1 : i32, i32, i32
  }
}

</mosaic_0001>

<llo_original>
// kernel: lstm_module_forward.3
$region0: #{lstm_module_forward.3}
  #allocation0 [shape = 'u32[]', space=smem, size = 0x4, offset = 0x4, fixed_abs, tag = 'smem constant byte address 0x4 - core index']
  #allocation1 [shape = 'u32[144,128]{1,0:T(1,128)}', space=vmem, size = 0x12000, scoped, tag = 'internal scratch']
  %s0 = inlined_call_operand.vmem [shape: bf16[8,2,16], index: 0, kind: input, shape index: {}]
  %s1 = inlined_call_operand.vmem [shape: bf16[8,2,16], index: 1, kind: input, shape index: {}]
  %s2 = inlined_call_operand.vmem [shape: f32[1,1,32], index: 2, kind: input, shape index: {}]
  %s3 = inlined_call_operand.vmem [shape: f32[1,1,32], index: 3, kind: input, shape index: {}]
  %s4 = inlined_call_operand.vmem [shape: f32[8,2,32], index: 4, kind: output, shape index: {}]
  %s5 = sld [smem:[#allocation0]]
  $region26: #{lstm_module_forward.3} parent=0
    _
  %s7 = ssub.s32 1, %s5
  %s8 = scalar_select 0, %s7, %s5
  // Predicated region
  $region2: #{lstm_module_forward.3} parent=0 // pred_check
    _
  $region3: #{lstm_module_forward.3} parent=0 // pred_check_branch
    %10 = sbr.rel (0) target = $region5
  $region4: #{lstm_module_forward.3} parent=0 // pred_region
    _
  $region5: #{lstm_module_forward.3} parent=0 // pred_fallthru
    _
  // Predicated region
  $region6: #{lstm_module_forward.3} parent=0 // pred_check
    _
  $region7: #{lstm_module_forward.3} parent=0 // pred_check_branch
    %12 = sbr.rel (0) target = $region9
  $region8: #{lstm_module_forward.3} parent=0 // pred_region
    _
  $region9: #{lstm_module_forward.3} parent=0 // pred_fallthru
    _
  // Predicated region
  $region10: #{lstm_module_forward.3} parent=0 // pred_check
    _
  $region11: #{lstm_module_forward.3} parent=0 // pred_check_branch
    %14 = sbr.rel (0) target = $region13
  $region12: #{lstm_module_forward.3} parent=0 // pred_region
    _
  $region13: #{lstm_module_forward.3} parent=0 // pred_fallthru
    _
  // Predicated region
  $region14: #{lstm_module_forward.3} parent=0 // pred_check
    _
  $region15: #{lstm_module_forward.3} parent=0 // pred_check_branch
    %16 = sbr.rel (0) target = $region17
  $region16: #{lstm_module_forward.3} parent=0 // pred_region
    _
  $region17: #{lstm_module_forward.3} parent=0 // pred_fallthru
    _
  %v17 = vld [vmem:[%s0] sm:$0x1]
  %v18 = vld [vmem:[%s0 + $0x1] sm:$0x1]
  %v19 = vld [vmem:[%s0 + $0x2] sm:$0x1]
  %v20 = vld [vmem:[%s0 + $0x3] sm:$0x1]
  %v21 = vld [vmem:[%s0 + $0x4] sm:$0x1]
  %v22 = vld [vmem:[%s0 + $0x5] sm:$0x1]
  %v23 = vld [vmem:[%s0 + $0x6] sm:$0x1]
  %v24 = vld [vmem:[%s0 + $0x7] sm:$0x1]
  %v25 = vunpack.c.l.bf16 %v17
  %v26 = vunpack.c.l.bf16 %v18
  %v27 = vunpack.c.l.bf16 %v19
  %v28 = vunpack.c.l.bf16 %v20
  %v29 = vunpack.c.l.bf16 %v21
  %v30 = vunpack.c.l.bf16 %v22
  %v31 = vunpack.c.l.bf16 %v23
  %v32 = vunpack.c.l.bf16 %v24
  %v33 = vld [vmem:[%s1] sm:$0x1]
  %v34 = vld [vmem:[%s1 + $0x1] sm:$0x1]
  %v35 = vld [vmem:[%s1 + $0x2] sm:$0x1]
  %v36 = vld [vmem:[%s1 + $0x3] sm:$0x1]
  %v37 = vld [vmem:[%s1 + $0x4] sm:$0x1]
  %v38 = vld [vmem:[%s1 + $0x5] sm:$0x1]
  %v39 = vld [vmem:[%s1 + $0x6] sm:$0x1]
  %v40 = vld [vmem:[%s1 + $0x7] sm:$0x1]
  %v41 = vunpack.c.l.bf16 %v33
  %v42 = vunpack.c.l.bf16 %v34
  %v43 = vunpack.c.l.bf16 %v35
  %v44 = vunpack.c.l.bf16 %v36
  %v45 = vunpack.c.l.bf16 %v37
  %v46 = vunpack.c.l.bf16 %v38
  %v47 = vunpack.c.l.bf16 %v39
  %v48 = vunpack.c.l.bf16 %v40
  %vm49 = vcmask 123904
  %v50 = vsel %vm49, %v25, 0.0
  %51 = vadd.xlane.f32.xlu0 %v50
  %v52 = vpop.xlane.xlu0 %51
  %v53 = vsel %vm49, %v26, 0.0
  %54 = vadd.xlane.f32.xlu0 %v53
  %v55 = vpop.xlane.xlu0 %54
  %v56 = vsel %vm49, %v27, 0.0
  %57 = vadd.xlane.f32.xlu0 %v56
  %v58 = vpop.xlane.xlu0 %57
  %v59 = vsel %vm49, %v28, 0.0
  %60 = vadd.xlane.f32.xlu0 %v59
  %v61 = vpop.xlane.xlu0 %60
  %v62 = vsel %vm49, %v29, 0.0
  %63 = vadd.xlane.f32.xlu0 %v62
  %v64 = vpop.xlane.xlu0 %63
  %v65 = vsel %vm49, %v30, 0.0
  %66 = vadd.xlane.f32.xlu0 %v65
  %v67 = vpop.xlane.xlu0 %66
  %v68 = vsel %vm49, %v31, 0.0
  %69 = vadd.xlane.f32.xlu0 %v68
  %v70 = vpop.xlane.xlu0 %69
  %v71 = vsel %vm49, %v32, 0.0
  %72 = vadd.xlane.f32.xlu0 %v71
  %v73 = vpop.xlane.xlu0 %72
  %v74 = vsel %vm49, %v41, 0.0
  %75 = vadd.xlane.f32.xlu0 %v74
  %v76 = vpop.xlane.xlu0 %75
  %v77 = vsel %vm49, %v42, 0.0
  %78 = vadd.xlane.f32.xlu0 %v77
  %v79 = vpop.xlane.xlu0 %78
  %v80 = vsel %vm49, %v43, 0.0
  %81 = vadd.xlane.f32.xlu0 %v80
  %v82 = vpop.xlane.xlu0 %81
  %v83 = vsel %vm49, %v44, 0.0
  %84 = vadd.xlane.f32.xlu0 %v83
  %v85 = vpop.xlane.xlu0 %84
  %v86 = vsel %vm49, %v45, 0.0
  %87 = vadd.xlane.f32.xlu0 %v86
  %v88 = vpop.xlane.xlu0 %87
  %v89 = vsel %vm49, %v46, 0.0
  %90 = vadd.xlane.f32.xlu0 %v89
  %v91 = vpop.xlane.xlu0 %90
  %v92 = vsel %vm49, %v47, 0.0
  %93 = vadd.xlane.f32.xlu0 %v92
  %v94 = vpop.xlane.xlu0 %93
  %v95 = vsel %vm49, %v48, 0.0
  %96 = vadd.xlane.f32.xlu0 %v95
  %v97 = vpop.xlane.xlu0 %96
  %v98 = vadd.f32 %v52, %v76
  %v99 = vadd.f32 %v55, %v79
  %v100 = vadd.f32 %v58, %v82
  %v101 = vadd.f32 %v61, %v85
  %v102 = vadd.f32 %v64, %v88
  %v103 = vadd.f32 %v67, %v91
  %v104 = vadd.f32 %v70, %v94
  %v105 = vadd.f32 %v73, %v97
  %v106 = vmul.f32 %v25, %v25
  %v107 = vmul.f32 %v26, %v26
  %v108 = vmul.f32 %v27, %v27
  %v109 = vmul.f32 %v28, %v28
  %v110 = vmul.f32 %v29, %v29
  %v111 = vmul.f32 %v30, %v30
  %v112 = vmul.f32 %v31, %v31
  %v113 = vmul.f32 %v32, %v32
  %v114 = vsel %vm49, %v106, 0.0
  %115 = vadd.xlane.f32.xlu0 %v114
  %v116 = vpop.xlane.xlu0 %115
  %v117 = vsel %vm49, %v107, 0.0
  %118 = vadd.xlane.f32.xlu0 %v117
  %v119 = vpop.xlane.xlu0 %118
  %v120 = vsel %vm49, %v108, 0.0
  %121 = vadd.xlane.f32.xlu0 %v120
  %v122 = vpop.xlane.xlu0 %121
  %v123 = vsel %vm49, %v109, 0.0
  %124 = vadd.xlane.f32.xlu0 %v123
  %v125 = vpop.xlane.xlu0 %124
  %v126 = vsel %vm49, %v110, 0.0
  %127 = vadd.xlane.f32.xlu0 %v126
  %v128 = vpop.xlane.xlu0 %127
  %v129 = vsel %vm49, %v111, 0.0
  %130 = vadd.xlane.f32.xlu0 %v129
  %v131 = vpop.xlane.xlu0 %130
  %v132 = vsel %vm49, %v112, 0.0
  %133 = vadd.xlane.f32.xlu0 %v132
  %v134 = vpop.xlane.xlu0 %133
  %v135 = vsel %vm49, %v113, 0.0
  %136 = vadd.xlane.f32.xlu0 %v135
  %v137 = vpop.xlane.xlu0 %136
  %v138 = vmul.f32 %v41, %v41
  %v139 = vmul.f32 %v42, %v42
  %v140 = vmul.f32 %v43, %v43
  %v141 = vmul.f32 %v44, %v44
  %v142 = vmul.f32 %v45, %v45
  %v143 = vmul.f32 %v46, %v46
  %v144 = vmul.f32 %v47, %v47
  %v145 = vmul.f32 %v48, %v48
  %v146 = vsel %vm49, %v138, 0.0
  %147 = vadd.xlane.f32.xlu0 %v146
  %v148 = vpop.xlane.xlu0 %147
  %v149 = vsel %vm49, %v139, 0.0
  %150 = vadd.xlane.f32.xlu0 %v149
  %v151 = vpop.xlane.xlu0 %150
  %v152 = vsel %vm49, %v140, 0.0
  %153 = vadd.xlane.f32.xlu0 %v152
  %v154 = vpop.xlane.xlu0 %153
  %v155 = vsel %vm49, %v141, 0.0
  %156 = vadd.xlane.f32.xlu0 %v155
  %v157 = vpop.xlane.xlu0 %156
  %v158 = vsel %vm49, %v142, 0.0
  %159 = vadd.xlane.f32.xlu0 %v158
  %v160 = vpop.xlane.xlu0 %159
  %v161 = vsel %vm49, %v143, 0.0
  %162 = vadd.xlane.f32.xlu0 %v161
  %v163 = vpop.xlane.xlu0 %162
  %v164 = vsel %vm49, %v144, 0.0
  %165 = vadd.xlane.f32.xlu0 %v164
  %v166 = vpop.xlane.xlu0 %165
  %v167 = vsel %vm49, %v145, 0.0
  %168 = vadd.xlane.f32.xlu0 %v167
  %v169 = vpop.xlane.xlu0 %168
  %v170 = vadd.f32 %v116, %v148
  %v171 = vadd.f32 %v119, %v151
  %v172 = vadd.f32 %v122, %v154
  %v173 = vadd.f32 %v125, %v157
  %v174 = vadd.f32 %v128, %v160
  %v175 = vadd.f32 %v131, %v163
  %v176 = vadd.f32 %v134, %v166
  %v177 = vadd.f32 %v137, %v169
  %v178 = vmul.f32 %v98, 0.03125
  %v179 = vmul.f32 %v99, 0.03125
  %v180 = vmul.f32 %v100, 0.03125
  %v181 = vmul.f32 %v101, 0.03125
  %v182 = vmul.f32 %v102, 0.03125
  %v183 = vmul.f32 %v103, 0.03125
  %v184 = vmul.f32 %v104, 0.03125
  %v185 = vmul.f32 %v105, 0.03125
  %v186 = vmul.f32 %v170, 0.03125
  %v187 = vmul.f32 %v171, 0.03125
  %v188 = vmul.f32 %v172, 0.03125
  %v189 = vmul.f32 %v173, 0.03125
  %v190 = vmul.f32 %v174, 0.03125
  %v191 = vmul.f32 %v175, 0.03125
  %v192 = vmul.f32 %v176, 0.03125
  %v193 = vmul.f32 %v177, 0.03125
  %v194 = vmul.f32 %v178, %v178
  %v195 = vmul.f32 %v179, %v179
  %v196 = vmul.f32 %v180, %v180
  %v197 = vmul.f32 %v181, %v181
  %v198 = vmul.f32 %v182, %v182
  %v199 = vmul.f32 %v183, %v183
  %v200 = vmul.f32 %v184, %v184
  %v201 = vmul.f32 %v185, %v185
  %v202 = vsub.f32 %v186, %v194
  %v203 = vsub.f32 %v187, %v195
  %v204 = vsub.f32 %v188, %v196
  %v205 = vsub.f32 %v189, %v197
  %v206 = vsub.f32 %v190, %v198
  %v207 = vsub.f32 %v191, %v199
  %v208 = vsub.f32 %v192, %v200
  %v209 = vsub.f32 %v193, %v201
  %v210 = vadd.f32 %v202, 1e-05
  %v211 = vadd.f32 %v203, 1e-05
  %v212 = vadd.f32 %v204, 1e-05
  %v213 = vadd.f32 %v205, 1e-05
  %v214 = vadd.f32 %v206, 1e-05
  %v215 = vadd.f32 %v207, 1e-05
  %v216 = vadd.f32 %v208, 1e-05
  %v217 = vadd.f32 %v209, 1e-05
  %v218 = vrsqrt.pop %v210
  %v219 = vrsqrt.pop %v211
  %v220 = vrsqrt.pop %v212
  %v221 = vrsqrt.pop %v213
  %v222 = vrsqrt.pop %v214
  %v223 = vrsqrt.pop %v215
  %v224 = vrsqrt.pop %v216
  %v225 = vrsqrt.pop %v217
  %v226 = vld [vmem:[%s2] sm:$0x1]
  %v227 = vld [vmem:[%s3] sm:$0x1]
  %v228 = vsub.f32 %v25, %v178
  %v229 = vsub.f32 %v26, %v179
  %v230 = vsub.f32 %v27, %v180
  %v231 = vsub.f32 %v28, %v181
  %v232 = vsub.f32 %v29, %v182
  %v233 = vsub.f32 %v30, %v183
  %v234 = vsub.f32 %v31, %v184
  %v235 = vsub.f32 %v32, %v185
  %v236 = vmul.f32 %v228, %v218
  %v237 = vmul.f32 %v229, %v219
  %v238 = vmul.f32 %v230, %v220
  %v239 = vmul.f32 %v231, %v221
  %v240 = vmul.f32 %v232, %v222
  %v241 = vmul.f32 %v233, %v223
  %v242 = vmul.f32 %v234, %v224
  %v243 = vmul.f32 %v235, %v225
  %v245 = vlaneseq
  %v246 = vshrl.u32 %v245, 7
  %v247 = vsub.s32 0, %v246
  %v248 = vrot.slane %v226, %v247
  %v250 = vmul.f32 %v236, %v248
  %v251 = vmul.f32 %v237, %v248
  %v252 = vmul.f32 %v238, %v248
  %v253 = vmul.f32 %v239, %v248
  %v254 = vmul.f32 %v240, %v248
  %v255 = vmul.f32 %v241, %v248
  %v256 = vmul.f32 %v242, %v248
  %v257 = vmul.f32 %v243, %v248
  %v259 = vlaneseq
  %v260 = vshrl.u32 %v259, 7
  %v261 = vsub.s32 0, %v260
  %v262 = vrot.slane %v227, %v261
  %v264 = vadd.f32 %v250, %v262
  %v265 = vadd.f32 %v251, %v262
  %v266 = vadd.f32 %v252, %v262
  %v267 = vadd.f32 %v253, %v262
  %v268 = vadd.f32 %v254, %v262
  %v269 = vadd.f32 %v255, %v262
  %v270 = vadd.f32 %v256, %v262
  %v271 = vadd.f32 %v257, %v262
  %v272 = vmax.f32 %v264, 0.0
  %v273 = vmax.f32 %v265, 0.0
  %v274 = vmax.f32 %v266, 0.0
  %v275 = vmax.f32 %v267, 0.0
  %v276 = vmax.f32 %v268, 0.0
  %v277 = vmax.f32 %v269, 0.0
  %v278 = vmax.f32 %v270, 0.0
  %v279 = vmax.f32 %v271, 0.0
  %280 = vst.msk [vmem:[%s4] sm:$0x3] %vm49, %v272
  %281 = vst.msk [vmem:[%s4 + $0x2] sm:$0x3] %vm49, %v273
  %282 = vst.msk [vmem:[%s4 + $0x4] sm:$0x3] %vm49, %v274
  %283 = vst.msk [vmem:[%s4 + $0x6] sm:$0x3] %vm49, %v275
  %284 = vst.msk [vmem:[%s4 + $0x8] sm:$0x3] %vm49, %v276
  %285 = vst.msk [vmem:[%s4 + $0xa] sm:$0x3] %vm49, %v277
  %286 = vst.msk [vmem:[%s4 + $0xc] sm:$0x3] %vm49, %v278
  %287 = vst.msk [vmem:[%s4 + $0xe] sm:$0x3] %vm49, %v279
  %v288 = vsub.f32 %v41, %v178
  %v289 = vsub.f32 %v42, %v179
  %v290 = vsub.f32 %v43, %v180
  %v291 = vsub.f32 %v44, %v181
  %v292 = vsub.f32 %v45, %v182
  %v293 = vsub.f32 %v46, %v183
  %v294 = vsub.f32 %v47, %v184
  %v295 = vsub.f32 %v48, %v185
  %v296 = vmul.f32 %v288, %v218
  %v297 = vmul.f32 %v289, %v219
  %v298 = vmul.f32 %v290, %v220
  %v299 = vmul.f32 %v291, %v221
  %v300 = vmul.f32 %v292, %v222
  %v301 = vmul.f32 %v293, %v223
  %v302 = vmul.f32 %v294, %v224
  %v303 = vmul.f32 %v295, %v225
  %v305 = vunpack.c.l.s4 1983009808
  %v306 = vunpack.c.0.s8 %v305
  %v307 = vlaneseq
  %v308 = vshrl.u32 %v307, 7
  %v309 = vsub.s32 %v306, %v308
  %v310 = vrot.slane %v248, %v309
  %311 = vrot.lane.b32.xlu0 %v310, 112
  %v312 = vpop.permute.xlu0 %311
  %v314 = vmul.f32 %v296, %v312
  %v315 = vmul.f32 %v297, %v312
  %v316 = vmul.f32 %v298, %v312
  %v317 = vmul.f32 %v299, %v312
  %v318 = vmul.f32 %v300, %v312
  %v319 = vmul.f32 %v301, %v312
  %v320 = vmul.f32 %v302, %v312
  %v321 = vmul.f32 %v303, %v312
  %v323 = vunpack.c.l.s4 1983009808
  %v324 = vunpack.c.0.s8 %v323
  %v325 = vlaneseq
  %v326 = vshrl.u32 %v325, 7
  %v327 = vsub.s32 %v324, %v326
  %v328 = vrot.slane %v262, %v327
  %329 = vrot.lane.b32.xlu0 %v328, 112
  %v330 = vpop.permute.xlu0 %329
  %v332 = vadd.f32 %v314, %v330
  %v333 = vadd.f32 %v315, %v330
  %v334 = vadd.f32 %v316, %v330
  %v335 = vadd.f32 %v317, %v330
  %v336 = vadd.f32 %v318, %v330
  %v337 = vadd.f32 %v319, %v330
  %v338 = vadd.f32 %v320, %v330
  %v339 = vadd.f32 %v321, %v330
  %v340 = vmax.f32 %v332, 0.0
  %v341 = vmax.f32 %v333, 0.0
  %v342 = vmax.f32 %v334, 0.0
  %v343 = vmax.f32 %v335, 0.0
  %v344 = vmax.f32 %v336, 0.0
  %v345 = vmax.f32 %v337, 0.0
  %v346 = vmax.f32 %v338, 0.0
  %v347 = vmax.f32 %v339, 0.0
  %v357 = vunpack.c.l.s4 1983009808
  %v358 = vunpack.c.0.s8 %v357
  %v359 = vlaneseq
  %v360 = vshrl.u32 %v359, 7
  %v361 = vsub.s32 %v358, %v360
  %v362 = vrot.slane %v340, %v361
  %v364 = vunpack.c.l.s4 1983009808
  %v365 = vunpack.c.0.s8 %v364
  %v366 = vlaneseq
  %v367 = vshrl.u32 %v366, 7
  %v368 = vsub.s32 %v365, %v367
  %v369 = vrot.slane %v341, %v368
  %v371 = vunpack.c.l.s4 1983009808
  %v372 = vunpack.c.0.s8 %v371
  %v373 = vlaneseq
  %v374 = vshrl.u32 %v373, 7
  %v375 = vsub.s32 %v372, %v374
  %v376 = vrot.slane %v342, %v375
  %v378 = vunpack.c.l.s4 1983009808
  %v379 = vunpack.c.0.s8 %v378
  %v380 = vlaneseq
  %v381 = vshrl.u32 %v380, 7
  %v382 = vsub.s32 %v379, %v381
  %v383 = vrot.slane %v343, %v382
  %v385 = vunpack.c.l.s4 1983009808
  %v386 = vunpack.c.0.s8 %v385
  %v387 = vlaneseq
  %v388 = vshrl.u32 %v387, 7
  %v389 = vsub.s32 %v386, %v388
  %v390 = vrot.slane %v344, %v389
  %v392 = vunpack.c.l.s4 1983009808
  %v393 = vunpack.c.0.s8 %v392
  %v394 = vlaneseq
  %v395 = vshrl.u32 %v394, 7
  %v396 = vsub.s32 %v393, %v395
  %v397 = vrot.slane %v345, %v396
  %v399 = vunpack.c.l.s4 1983009808
  %v400 = vunpack.c.0.s8 %v399
  %v401 = vlaneseq
  %v402 = vshrl.u32 %v401, 7
  %v403 = vsub.s32 %v400, %v402
  %v404 = vrot.slane %v346, %v403
  %v406 = vunpack.c.l.s4 1983009808
  %v407 = vunpack.c.0.s8 %v406
  %v408 = vlaneseq
  %v409 = vshrl.u32 %v408, 7
  %v410 = vsub.s32 %v407, %v409
  %v411 = vrot.slane %v347, %v410
  %412 = vrot.lane.b32.xlu0 %v362, 16
  %v413 = vpop.permute.xlu0 %412
  %414 = vrot.lane.b32.xlu0 %v369, 16
  %v415 = vpop.permute.xlu0 %414
  %416 = vrot.lane.b32.xlu0 %v376, 16
  %v417 = vpop.permute.xlu0 %416
  %418 = vrot.lane.b32.xlu0 %v383, 16
  %v419 = vpop.permute.xlu0 %418
  %420 = vrot.lane.b32.xlu0 %v390, 16
  %v421 = vpop.permute.xlu0 %420
  %422 = vrot.lane.b32.xlu0 %v397, 16
  %v423 = vpop.permute.xlu0 %422
  %424 = vrot.lane.b32.xlu0 %v404, 16
  %v425 = vpop.permute.xlu0 %424
  %426 = vrot.lane.b32.xlu0 %v411, 16
  %v427 = vpop.permute.xlu0 %426
  %vm436 = vcmask 255104
  %437 = vst.msk [vmem:[%s4] sm:$0x3] %vm436, %v413
  %438 = vst.msk [vmem:[%s4 + $0x2] sm:$0x3] %vm436, %v415
  %439 = vst.msk [vmem:[%s4 + $0x4] sm:$0x3] %vm436, %v417
  %440 = vst.msk [vmem:[%s4 + $0x6] sm:$0x3] %vm436, %v419
  %441 = vst.msk [vmem:[%s4 + $0x8] sm:$0x3] %vm436, %v421
  %442 = vst.msk [vmem:[%s4 + $0xa] sm:$0x3] %vm436, %v423
  %443 = vst.msk [vmem:[%s4 + $0xc] sm:$0x3] %vm436, %v425
  %444 = vst.msk [vmem:[%s4 + $0xe] sm:$0x3] %vm436, %v427
  // Predicated region
  $region18: #{lstm_module_forward.3} parent=0 // pred_check
    _
  $region19: #{lstm_module_forward.3} parent=0 // pred_check_branch
    %446 = sbr.rel (0) target = $region21
  $region20: #{lstm_module_forward.3} parent=0 // pred_region
    _
  $region21: #{lstm_module_forward.3} parent=0 // pred_fallthru
    _
  // Predicated region
  $region22: #{lstm_module_forward.3} parent=0 // pred_check
    _
  $region23: #{lstm_module_forward.3} parent=0 // pred_check_branch
    %448 = sbr.rel (0) target = $region25
  $region24: #{lstm_module_forward.3} parent=0 // pred_region
    _
  $region25: #{lstm_module_forward.3} parent=0 // pred_fallthru
    _

// kernel: lstm_module_forward.2
$region0: #{lstm_module_forward.2}
  #allocation0 [shape = 'u32[]', space=smem, size = 0x4, offset = 0x4, fixed_abs, tag = 'smem constant byte address 0x4 - core index']
  #allocation1 [shape = 'u32[144,128]{1,0:T(1,128)}', space=vmem, size = 0x12000, scoped, tag = 'internal scratch']
  #allocation2 [shape = 'f32[16,64]{1,0:T(8,128)}', space=vmem, size = 0x2000, scoped, tag = 'scratch operand']
  #allocation3 [shape = 'f32[16,64]{1,0:T(8,128)}', space=vmem, size = 0x2000, scoped, tag = 'scratch operand']
  #allocation4 [shape = 'f32[8,2,16]{2,1,0:T(2,128)}', space=vmem, size = 0x2000, scoped, tag = 'scratch operand']
  #allocation5 [shape = 'f32[8,2,16]{2,1,0:T(2,128)}', space=vmem, size = 0x2000, scoped, tag = 'scratch operand']
  #allocation6 [shape = 'f32[2,16]{1,0:T(2,128)}', space=vmem, size = 0x400, scoped, tag = 'scratch operand']
  #allocation7 [shape = 'f32[2,16]{1,0:T(2,128)}', space=vmem, size = 0x400, scoped, tag = 'scratch operand']
  #allocation8 [shape = 'f32[2,16]{1,0:T(2,128)}', space=vmem, size = 0x400, scoped, tag = 'scratch operand']
  #allocation9 [shape = 'f32[2,16]{1,0:T(2,128)}', space=vmem, size = 0x400, scoped, tag = 'scratch operand']
  %s0 = inlined_call_operand.vmem [shape: bf16[16,32], index: 0, kind: input, shape index: {}, may-alias: {0,1}]
  %s1 = inlined_call_operand.vmem [shape: bf16[16,32], index: 1, kind: input, shape index: {}, may-alias: {0,1}]
  %s2 = inlined_call_operand.vmem [shape: bf16[2,32,64], index: 2, kind: input, shape index: {}]
  %s3 = inlined_call_operand.vmem [shape: bf16[2,16,64], index: 3, kind: input, shape index: {}]
  %s4 = inlined_call_operand.vmem [shape: f32[2,64], index: 4, kind: input, shape index: {}]
  %s5 = inlined_call_operand.vmem [shape: bf16[8,2,16], index: 5, kind: output, shape index: {0}]
  %s6 = inlined_call_operand.vmem [shape: bf16[8,2,16], index: 6, kind: output, shape index: {1}]
  %7 = xla_tuple %s5, %s6
  %s8 = sld [smem:[#allocation0]]
  $region42: #{lstm_module_forward.2} parent=0
    _
  %s10 = ssub.s32 1, %s8
  %s11 = scalar_select 0, %s10, %s8
  // Predicated region
  $region2: #{lstm_module_forward.2} parent=0 // pred_check
    _
  $region3: #{lstm_module_forward.2} parent=0 // pred_check_branch
    %13 = sbr.rel (0) target = $region5
  $region4: #{lstm_module_forward.2} parent=0 // pred_region
    _
  $region5: #{lstm_module_forward.2} parent=0 // pred_fallthru
    _
  // Predicated region
  $region6: #{lstm_module_forward.2} parent=0 // pred_check
    _
  $region7: #{lstm_module_forward.2} parent=0 // pred_check_branch
    %15 = sbr.rel (0) target = $region9
  $region8: #{lstm_module_forward.2} parent=0 // pred_region
    %s16 = ssub.s32 0, 0
    %s17 = smul.u32 2, %s16
    %p18 = scmp.lt.s32.totalorder %s17, 1
    %s19 = scalar_select %p18, %s17, 1
    %s20 = smul.addr %s19, 4
    %s21 = scalar_lea.vmem %s1, %s20
    %s22 = ssub.s32 0, 0
    %s23 = smul.u32 2, %s22
  $region9: #{lstm_module_forward.2} parent=0 // pred_fallthru
    _
  // Predicated region
  $region10: #{lstm_module_forward.2} parent=0 // pred_check
    _
  $region11: #{lstm_module_forward.2} parent=0 // pred_check_branch
    %25 = sbr.rel (0) target = $region13
  $region12: #{lstm_module_forward.2} parent=0 // pred_region
    _
  $region13: #{lstm_module_forward.2} parent=0 // pred_fallthru
    _
  // Predicated region
  $region14: #{lstm_module_forward.2} parent=0 // pred_check
    _
  $region15: #{lstm_module_forward.2} parent=0 // pred_check_branch
    %27 = sbr.rel (0) target = $region17
  $region16: #{lstm_module_forward.2} parent=0 // pred_region
    _
  $region17: #{lstm_module_forward.2} parent=0 // pred_fallthru
    _
  // Predicated region
  $region18: #{lstm_module_forward.2} parent=0 // pred_check
    _
  $region19: #{lstm_module_forward.2} parent=0 // pred_check_branch
    %29 = sbr.rel (0) target = $region21
  $region20: #{lstm_module_forward.2} parent=0 // pred_region
    _
  $region21: #{lstm_module_forward.2} parent=0 // pred_fallthru
    _
  %s30 = ssub.s32 0, 0
  %s31 = smul.u32 2, %s30
  %p32 = scmp.lt.s32.totalorder %s31, 1
  %s33 = scalar_select %p32, %s31, 1
  %s34 = smul.addr %s33, 4
  %s35 = scalar_lea.vmem %s1, %s34
  %s36 = ssub.s32 0, 0
  %s37 = smul.u32 8, %s36
  %p38 = scmp.lt.s32.totalorder %s37, 7
  %s39 = scalar_select %p38, %s37, 7
  %s40 = scalar_lea.vmem %s6, %s39
  %s41 = ssub.s32 0, 0
  %s42 = smul.u32 2, %s41
  %p43 = scmp.lt.s32.totalorder %s42, 1
  %s44 = scalar_select %p43, %s42, 1
  %s45 = smul.addr %s44, 4
  %s46 = scalar_lea.vmem %s1, %s45
  %s47 = ssub.s32 0, 0
  %s48 = smul.u32 2, %s47
  %s49 = ssub.s32 0, 0
  %s50 = smul.u32 8, %s49
  %p51 = scmp.lt.s32.totalorder %s50, 7
  %s52 = scalar_select %p51, %s50, 7
  %s53 = scalar_lea.vmem %s6, %s52
  %s54 = ssub.s32 0, 0
  %s55 = smul.u32 8, %s54
  %p57 = scmp.eq.s32.totalorder 0, 0
  // Predicated region
  $region22: #{lstm_module_forward.2} parent=0 // pred_check
    %p58 = pneg %p57
  $region23: #{lstm_module_forward.2} parent=0 // pred_check_branch
    %60 = sbr.rel (%p58) target = $region25
  $region24: #{lstm_module_forward.2} parent=0 // pred_region
    %vm61 = vcmask 123904
    %62 = vst.msk [vmem:[#allocation6] sm:$0x3] %vm61, 0.0
    %63 = vst.msk [vmem:[#allocation7] sm:$0x3] %vm61, 0.0
    %64 = vst.msk [vmem:[#allocation8] sm:$0x3] %vm61, 0.0
    %65 = vst.msk [vmem:[#allocation9] sm:$0x3] %vm61, 0.0
  $region25: #{lstm_module_forward.2} parent=0 // pred_fallthru
    _
  %v66 = vld [vmem:[%s4] sm:$0x3]
  %v67 = vld [vmem:[%s0] sm:$0xf]
  %v68 = vld [vmem:[%s0 + $0x4] sm:$0xf]
  %v69 = vld [vmem:[%s2] sm:$0xf]
  %v70 = vld [vmem:[%s2 + $0x4] sm:$0xf]
  %v71 = vld [vmem:[%s2 + $0x8] sm:$0xf]
  %v72 = vld [vmem:[%s2 + $0xc] sm:$0xf]
  %v73 = vlaneseq
  %v74 = vshrl.u32 %v73, 7
  %v75 = vsub.s32 0, %v74
  %v76 = vrot.slane %v66, %v75
  %v79 = vunpack.c.l.b16 %v67
  %v80 = vunpack.c.l.b16 %v68
  %v81 = vpack.c.b16 %v80, %v79
  %v86 = vunpack.c.l.b16 %v69
  %v87 = vunpack.c.l.b16 %v70
  %v88 = vunpack.c.l.b16 %v71
  %v89 = vunpack.c.l.b16 %v72
  %v90 = vpack.c.b16 %v87, %v86
  %v91 = vpack.c.b16 %v89, %v88
  %vm94 = vcmask 261120
  %v96 = vsel %vm94, %v81, 0
  %98 = vmatprep.subr.bf16.mxu0 0
  %99 = vmatpush1.bf16.msra.mxu0 0
  %100 = vmatprep.subr.bf16.mxu0 0
  %101 = vmatpush1.bf16.msra.mxu0 0
  %102 = vmatprep.subr.bf16.mxu0 0
  %103 = vmatpush1.bf16.msra.mxu0 0
  %104 = vmatprep.subr.bf16.mxu0 0
  %105 = vmatpush1.bf16.msra.mxu0 0
  %106 = vmatprep.subr.bf16.mxu0 0
  %107 = vmatpush1.bf16.msra.mxu0 0
  %108 = vmatprep.subr.bf16.mxu0 0
  %109 = vmatpush1.bf16.msra.mxu0 0
  %110 = vmatprep.subr.bf16.mxu0 0
  %111 = vmatpush1.bf16.msra.mxu0 %v91
  %112 = vmatprep.subr.bf16.mxu0 0
  %113 = vmatpush1.bf16.msra.mxu0 %v90
  %114 = vmatprep.subr.bf16.mxu0 0
  %115 = vmatpush2.bf16.msra.mxu0 0
  %116 = vmatprep.subr.bf16.mxu0 0
  %117 = vmatpush2.bf16.msra.mxu0 0
  %118 = vmatprep.subr.bf16.mxu0 0
  %119 = vmatpush2.bf16.msra.mxu0 0
  %120 = vmatprep.subr.bf16.mxu0 0
  %121 = vmatpush2.bf16.msra.mxu0 0
  %122 = vmatprep.subr.bf16.mxu0 0
  %123 = vmatpush2.bf16.msra.mxu0 0
  %124 = vmatprep.subr.bf16.mxu0 0
  %125 = vmatpush2.bf16.msra.mxu0 0
  %126 = vmatprep.subr.bf16.mxu0 0
  %127 = vmatpush2.bf16.msra.mxu0 0
  %128 = vmatprep.subr.bf16.mxu0 0
  %129 = vmatpush2.bf16.msra.mxu0 0
  %130 = vmatprep.mubr.bf16.mxu0 0
  %131 = vmatmul.mubr.bf16.gmra.mxu0 %v96
  %v132 = vpop.f32.mrf.mxu0
  %v133 = vadd.f32 %v76, %v132
  %v134 = vpop.f32.mrf.mxu0
  %v135 = vpop.f32.mrf.mxu0
  %v136 = vadd.f32 %v76, %v135
  %v137 = vpop.f32.mrf.mxu0
  %138 = vdwg.mxu0
  %vm139 = vcmask 523264
  %140 = vst.msk [vmem:[#allocation2] sm:$0xff] %vm139, %v133
  %141 = vst.msk [vmem:[#allocation2 + $0x8] sm:$0xff] %vm139, %v136
  %v142 = vld [vmem:[%s46] sm:$0xf]
  %v143 = vld [vmem:[%s46 + $0x4] sm:$0xf]
  %s144 = scalar_lea.vmem %s2, 16
  %v145 = vld [vmem:[%s144] sm:$0xf]
  %v146 = vld [vmem:[%s144 + $0x4] sm:$0xf]
  %v147 = vld [vmem:[%s144 + $0x8] sm:$0xf]
  %v148 = vld [vmem:[%s144 + $0xc] sm:$0xf]
  %v149 = vlaneseq
  %v150 = vshrl.u32 %v149, 7
  %v151 = vsub.s32 1, %v150
  %v152 = vrot.slane %v66, %v151
  %v155 = vunpack.c.l.b16 %v142
  %v156 = vunpack.c.l.b16 %v143
  %v157 = vpack.c.b16 %v156, %v155
  %v162 = vunpack.c.l.b16 %v145
  %v163 = vunpack.c.l.b16 %v146
  %v164 = vunpack.c.l.b16 %v147
  %v165 = vunpack.c.l.b16 %v148
  %v166 = vpack.c.b16 %v163, %v162
  %v167 = vpack.c.b16 %v165, %v164
  %v171 = vsel %vm94, %v157, 0
  %173 = vmatprep.subr.bf16.mxu0 0
  %174 = vmatpush1.bf16.msra.mxu0 0
  %175 = vmatprep.subr.bf16.mxu0 0
  %176 = vmatpush1.bf16.msra.mxu0 0
  %177 = vmatprep.subr.bf16.mxu0 0
  %178 = vmatpush1.bf16.msra.mxu0 0
  %179 = vmatprep.subr.bf16.mxu0 0
  %180 = vmatpush1.bf16.msra.mxu0 0
  %181 = vmatprep.subr.bf16.mxu0 0
  %182 = vmatpush1.bf16.msra.mxu0 0
  %183 = vmatprep.subr.bf16.mxu0 0
  %184 = vmatpush1.bf16.msra.mxu0 0
  %185 = vmatprep.subr.bf16.mxu0 0
  %186 = vmatpush1.bf16.msra.mxu0 %v167
  %187 = vmatprep.subr.bf16.mxu0 0
  %188 = vmatpush1.bf16.msra.mxu0 %v166
  %189 = vmatprep.subr.bf16.mxu0 0
  %190 = vmatpush2.bf16.msra.mxu0 0
  %191 = vmatprep.subr.bf16.mxu0 0
  %192 = vmatpush2.bf16.msra.mxu0 0
  %193 = vmatprep.subr.bf16.mxu0 0
  %194 = vmatpush2.bf16.msra.mxu0 0
  %195 = vmatprep.subr.bf16.mxu0 0
  %196 = vmatpush2.bf16.msra.mxu0 0
  %197 = vmatprep.subr.bf16.mxu0 0
  %198 = vmatpush2.bf16.msra.mxu0 0
  %199 = vmatprep.subr.bf16.mxu0 0
  %200 = vmatpush2.bf16.msra.mxu0 0
  %201 = vmatprep.subr.bf16.mxu0 0
  %202 = vmatpush2.bf16.msra.mxu0 0
  %203 = vmatprep.subr.bf16.mxu0 0
  %204 = vmatpush2.bf16.msra.mxu0 0
  %205 = vmatprep.mubr.bf16.mxu0 0
  %206 = vmatmul.mubr.bf16.gmra.mxu0 %v171
  %v207 = vpop.f32.mrf.mxu0
  %v208 = vadd.f32 %v152, %v207
  %v209 = vpop.f32.mrf.mxu0
  %v210 = vpop.f32.mrf.mxu0
  %v211 = vadd.f32 %v152, %v210
  %v212 = vpop.f32.mrf.mxu0
  %213 = vdwg.mxu0
  %214 = vst.msk [vmem:[#allocation3] sm:$0xff] %vm139, %v208
  %215 = vst.msk [vmem:[#allocation3 + $0x8] sm:$0xff] %vm139, %v211
  %v216 = vld [vmem:[%s3] sm:$0xf]
  %v217 = vld [vmem:[%s3 + $0x4] sm:$0xf]
  %s218 = scalar_lea.vmem %s3, 8
  %v219 = vld [vmem:[%s218] sm:$0xf]
  %v220 = vld [vmem:[%s218 + $0x4] sm:$0xf]
  %v221 = vld [vmem:[#allocation6] sm:$0x3]
  %v222 = vld [vmem:[#allocation7] sm:$0x3]
  %v223 = vld [vmem:[#allocation8] sm:$0x3]
  %v224 = vld [vmem:[#allocation9] sm:$0x3]
  %v225 = vld [vmem:[#allocation2] sm:$0x3]
  %v226 = vpack.c.bf16 %v221, %v221
  %v229 = vunpack.c.l.b16 %v216
  %v230 = vunpack.c.l.b16 %v217
  %v231 = vpack.c.b16 %v230, %v229
  %vm233 = vcmask 130048
  %v235 = vsel %vm233, %v226, 0
  %237 = vmatprep.subr.bf16.mxu0 0
  %238 = vmatpush1.bf16.msra.mxu0 0
  %239 = vmatprep.subr.bf16.mxu0 0
  %240 = vmatpush1.bf16.msra.mxu0 0
  %241 = vmatprep.subr.bf16.mxu0 0
  %242 = vmatpush1.bf16.msra.mxu0 0
  %243 = vmatprep.subr.bf16.mxu0 0
  %244 = vmatpush1.bf16.msra.mxu0 0
  %245 = vmatprep.subr.bf16.mxu0 0
  %246 = vmatpush1.bf16.msra.mxu0 0
  %247 = vmatprep.subr.bf16.mxu0 0
  %248 = vmatpush1.bf16.msra.mxu0 0
  %249 = vmatprep.subr.bf16.mxu0 0
  %250 = vmatpush1.bf16.msra.mxu0 0
  %251 = vmatprep.subr.bf16.mxu0 0
  %252 = vmatpush1.bf16.msra.mxu0 %v231
  %253 = vmatprep.subr.bf16.mxu0 0
  %254 = vmatpush2.bf16.msra.mxu0 0
  %255 = vmatprep.subr.bf16.mxu0 0
  %256 = vmatpush2.bf16.msra.mxu0 0
  %257 = vmatprep.subr.bf16.mxu0 0
  %258 = vmatpush2.bf16.msra.mxu0 0
  %259 = vmatprep.subr.bf16.mxu0 0
  %260 = vmatpush2.bf16.msra.mxu0 0
  %261 = vmatprep.subr.bf16.mxu0 0
  %262 = vmatpush2.bf16.msra.mxu0 0
  %263 = vmatprep.subr.bf16.mxu0 0
  %264 = vmatpush2.bf16.msra.mxu0 0
  %265 = vmatprep.subr.bf16.mxu0 0
  %266 = vmatpush2.bf16.msra.mxu0 0
  %267 = vmatprep.subr.bf16.mxu0 0
  %268 = vmatpush2.bf16.msra.mxu0 0
  %269 = vmatprep.mubr.bf16.mxu0 0
  %270 = vmatmul.mubr.bf16.gmra.mxu0 %v235
  %v271 = vpop.f32.mrf.mxu0
  %v272 = vadd.f32 0.0, %v271
  %v273 = vpop.f32.mrf.mxu0
  %v274 = vpop.f32.mrf.mxu0
  %v275 = vpop.f32.mrf.mxu0
  %276 = vdwg.mxu0
  %v277 = vadd.f32 %v225, %v272
  %v278 = vld [vmem:[#allocation3 + $0xe] sm:$0x3]
  %v279 = vpack.c.bf16 %v223, %v223
  %v282 = vunpack.c.l.b16 %v219
  %v283 = vunpack.c.l.b16 %v220
  %v284 = vpack.c.b16 %v283, %v282
  %v287 = vsel %vm233, %v279, 0
  %289 = vmatprep.subr.bf16.mxu0 0
  %290 = vmatpush1.bf16.msra.mxu0 0
  %291 = vmatprep.subr.bf16.mxu0 0
  %292 = vmatpush1.bf16.msra.mxu0 0
  %293 = vmatprep.subr.bf16.mxu0 0
  %294 = vmatpush1.bf16.msra.mxu0 0
  %295 = vmatprep.subr.bf16.mxu0 0
  %296 = vmatpush1.bf16.msra.mxu0 0
  %297 = vmatprep.subr.bf16.mxu0 0
  %298 = vmatpush1.bf16.msra.mxu0 0
  %299 = vmatprep.subr.bf16.mxu0 0
  %300 = vmatpush1.bf16.msra.mxu0 0
  %301 = vmatprep.subr.bf16.mxu0 0
  %302 = vmatpush1.bf16.msra.mxu0 0
  %303 = vmatprep.subr.bf16.mxu0 0
  %304 = vmatpush1.bf16.msra.mxu0 %v284
  %305 = vmatprep.subr.bf16.mxu0 0
  %306 = vmatpush2.bf16.msra.mxu0 0
  %307 = vmatprep.subr.bf16.mxu0 0
  %308 = vmatpush2.bf16.msra.mxu0 0
  %309 = vmatprep.subr.bf16.mxu0 0
  %310 = vmatpush2.bf16.msra.mxu0 0
  %311 = vmatprep.subr.bf16.mxu0 0
  %312 = vmatpush2.bf16.msra.mxu0 0
  %313 = vmatprep.subr.bf16.mxu0 0
  %314 = vmatpush2.bf16.msra.mxu0 0
  %315 = vmatprep.subr.bf16.mxu0 0
  %316 = vmatpush2.bf16.msra.mxu0 0
  %317 = vmatprep.subr.bf16.mxu0 0
  %318 = vmatpush2.bf16.msra.mxu0 0
  %319 = vmatprep.subr.bf16.mxu0 0
  %320 = vmatpush2.bf16.msra.mxu0 0
  %321 = vmatprep.mubr.bf16.mxu0 0
  %322 = vmatmul.mubr.bf16.gmra.mxu0 %v287
  %v323 = vpop.f32.mrf.mxu0
  %v324 = vadd.f32 0.0, %v323
  %v325 = vpop.f32.mrf.mxu0
  %v326 = vpop.f32.mrf.mxu0
  %v327 = vpop.f32.mrf.mxu0
  %328 = vdwg.mxu0
  %v329 = vadd.f32 %v278, %v324
  %v330 = vxor.u32 %v277, 2147483648
  %v331 = vmul.f32 %v330, 1.442695
  %v332 = vpow.pop %v331
  %v333 = vadd.f32 %v332, 1.0
  %v334 = vrcp.pop %v333
  %v335 = vmul.f32 1.0, %v334
  %v336 = vtanh.pop %v277
  %338 = vrot.lane.b32.xlu0 %v222, 16
  %v339 = vpop.permute.xlu0 %338
  %v341 = vmul.f32 %v335, %v339
  %343 = vrot.lane.b32.xlu0 %v336, 96
  %v344 = vpop.permute.xlu0 %343
  %v346 = vmul.f32 %v335, %v344
  %348 = vrot.lane.b32.xlu0 %v346, 16
  %v349 = vpop.permute.xlu0 %348
  %v351 = vadd.f32 %v341, %v349
  %v352 = vtanh.pop %v351
  %354 = vrot.lane.b32.xlu0 %v352, 32
  %v355 = vpop.permute.xlu0 %354
  %v357 = vmul.f32 %v335, %v355
  %v358 = vxor.u32 %v329, 2147483648
  %v359 = vmul.f32 %v358, 1.442695
  %v360 = vpow.pop %v359
  %v361 = vadd.f32 %v360, 1.0
  %v362 = vrcp.pop %v361
  %v363 = vmul.f32 1.0, %v362
  %v364 = vtanh.pop %v329
  %366 = vrot.lane.b32.xlu0 %v224, 16
  %v367 = vpop.permute.xlu0 %366
  %v369 = vmul.f32 %v363, %v367
  %371 = vrot.lane.b32.xlu0 %v364, 96
  %v372 = vpop.permute.xlu0 %371
  %v374 = vmul.f32 %v363, %v372
  %376 = vrot.lane.b32.xlu0 %v374, 16
  %v377 = vpop.permute.xlu0 %376
  %v379 = vadd.f32 %v369, %v377
  %v380 = vtanh.pop %v379
  %382 = vrot.lane.b32.xlu0 %v380, 32
  %v383 = vpop.permute.xlu0 %382
  %v385 = vmul.f32 %v363, %v383
  %387 = vrot.lane.b32.xlu0 %v357, 80
  %v388 = vpop.permute.xlu0 %387
  %vm390 = vcmask 123904
  %391 = vst.msk [vmem:[#allocation4] sm:$0x3] %vm390, %v388
  %393 = vrot.lane.b32.xlu0 %v385, 80
  %v394 = vpop.permute.xlu0 %393
  %s396 = scalar_lea.vmem [#allocation5], 14
  %397 = vst.msk [vmem:[%s396] sm:$0x3] %vm390, %v394
  %v398 = vld [vmem:[#allocation2 + $0x2] sm:$0x3]
  %v399 = vpack.c.bf16 %v357, %v357
  %401 = vrot.lane.b32.xlu0 %v399, 80
  %v402 = vpop.permute.xlu0 %401
  %v404 = vsel %vm233, %v402, 0
  %406 = vmatprep.subr.bf16.mxu0 0
  %407 = vmatpush1.bf16.msra.mxu0 0
  %408 = vmatprep.subr.bf16.mxu0 0
  %409 = vmatpush1.bf16.msra.mxu0 0
  %410 = vmatprep.subr.bf16.mxu0 0
  %411 = vmatpush1.bf16.msra.mxu0 0
  %412 = vmatprep.subr.bf16.mxu0 0
  %413 = vmatpush1.bf16.msra.mxu0 0
  %414 = vmatprep.subr.bf16.mxu0 0
  %415 = vmatpush1.bf16.msra.mxu0 0
  %416 = vmatprep.subr.bf16.mxu0 0
  %417 = vmatpush1.bf16.msra.mxu0 0
  %418 = vmatprep.subr.bf16.mxu0 0
  %419 = vmatpush1.bf16.msra.mxu0 0
  %420 = vmatprep.subr.bf16.mxu0 0
  %421 = vmatpush1.bf16.msra.mxu0 %v231
  %422 = vmatprep.subr.bf16.mxu0 0
  %423 = vmatpush2.bf16.msra.mxu0 0
  %424 = vmatprep.subr.bf16.mxu0 0
  %425 = vmatpush2.bf16.msra.mxu0 0
  %426 = vmatprep.subr.bf16.mxu0 0
  %427 = vmatpush2.bf16.msra.mxu0 0
  %428 = vmatprep.subr.bf16.mxu0 0
  %429 = vmatpush2.bf16.msra.mxu0 0
  %430 = vmatprep.subr.bf16.mxu0 0
  %431 = vmatpush2.bf16.msra.mxu0 0
  %432 = vmatprep.subr.bf16.mxu0 0
  %433 = vmatpush2.bf16.msra.mxu0 0
  %434 = vmatprep.subr.bf16.mxu0 0
  %435 = vmatpush2.bf16.msra.mxu0 0
  %436 = vmatprep.subr.bf16.mxu0 0
  %437 = vmatpush2.bf16.msra.mxu0 0
  %438 = vmatprep.mubr.bf16.mxu0 0
  %439 = vmatmul.mubr.bf16.gmra.mxu0 %v404
  %v440 = vpop.f32.mrf.mxu0
  %v441 = vadd.f32 0.0, %v440
  %v442 = vpop.f32.mrf.mxu0
  %v443 = vpop.f32.mrf.mxu0
  %v444 = vpop.f32.mrf.mxu0
  %445 = vdwg.mxu0
  %v446 = vadd.f32 %v398, %v441
  %v447 = vld [vmem:[#allocation3 + $0xc] sm:$0x3]
  %v448 = vpack.c.bf16 %v385, %v385
  %450 = vrot.lane.b32.xlu0 %v448, 80
  %v451 = vpop.permute.xlu0 %450
  %v453 = vsel %vm233, %v451, 0
  %455 = vmatprep.subr.bf16.mxu0 0
  %456 = vmatpush1.bf16.msra.mxu0 0
  %457 = vmatprep.subr.bf16.mxu0 0
  %458 = vmatpush1.bf16.msra.mxu0 0
  %459 = vmatprep.subr.bf16.mxu0 0
  %460 = vmatpush1.bf16.msra.mxu0 0
  %461 = vmatprep.subr.bf16.mxu0 0
  %462 = vmatpush1.bf16.msra.mxu0 0
  %463 = vmatprep.subr.bf16.mxu0 0
  %464 = vmatpush1.bf16.msra.mxu0 0
  %465 = vmatprep.subr.bf16.mxu0 0
  %466 = vmatpush1.bf16.msra.mxu0 0
  %467 = vmatprep.subr.bf16.mxu0 0
  %468 = vmatpush1.bf16.msra.mxu0 0
  %469 = vmatprep.subr.bf16.mxu0 0
  %470 = vmatpush1.bf16.msra.mxu0 %v284
  %471 = vmatprep.subr.bf16.mxu0 0
  %472 = vmatpush2.bf16.msra.mxu0 0
  %473 = vmatprep.subr.bf16.mxu0 0
  %474 = vmatpush2.bf16.msra.mxu0 0
  %475 = vmatprep.subr.bf16.mxu0 0
  %476 = vmatpush2.bf16.msra.mxu0 0
  %477 = vmatprep.subr.bf16.mxu0 0
  %478 = vmatpush2.bf16.msra.mxu0 0
  %479 = vmatprep.subr.bf16.mxu0 0
  %480 = vmatpush2.bf16.msra.mxu0 0
  %481 = vmatprep.subr.bf16.mxu0 0
  %482 = vmatpush2.bf16.msra.mxu0 0
  %483 = vmatprep.subr.bf16.mxu0 0
  %484 = vmatpush2.bf16.msra.mxu0 0
  %485 = vmatprep.subr.bf16.mxu0 0
  %486 = vmatpush2.bf16.msra.mxu0 0
  %487 = vmatprep.mubr.bf16.mxu0 0
  %488 = vmatmul.mubr.bf16.gmra.mxu0 %v453
  %v489 = vpop.f32.mrf.mxu0
  %v490 = vadd.f32 0.0, %v489
  %v491 = vpop.f32.mrf.mxu0
  %v492 = vpop.f32.mrf.mxu0
  %v493 = vpop.f32.mrf.mxu0
  %494 = vdwg.mxu0
  %v495 = vadd.f32 %v447, %v490
  %v496 = vxor.u32 %v446, 2147483648
  %v497 = vmul.f32 %v496, 1.442695
  %v498 = vpow.pop %v497
  %v499 = vadd.f32 %v498, 1.0
  %v500 = vrcp.pop %v499
  %v501 = vmul.f32 1.0, %v500
  %v502 = vtanh.pop %v446
  %v503 = vmul.f32 %v501, %v351
  %505 = vrot.lane.b32.xlu0 %v502, 96
  %v506 = vpop.permute.xlu0 %505
  %v508 = vmul.f32 %v501, %v506
  %510 = vrot.lane.b32.xlu0 %v508, 16
  %v511 = vpop.permute.xlu0 %510
  %v513 = vadd.f32 %v503, %v511
  %v514 = vtanh.pop %v513
  %516 = vrot.lane.b32.xlu0 %v514, 32
  %v517 = vpop.permute.xlu0 %516
  %v519 = vmul.f32 %v501, %v517
  %v520 = vxor.u32 %v495, 2147483648
  %v521 = vmul.f32 %v520, 1.442695
  %v522 = vpow.pop %v521
  %v523 = vadd.f32 %v522, 1.0
  %v524 = vrcp.pop %v523
  %v525 = vmul.f32 1.0, %v524
  %v526 = vtanh.pop %v495
  %v527 = vmul.f32 %v525, %v379
  %529 = vrot.lane.b32.xlu0 %v526, 96
  %v530 = vpop.permute.xlu0 %529
  %v532 = vmul.f32 %v525, %v530
  %534 = vrot.lane.b32.xlu0 %v532, 16
  %v535 = vpop.permute.xlu0 %534
  %v537 = vadd.f32 %v527, %v535
  %v538 = vtanh.pop %v537
  %540 = vrot.lane.b32.xlu0 %v538, 32
  %v541 = vpop.permute.xlu0 %540
  %v543 = vmul.f32 %v525, %v541
  %545 = vrot.lane.b32.xlu0 %v519, 80
  %v546 = vpop.permute.xlu0 %545
  %s548 = scalar_lea.vmem [#allocation4], 2
  %549 = vst.msk [vmem:[%s548] sm:$0x3] %vm390, %v546
  %551 = vrot.lane.b32.xlu0 %v543, 80
  %v552 = vpop.permute.xlu0 %551
  %s554 = scalar_lea.vmem [#allocation5], 12
  %555 = vst.msk [vmem:[%s554] sm:$0x3] %vm390, %v552
  %v556 = vld [vmem:[#allocation2 + $0x4] sm:$0x3]
  %v557 = vpack.c.bf16 %v519, %v519
  %559 = vrot.lane.b32.xlu0 %v557, 80
  %v560 = vpop.permute.xlu0 %559
  %v562 = vsel %vm233, %v560, 0
  %564 = vmatprep.subr.bf16.mxu0 0
  %565 = vmatpush1.bf16.msra.mxu0 0
  %566 = vmatprep.subr.bf16.mxu0 0
  %567 = vmatpush1.bf16.msra.mxu0 0
  %568 = vmatprep.subr.bf16.mxu0 0
  %569 = vmatpush1.bf16.msra.mxu0 0
  %570 = vmatprep.subr.bf16.mxu0 0
  %571 = vmatpush1.bf16.msra.mxu0 0
  %572 = vmatprep.subr.bf16.mxu0 0
  %573 = vmatpush1.bf16.msra.mxu0 0
  %574 = vmatprep.subr.bf16.mxu0 0
  %575 = vmatpush1.bf16.msra.mxu0 0
  %576 = vmatprep.subr.bf16.mxu0 0
  %577 = vmatpush1.bf16.msra.mxu0 0
  %578 = vmatprep.subr.bf16.mxu0 0
  %579 = vmatpush1.bf16.msra.mxu0 %v231
  %580 = vmatprep.subr.bf16.mxu0 0
  %581 = vmatpush2.bf16.msra.mxu0 0
  %582 = vmatprep.subr.bf16.mxu0 0
  %583 = vmatpush2.bf16.msra.mxu0 0
  %584 = vmatprep.subr.bf16.mxu0 0
  %585 = vmatpush2.bf16.msra.mxu0 0
  %586 = vmatprep.subr.bf16.mxu0 0
  %587 = vmatpush2.bf16.msra.mxu0 0
  %588 = vmatprep.subr.bf16.mxu0 0
  %589 = vmatpush2.bf16.msra.mxu0 0
  %590 = vmatprep.subr.bf16.mxu0 0
  %591 = vmatpush2.bf16.msra.mxu0 0
  %592 = vmatprep.subr.bf16.mxu0 0
  %593 = vmatpush2.bf16.msra.mxu0 0
  %594 = vmatprep.subr.bf16.mxu0 0
  %595 = vmatpush2.bf16.msra.mxu0 0
  %596 = vmatprep.mubr.bf16.mxu0 0
  %597 = vmatmul.mubr.bf16.gmra.mxu0 %v562
  %v598 = vpop.f32.mrf.mxu0
  %v599 = vadd.f32 0.0, %v598
  %v600 = vpop.f32.mrf.mxu0
  %v601 = vpop.f32.mrf.mxu0
  %v602 = vpop.f32.mrf.mxu0
  %603 = vdwg.mxu0
  %v604 = vadd.f32 %v556, %v599
  %v605 = vld [vmem:[#allocation3 + $0xa] sm:$0x3]
  %v606 = vpack.c.bf16 %v543, %v543
  %608 = vrot.lane.b32.xlu0 %v606, 80
  %v609 = vpop.permute.xlu0 %608
  %v611 = vsel %vm233, %v609, 0
  %613 = vmatprep.subr.bf16.mxu0 0
  %614 = vmatpush1.bf16.msra.mxu0 0
  %615 = vmatprep.subr.bf16.mxu0 0
  %616 = vmatpush1.bf16.msra.mxu0 0
  %617 = vmatprep.subr.bf16.mxu0 0
  %618 = vmatpush1.bf16.msra.mxu0 0
  %619 = vmatprep.subr.bf16.mxu0 0
  %620 = vmatpush1.bf16.msra.mxu0 0
  %621 = vmatprep.subr.bf16.mxu0 0
  %622 = vmatpush1.bf16.msra.mxu0 0
  %623 = vmatprep.subr.bf16.mxu0 0
  %624 = vmatpush1.bf16.msra.mxu0 0
  %625 = vmatprep.subr.bf16.mxu0 0
  %626 = vmatpush1.bf16.msra.mxu0 0
  %627 = vmatprep.subr.bf16.mxu0 0
  %628 = vmatpush1.bf16.msra.mxu0 %v284
  %629 = vmatprep.subr.bf16.mxu0 0
  %630 = vmatpush2.bf16.msra.mxu0 0
  %631 = vmatprep.subr.bf16.mxu0 0
  %632 = vmatpush2.bf16.msra.mxu0 0
  %633 = vmatprep.subr.bf16.mxu0 0
  %634 = vmatpush2.bf16.msra.mxu0 0
  %635 = vmatprep.subr.bf16.mxu0 0
  %636 = vmatpush2.bf16.msra.mxu0 0
  %637 = vmatprep.subr.bf16.mxu0 0
  %638 = vmatpush2.bf16.msra.mxu0 0
  %639 = vmatprep.subr.bf16.mxu0 0
  %640 = vmatpush2.bf16.msra.mxu0 0
  %641 = vmatprep.subr.bf16.mxu0 0
  %642 = vmatpush2.bf16.msra.mxu0 0
  %643 = vmatprep.subr.bf16.mxu0 0
  %644 = vmatpush2.bf16.msra.mxu0 0
  %645 = vmatprep.mubr.bf16.mxu0 0
  %646 = vmatmul.mubr.bf16.gmra.mxu0 %v611
  %v647 = vpop.f32.mrf.mxu0
  %v648 = vadd.f32 0.0, %v647
  %v649 = vpop.f32.mrf.mxu0
  %v650 = vpop.f32.mrf.mxu0
  %v651 = vpop.f32.mrf.mxu0
  %652 = vdwg.mxu0
  %v653 = vadd.f32 %v605, %v648
  %v654 = vxor.u32 %v604, 2147483648
  %v655 = vmul.f32 %v654, 1.442695
  %v656 = vpow.pop %v655
  %v657 = vadd.f32 %v656, 1.0
  %v658 = vrcp.pop %v657
  %v659 = vmul.f32 1.0, %v658
  %v660 = vtanh.pop %v604
  %v661 = vmul.f32 %v659, %v513
  %663 = vrot.lane.b32.xlu0 %v660, 96
  %v664 = vpop.permute.xlu0 %663
  %v666 = vmul.f32 %v659, %v664
  %668 = vrot.lane.b32.xlu0 %v666, 16
  %v669 = vpop.permute.xlu0 %668
  %v671 = vadd.f32 %v661, %v669
  %v672 = vtanh.pop %v671
  %674 = vrot.lane.b32.xlu0 %v672, 32
  %v675 = vpop.permute.xlu0 %674
  %v677 = vmul.f32 %v659, %v675
  %v678 = vxor.u32 %v653, 2147483648
  %v679 = vmul.f32 %v678, 1.442695
  %v680 = vpow.pop %v679
  %v681 = vadd.f32 %v680, 1.0
  %v682 = vrcp.pop %v681
  %v683 = vmul.f32 1.0, %v682
  %v684 = vtanh.pop %v653
  %v685 = vmul.f32 %v683, %v537
  %687 = vrot.lane.b32.xlu0 %v684, 96
  %v688 = vpop.permute.xlu0 %687
  %v690 = vmul.f32 %v683, %v688
  %692 = vrot.lane.b32.xlu0 %v690, 16
  %v693 = vpop.permute.xlu0 %692
  %v695 = vadd.f32 %v685, %v693
  %v696 = vtanh.pop %v695
  %698 = vrot.lane.b32.xlu0 %v696, 32
  %v699 = vpop.permute.xlu0 %698
  %v701 = vmul.f32 %v683, %v699
  %703 = vrot.lane.b32.xlu0 %v677, 80
  %v704 = vpop.permute.xlu0 %703
  %s706 = scalar_lea.vmem [#allocation4], 4
  %707 = vst.msk [vmem:[%s706] sm:$0x3] %vm390, %v704
  %709 = vrot.lane.b32.xlu0 %v701, 80
  %v710 = vpop.permute.xlu0 %709
  %s712 = scalar_lea.vmem [#allocation5], 10
  %713 = vst.msk [vmem:[%s712] sm:$0x3] %vm390, %v710
  %v714 = vld [vmem:[#allocation2 + $0x6] sm:$0x3]
  %v715 = vpack.c.bf16 %v677, %v677
  %717 = vrot.lane.b32.xlu0 %v715, 80
  %v718 = vpop.permute.xlu0 %717
  %v720 = vsel %vm233, %v718, 0
  %722 = vmatprep.subr.bf16.mxu0 0
  %723 = vmatpush1.bf16.msra.mxu0 0
  %724 = vmatprep.subr.bf16.mxu0 0
  %725 = vmatpush1.bf16.msra.mxu0 0
  %726 = vmatprep.subr.bf16.mxu0 0
  %727 = vmatpush1.bf16.msra.mxu0 0
  %728 = vmatprep.subr.bf16.mxu0 0
  %729 = vmatpush1.bf16.msra.mxu0 0
  %730 = vmatprep.subr.bf16.mxu0 0
  %731 = vmatpush1.bf16.msra.mxu0 0
  %732 = vmatprep.subr.bf16.mxu0 0
  %733 = vmatpush1.bf16.msra.mxu0 0
  %734 = vmatprep.subr.bf16.mxu0 0
  %735 = vmatpush1.bf16.msra.mxu0 0
  %736 = vmatprep.subr.bf16.mxu0 0
  %737 = vmatpush1.bf16.msra.mxu0 %v231
  %738 = vmatprep.subr.bf16.mxu0 0
  %739 = vmatpush2.bf16.msra.mxu0 0
  %740 = vmatprep.subr.bf16.mxu0 0
  %741 = vmatpush2.bf16.msra.mxu0 0
  %742 = vmatprep.subr.bf16.mxu0 0
  %743 = vmatpush2.bf16.msra.mxu0 0
  %744 = vmatprep.subr.bf16.mxu0 0
  %745 = vmatpush2.bf16.msra.mxu0 0
  %746 = vmatprep.subr.bf16.mxu0 0
  %747 = vmatpush2.bf16.msra.mxu0 0
  %748 = vmatprep.subr.bf16.mxu0 0
  %749 = vmatpush2.bf16.msra.mxu0 0
  %750 = vmatprep.subr.bf16.mxu0 0
  %751 = vmatpush2.bf16.msra.mxu0 0
  %752 = vmatprep.subr.bf16.mxu0 0
  %753 = vmatpush2.bf16.msra.mxu0 0
  %754 = vmatprep.mubr.bf16.mxu0 0
  %755 = vmatmul.mubr.bf16.gmra.mxu0 %v720
  %v756 = vpop.f32.mrf.mxu0
  %v757 = vadd.f32 0.0, %v756
  %v758 = vpop.f32.mrf.mxu0
  %v759 = vpop.f32.mrf.mxu0
  %v760 = vpop.f32.mrf.mxu0
  %761 = vdwg.mxu0
  %v762 = vadd.f32 %v714, %v757
  %v763 = vld [vmem:[#allocation3 + $0x8] sm:$0x3]
  %v764 = vpack.c.bf16 %v701, %v701
  %766 = vrot.lane.b32.xlu0 %v764, 80
  %v767 = vpop.permute.xlu0 %766
  %v769 = vsel %vm233, %v767, 0
  %771 = vmatprep.subr.bf16.mxu0 0
  %772 = vmatpush1.bf16.msra.mxu0 0
  %773 = vmatprep.subr.bf16.mxu0 0
  %774 = vmatpush1.bf16.msra.mxu0 0
  %775 = vmatprep.subr.bf16.mxu0 0
  %776 = vmatpush1.bf16.msra.mxu0 0
  %777 = vmatprep.subr.bf16.mxu0 0
  %778 = vmatpush1.bf16.msra.mxu0 0
  %779 = vmatprep.subr.bf16.mxu0 0
  %780 = vmatpush1.bf16.msra.mxu0 0
  %781 = vmatprep.subr.bf16.mxu0 0
  %782 = vmatpush1.bf16.msra.mxu0 0
  %783 = vmatprep.subr.bf16.mxu0 0
  %784 = vmatpush1.bf16.msra.mxu0 0
  %785 = vmatprep.subr.bf16.mxu0 0
  %786 = vmatpush1.bf16.msra.mxu0 %v284
  %787 = vmatprep.subr.bf16.mxu0 0
  %788 = vmatpush2.bf16.msra.mxu0 0
  %789 = vmatprep.subr.bf16.mxu0 0
  %790 = vmatpush2.bf16.msra.mxu0 0
  %791 = vmatprep.subr.bf16.mxu0 0
  %792 = vmatpush2.bf16.msra.mxu0 0
  %793 = vmatprep.subr.bf16.mxu0 0
  %794 = vmatpush2.bf16.msra.mxu0 0
  %795 = vmatprep.subr.bf16.mxu0 0
  %796 = vmatpush2.bf16.msra.mxu0 0
  %797 = vmatprep.subr.bf16.mxu0 0
  %798 = vmatpush2.bf16.msra.mxu0 0
  %799 = vmatprep.subr.bf16.mxu0 0
  %800 = vmatpush2.bf16.msra.mxu0 0
  %801 = vmatprep.subr.bf16.mxu0 0
  %802 = vmatpush2.bf16.msra.mxu0 0
  %803 = vmatprep.mubr.bf16.mxu0 0
  %804 = vmatmul.mubr.bf16.gmra.mxu0 %v769
  %v805 = vpop.f32.mrf.mxu0
  %v806 = vadd.f32 0.0, %v805
  %v807 = vpop.f32.mrf.mxu0
  %v808 = vpop.f32.mrf.mxu0
  %v809 = vpop.f32.mrf.mxu0
  %810 = vdwg.mxu0
  %v811 = vadd.f32 %v763, %v806
  %v812 = vxor.u32 %v762, 2147483648
  %v813 = vmul.f32 %v812, 1.442695
  %v814 = vpow.pop %v813
  %v815 = vadd.f32 %v814, 1.0
  %v816 = vrcp.pop %v815
  %v817 = vmul.f32 1.0, %v816
  %v818 = vtanh.pop %v762
  %v819 = vmul.f32 %v817, %v671
  %821 = vrot.lane.b32.xlu0 %v818, 96
  %v822 = vpop.permute.xlu0 %821
  %v824 = vmul.f32 %v817, %v822
  %826 = vrot.lane.b32.xlu0 %v824, 16
  %v827 = vpop.permute.xlu0 %826
  %v829 = vadd.f32 %v819, %v827
  %v830 = vtanh.pop %v829
  %832 = vrot.lane.b32.xlu0 %v830, 32
  %v833 = vpop.permute.xlu0 %832
  %v835 = vmul.f32 %v817, %v833
  %v836 = vxor.u32 %v811, 2147483648
  %v837 = vmul.f32 %v836, 1.442695
  %v838 = vpow.pop %v837
  %v839 = vadd.f32 %v838, 1.0
  %v840 = vrcp.pop %v839
  %v841 = vmul.f32 1.0, %v840
  %v842 = vtanh.pop %v811
  %v843 = vmul.f32 %v841, %v695
  %845 = vrot.lane.b32.xlu0 %v842, 96
  %v846 = vpop.permute.xlu0 %845
  %v848 = vmul.f32 %v841, %v846
  %850 = vrot.lane.b32.xlu0 %v848, 16
  %v851 = vpop.permute.xlu0 %850
  %v853 = vadd.f32 %v843, %v851
  %v854 = vtanh.pop %v853
  %856 = vrot.lane.b32.xlu0 %v854, 32
  %v857 = vpop.permute.xlu0 %856
  %v859 = vmul.f32 %v841, %v857
  %861 = vrot.lane.b32.xlu0 %v835, 80
  %v862 = vpop.permute.xlu0 %861
  %s864 = scalar_lea.vmem [#allocation4], 6
  %865 = vst.msk [vmem:[%s864] sm:$0x3] %vm390, %v862
  %867 = vrot.lane.b32.xlu0 %v859, 80
  %v868 = vpop.permute.xlu0 %867
  %s870 = scalar_lea.vmem [#allocation5], 8
  %871 = vst.msk [vmem:[%s870] sm:$0x3] %vm390, %v868
  %v872 = vld [vmem:[#allocation2 + $0x8] sm:$0x3]
  %v873 = vpack.c.bf16 %v835, %v835
  %875 = vrot.lane.b32.xlu0 %v873, 80
  %v876 = vpop.permute.xlu0 %875
  %v878 = vsel %vm233, %v876, 0
  %880 = vmatprep.subr.bf16.mxu0 0
  %881 = vmatpush1.bf16.msra.mxu0 0
  %882 = vmatprep.subr.bf16.mxu0 0
  %883 = vmatpush1.bf16.msra.mxu0 0
  %884 = vmatprep.subr.bf16.mxu0 0
  %885 = vmatpush1.bf16.msra.mxu0 0
  %886 = vmatprep.subr.bf16.mxu0 0
  %887 = vmatpush1.bf16.msra.mxu0 0
  %888 = vmatprep.subr.bf16.mxu0 0
  %889 = vmatpush1.bf16.msra.mxu0 0
  %890 = vmatprep.subr.bf16.mxu0 0
  %891 = vmatpush1.bf16.msra.mxu0 0
  %892 = vmatprep.subr.bf16.mxu0 0
  %893 = vmatpush1.bf16.msra.mxu0 0
  %894 = vmatprep.subr.bf16.mxu0 0
  %895 = vmatpush1.bf16.msra.mxu0 %v231
  %896 = vmatprep.subr.bf16.mxu0 0
  %897 = vmatpush2.bf16.msra.mxu0 0
  %898 = vmatprep.subr.bf16.mxu0 0
  %899 = vmatpush2.bf16.msra.mxu0 0
  %900 = vmatprep.subr.bf16.mxu0 0
  %901 = vmatpush2.bf16.msra.mxu0 0
  %902 = vmatprep.subr.bf16.mxu0 0
  %903 = vmatpush2.bf16.msra.mxu0 0
  %904 = vmatprep.subr.bf16.mxu0 0
  %905 = vmatpush2.bf16.msra.mxu0 0
  %906 = vmatprep.subr.bf16.mxu0 0
  %907 = vmatpush2.bf16.msra.mxu0 0
  %908 = vmatprep.subr.bf16.mxu0 0
  %909 = vmatpush2.bf16.msra.mxu0 0
  %910 = vmatprep.subr.bf16.mxu0 0
  %911 = vmatpush2.bf16.msra.mxu0 0
  %912 = vmatprep.mubr.bf16.mxu0 0
  %913 = vmatmul.mubr.bf16.gmra.mxu0 %v878
  %v914 = vpop.f32.mrf.mxu0
  %v915 = vadd.f32 0.0, %v914
  %v916 = vpop.f32.mrf.mxu0
  %v917 = vpop.f32.mrf.mxu0
  %v918 = vpop.f32.mrf.mxu0
  %919 = vdwg.mxu0
  %v920 = vadd.f32 %v872, %v915
  %v921 = vld [vmem:[#allocation3 + $0x6] sm:$0x3]
  %v922 = vpack.c.bf16 %v859, %v859
  %924 = vrot.lane.b32.xlu0 %v922, 80
  %v925 = vpop.permute.xlu0 %924
  %v927 = vsel %vm233, %v925, 0
  %929 = vmatprep.subr.bf16.mxu0 0
  %930 = vmatpush1.bf16.msra.mxu0 0
  %931 = vmatprep.subr.bf16.mxu0 0
  %932 = vmatpush1.bf16.msra.mxu0 0
  %933 = vmatprep.subr.bf16.mxu0 0
  %934 = vmatpush1.bf16.msra.mxu0 0
  %935 = vmatprep.subr.bf16.mxu0 0
  %936 = vmatpush1.bf16.msra.mxu0 0
  %937 = vmatprep.subr.bf16.mxu0 0
  %938 = vmatpush1.bf16.msra.mxu0 0
  %939 = vmatprep.subr.bf16.mxu0 0
  %940 = vmatpush1.bf16.msra.mxu0 0
  %941 = vmatprep.subr.bf16.mxu0 0
  %942 = vmatpush1.bf16.msra.mxu0 0
  %943 = vmatprep.subr.bf16.mxu0 0
  %944 = vmatpush1.bf16.msra.mxu0 %v284
  %945 = vmatprep.subr.bf16.mxu0 0
  %946 = vmatpush2.bf16.msra.mxu0 0
  %947 = vmatprep.subr.bf16.mxu0 0
  %948 = vmatpush2.bf16.msra.mxu0 0
  %949 = vmatprep.subr.bf16.mxu0 0
  %950 = vmatpush2.bf16.msra.mxu0 0
  %951 = vmatprep.subr.bf16.mxu0 0
  %952 = vmatpush2.bf16.msra.mxu0 0
  %953 = vmatprep.subr.bf16.mxu0 0
  %954 = vmatpush2.bf16.msra.mxu0 0
  %955 = vmatprep.subr.bf16.mxu0 0
  %956 = vmatpush2.bf16.msra.mxu0 0
  %957 = vmatprep.subr.bf16.mxu0 0
  %958 = vmatpush2.bf16.msra.mxu0 0
  %959 = vmatprep.subr.bf16.mxu0 0
  %960 = vmatpush2.bf16.msra.mxu0 0
  %961 = vmatprep.mubr.bf16.mxu0 0
  %962 = vmatmul.mubr.bf16.gmra.mxu0 %v927
  %v963 = vpop.f32.mrf.mxu0
  %v964 = vadd.f32 0.0, %v963
  %v965 = vpop.f32.mrf.mxu0
  %v966 = vpop.f32.mrf.mxu0
  %v967 = vpop.f32.mrf.mxu0
  %968 = vdwg.mxu0
  %v969 = vadd.f32 %v921, %v964
  %v970 = vxor.u32 %v920, 2147483648
  %v971 = vmul.f32 %v970, 1.442695
  %v972 = vpow.pop %v971
  %v973 = vadd.f32 %v972, 1.0
  %v974 = vrcp.pop %v973
  %v975 = vmul.f32 1.0, %v974
  %v976 = vtanh.pop %v920
  %v977 = vmul.f32 %v975, %v829
  %979 = vrot.lane.b32.xlu0 %v976, 96
  %v980 = vpop.permute.xlu0 %979
  %v982 = vmul.f32 %v975, %v980
  %984 = vrot.lane.b32.xlu0 %v982, 16
  %v985 = vpop.permute.xlu0 %984
  %v987 = vadd.f32 %v977, %v985
  %v988 = vtanh.pop %v987
  %990 = vrot.lane.b32.xlu0 %v988, 32
  %v991 = vpop.permute.xlu0 %990
  %v993 = vmul.f32 %v975, %v991
  %v994 = vxor.u32 %v969, 2147483648
  %v995 = vmul.f32 %v994, 1.442695
  %v996 = vpow.pop %v995
  %v997 = vadd.f32 %v996, 1.0
  %v998 = vrcp.pop %v997
  %v999 = vmul.f32 1.0, %v998
  %v1000 = vtanh.pop %v969
  %v1001 = vmul.f32 %v999, %v853
  %1003 = vrot.lane.b32.xlu0 %v1000, 96
  %v1004 = vpop.permute.xlu0 %1003
  %v1006 = vmul.f32 %v999, %v1004
  %1008 = vrot.lane.b32.xlu0 %v1006, 16
  %v1009 = vpop.permute.xlu0 %1008
  %v1011 = vadd.f32 %v1001, %v1009
  %v1012 = vtanh.pop %v1011
  %1014 = vrot.lane.b32.xlu0 %v1012, 32
  %v1015 = vpop.permute.xlu0 %1014
  %v1017 = vmul.f32 %v999, %v1015
  %1019 = vrot.lane.b32.xlu0 %v993, 80
  %v1020 = vpop.permute.xlu0 %1019
  %s1022 = scalar_lea.vmem [#allocation4], 8
  %1023 = vst.msk [vmem:[%s1022] sm:$0x3] %vm390, %v1020
  %1025 = vrot.lane.b32.xlu0 %v1017, 80
  %v1026 = vpop.permute.xlu0 %1025
  %s1028 = scalar_lea.vmem [#allocation5], 6
  %1029 = vst.msk [vmem:[%s1028] sm:$0x3] %vm390, %v1026
  %v1030 = vld [vmem:[#allocation2 + $0xa] sm:$0x3]
  %v1031 = vpack.c.bf16 %v993, %v993
  %1033 = vrot.lane.b32.xlu0 %v1031, 80
  %v1034 = vpop.permute.xlu0 %1033
  %v1036 = vsel %vm233, %v1034, 0
  %1038 = vmatprep.subr.bf16.mxu0 0
  %1039 = vmatpush1.bf16.msra.mxu0 0
  %1040 = vmatprep.subr.bf16.mxu0 0
  %1041 = vmatpush1.bf16.msra.mxu0 0
  %1042 = vmatprep.subr.bf16.mxu0 0
  %1043 = vmatpush1.bf16.msra.mxu0 0
  %1044 = vmatprep.subr.bf16.mxu0 0
  %1045 = vmatpush1.bf16.msra.mxu0 0
  %1046 = vmatprep.subr.bf16.mxu0 0
  %1047 = vmatpush1.bf16.msra.mxu0 0
  %1048 = vmatprep.subr.bf16.mxu0 0
  %1049 = vmatpush1.bf16.msra.mxu0 0
  %1050 = vmatprep.subr.bf16.mxu0 0
  %1051 = vmatpush1.bf16.msra.mxu0 0
  %1052 = vmatprep.subr.bf16.mxu0 0
  %1053 = vmatpush1.bf16.msra.mxu0 %v231
  %1054 = vmatprep.subr.bf16.mxu0 0
  %1055 = vmatpush2.bf16.msra.mxu0 0
  %1056 = vmatprep.subr.bf16.mxu0 0
  %1057 = vmatpush2.bf16.msra.mxu0 0
  %1058 = vmatprep.subr.bf16.mxu0 0
  %1059 = vmatpush2.bf16.msra.mxu0 0
  %1060 = vmatprep.subr.bf16.mxu0 0
  %1061 = vmatpush2.bf16.msra.mxu0 0
  %1062 = vmatprep.subr.bf16.mxu0 0
  %1063 = vmatpush2.bf16.msra.mxu0 0
  %1064 = vmatprep.subr.bf16.mxu0 0
  %1065 = vmatpush2.bf16.msra.mxu0 0
  %1066 = vmatprep.subr.bf16.mxu0 0
  %1067 = vmatpush2.bf16.msra.mxu0 0
  %1068 = vmatprep.subr.bf16.mxu0 0
  %1069 = vmatpush2.bf16.msra.mxu0 0
  %1070 = vmatprep.mubr.bf16.mxu0 0
  %1071 = vmatmul.mubr.bf16.gmra.mxu0 %v1036
  %v1072 = vpop.f32.mrf.mxu0
  %v1073 = vadd.f32 0.0, %v1072
  %v1074 = vpop.f32.mrf.mxu0
  %v1075 = vpop.f32.mrf.mxu0
  %v1076 = vpop.f32.mrf.mxu0
  %1077 = vdwg.mxu0
  %v1078 = vadd.f32 %v1030, %v1073
  %v1079 = vld [vmem:[#allocation3 + $0x4] sm:$0x3]
  %v1080 = vpack.c.bf16 %v1017, %v1017
  %1082 = vrot.lane.b32.xlu0 %v1080, 80
  %v1083 = vpop.permute.xlu0 %1082
  %v1085 = vsel %vm233, %v1083, 0
  %1087 = vmatprep.subr.bf16.mxu0 0
  %1088 = vmatpush1.bf16.msra.mxu0 0
  %1089 = vmatprep.subr.bf16.mxu0 0
  %1090 = vmatpush1.bf16.msra.mxu0 0
  %1091 = vmatprep.subr.bf16.mxu0 0
  %1092 = vmatpush1.bf16.msra.mxu0 0
  %1093 = vmatprep.subr.bf16.mxu0 0
  %1094 = vmatpush1.bf16.msra.mxu0 0
  %1095 = vmatprep.subr.bf16.mxu0 0
  %1096 = vmatpush1.bf16.msra.mxu0 0
  %1097 = vmatprep.subr.bf16.mxu0 0
  %1098 = vmatpush1.bf16.msra.mxu0 0
  %1099 = vmatprep.subr.bf16.mxu0 0
  %1100 = vmatpush1.bf16.msra.mxu0 0
  %1101 = vmatprep.subr.bf16.mxu0 0
  %1102 = vmatpush1.bf16.msra.mxu0 %v284
  %1103 = vmatprep.subr.bf16.mxu0 0
  %1104 = vmatpush2.bf16.msra.mxu0 0
  %1105 = vmatprep.subr.bf16.mxu0 0
  %1106 = vmatpush2.bf16.msra.mxu0 0
  %1107 = vmatprep.subr.bf16.mxu0 0
  %1108 = vmatpush2.bf16.msra.mxu0 0
  %1109 = vmatprep.subr.bf16.mxu0 0
  %1110 = vmatpush2.bf16.msra.mxu0 0
  %1111 = vmatprep.subr.bf16.mxu0 0
  %1112 = vmatpush2.bf16.msra.mxu0 0
  %1113 = vmatprep.subr.bf16.mxu0 0
  %1114 = vmatpush2.bf16.msra.mxu0 0
  %1115 = vmatprep.subr.bf16.mxu0 0
  %1116 = vmatpush2.bf16.msra.mxu0 0
  %1117 = vmatprep.subr.bf16.mxu0 0
  %1118 = vmatpush2.bf16.msra.mxu0 0
  %1119 = vmatprep.mubr.bf16.mxu0 0
  %1120 = vmatmul.mubr.bf16.gmra.mxu0 %v1085
  %v1121 = vpop.f32.mrf.mxu0
  %v1122 = vadd.f32 0.0, %v1121
  %v1123 = vpop.f32.mrf.mxu0
  %v1124 = vpop.f32.mrf.mxu0
  %v1125 = vpop.f32.mrf.mxu0
  %1126 = vdwg.mxu0
  %v1127 = vadd.f32 %v1079, %v1122
  %v1128 = vxor.u32 %v1078, 2147483648
  %v1129 = vmul.f32 %v1128, 1.442695
  %v1130 = vpow.pop %v1129
  %v1131 = vadd.f32 %v1130, 1.0
  %v1132 = vrcp.pop %v1131
  %v1133 = vmul.f32 1.0, %v1132
  %v1134 = vtanh.pop %v1078
  %v1135 = vmul.f32 %v1133, %v987
  %1137 = vrot.lane.b32.xlu0 %v1134, 96
  %v1138 = vpop.permute.xlu0 %1137
  %v1140 = vmul.f32 %v1133, %v1138
  %1142 = vrot.lane.b32.xlu0 %v1140, 16
  %v1143 = vpop.permute.xlu0 %1142
  %v1145 = vadd.f32 %v1135, %v1143
  %v1146 = vtanh.pop %v1145
  %1148 = vrot.lane.b32.xlu0 %v1146, 32
  %v1149 = vpop.permute.xlu0 %1148
  %v1151 = vmul.f32 %v1133, %v1149
  %v1152 = vxor.u32 %v1127, 2147483648
  %v1153 = vmul.f32 %v1152, 1.442695
  %v1154 = vpow.pop %v1153
  %v1155 = vadd.f32 %v1154, 1.0
  %v1156 = vrcp.pop %v1155
  %v1157 = vmul.f32 1.0, %v1156
  %v1158 = vtanh.pop %v1127
  %v1159 = vmul.f32 %v1157, %v1011
  %1161 = vrot.lane.b32.xlu0 %v1158, 96
  %v1162 = vpop.permute.xlu0 %1161
  %v1164 = vmul.f32 %v1157, %v1162
  %1166 = vrot.lane.b32.xlu0 %v1164, 16
  %v1167 = vpop.permute.xlu0 %1166
  %v1169 = vadd.f32 %v1159, %v1167
  %v1170 = vtanh.pop %v1169
  %1172 = vrot.lane.b32.xlu0 %v1170, 32
  %v1173 = vpop.permute.xlu0 %1172
  %v1175 = vmul.f32 %v1157, %v1173
  %1177 = vrot.lane.b32.xlu0 %v1151, 80
  %v1178 = vpop.permute.xlu0 %1177
  %s1180 = scalar_lea.vmem [#allocation4], 10
  %1181 = vst.msk [vmem:[%s1180] sm:$0x3] %vm390, %v1178
  %1183 = vrot.lane.b32.xlu0 %v1175, 80
  %v1184 = vpop.permute.xlu0 %1183
  %s1186 = scalar_lea.vmem [#allocation5], 4
  %1187 = vst.msk [vmem:[%s1186] sm:$0x3] %vm390, %v1184
  %v1188 = vld [vmem:[#allocation2 + $0xc] sm:$0x3]
  %v1189 = vpack.c.bf16 %v1151, %v1151
  %1191 = vrot.lane.b32.xlu0 %v1189, 80
  %v1192 = vpop.permute.xlu0 %1191
  %v1194 = vsel %vm233, %v1192, 0
  %1196 = vmatprep.subr.bf16.mxu0 0
  %1197 = vmatpush1.bf16.msra.mxu0 0
  %1198 = vmatprep.subr.bf16.mxu0 0
  %1199 = vmatpush1.bf16.msra.mxu0 0
  %1200 = vmatprep.subr.bf16.mxu0 0
  %1201 = vmatpush1.bf16.msra.mxu0 0
  %1202 = vmatprep.subr.bf16.mxu0 0
  %1203 = vmatpush1.bf16.msra.mxu0 0
  %1204 = vmatprep.subr.bf16.mxu0 0
  %1205 = vmatpush1.bf16.msra.mxu0 0
  %1206 = vmatprep.subr.bf16.mxu0 0
  %1207 = vmatpush1.bf16.msra.mxu0 0
  %1208 = vmatprep.subr.bf16.mxu0 0
  %1209 = vmatpush1.bf16.msra.mxu0 0
  %1210 = vmatprep.subr.bf16.mxu0 0
  %1211 = vmatpush1.bf16.msra.mxu0 %v231
  %1212 = vmatprep.subr.bf16.mxu0 0
  %1213 = vmatpush2.bf16.msra.mxu0 0
  %1214 = vmatprep.subr.bf16.mxu0 0
  %1215 = vmatpush2.bf16.msra.mxu0 0
  %1216 = vmatprep.subr.bf16.mxu0 0
  %1217 = vmatpush2.bf16.msra.mxu0 0
  %1218 = vmatprep.subr.bf16.mxu0 0
  %1219 = vmatpush2.bf16.msra.mxu0 0
  %1220 = vmatprep.subr.bf16.mxu0 0
  %1221 = vmatpush2.bf16.msra.mxu0 0
  %1222 = vmatprep.subr.bf16.mxu0 0
  %1223 = vmatpush2.bf16.msra.mxu0 0
  %1224 = vmatprep.subr.bf16.mxu0 0
  %1225 = vmatpush2.bf16.msra.mxu0 0
  %1226 = vmatprep.subr.bf16.mxu0 0
  %1227 = vmatpush2.bf16.msra.mxu0 0
  %1228 = vmatprep.mubr.bf16.mxu0 0
  %1229 = vmatmul.mubr.bf16.gmra.mxu0 %v1194
  %v1230 = vpop.f32.mrf.mxu0
  %v1231 = vadd.f32 0.0, %v1230
  %v1232 = vpop.f32.mrf.mxu0
  %v1233 = vpop.f32.mrf.mxu0
  %v1234 = vpop.f32.mrf.mxu0
  %1235 = vdwg.mxu0
  %v1236 = vadd.f32 %v1188, %v1231
  %v1237 = vld [vmem:[#allocation3 + $0x2] sm:$0x3]
  %v1238 = vpack.c.bf16 %v1175, %v1175
  %1240 = vrot.lane.b32.xlu0 %v1238, 80
  %v1241 = vpop.permute.xlu0 %1240
  %v1243 = vsel %vm233, %v1241, 0
  %1245 = vmatprep.subr.bf16.mxu0 0
  %1246 = vmatpush1.bf16.msra.mxu0 0
  %1247 = vmatprep.subr.bf16.mxu0 0
  %1248 = vmatpush1.bf16.msra.mxu0 0
  %1249 = vmatprep.subr.bf16.mxu0 0
  %1250 = vmatpush1.bf16.msra.mxu0 0
  %1251 = vmatprep.subr.bf16.mxu0 0
  %1252 = vmatpush1.bf16.msra.mxu0 0
  %1253 = vmatprep.subr.bf16.mxu0 0
  %1254 = vmatpush1.bf16.msra.mxu0 0
  %1255 = vmatprep.subr.bf16.mxu0 0
  %1256 = vmatpush1.bf16.msra.mxu0 0
  %1257 = vmatprep.subr.bf16.mxu0 0
  %1258 = vmatpush1.bf16.msra.mxu0 0
  %1259 = vmatprep.subr.bf16.mxu0 0
  %1260 = vmatpush1.bf16.msra.mxu0 %v284
  %1261 = vmatprep.subr.bf16.mxu0 0
  %1262 = vmatpush2.bf16.msra.mxu0 0
  %1263 = vmatprep.subr.bf16.mxu0 0
  %1264 = vmatpush2.bf16.msra.mxu0 0
  %1265 = vmatprep.subr.bf16.mxu0 0
  %1266 = vmatpush2.bf16.msra.mxu0 0
  %1267 = vmatprep.subr.bf16.mxu0 0
  %1268 = vmatpush2.bf16.msra.mxu0 0
  %1269 = vmatprep.subr.bf16.mxu0 0
  %1270 = vmatpush2.bf16.msra.mxu0 0
  %1271 = vmatprep.subr.bf16.mxu0 0
  %1272 = vmatpush2.bf16.msra.mxu0 0
  %1273 = vmatprep.subr.bf16.mxu0 0
  %1274 = vmatpush2.bf16.msra.mxu0 0
  %1275 = vmatprep.subr.bf16.mxu0 0
  %1276 = vmatpush2.bf16.msra.mxu0 0
  %1277 = vmatprep.mubr.bf16.mxu0 0
  %1278 = vmatmul.mubr.bf16.gmra.mxu0 %v1243
  %v1279 = vpop.f32.mrf.mxu0
  %v1280 = vadd.f32 0.0, %v1279
  %v1281 = vpop.f32.mrf.mxu0
  %v1282 = vpop.f32.mrf.mxu0
  %v1283 = vpop.f32.mrf.mxu0
  %1284 = vdwg.mxu0
  %v1285 = vadd.f32 %v1237, %v1280
  %v1286 = vxor.u32 %v1236, 2147483648
  %v1287 = vmul.f32 %v1286, 1.442695
  %v1288 = vpow.pop %v1287
  %v1289 = vadd.f32 %v1288, 1.0
  %v1290 = vrcp.pop %v1289
  %v1291 = vmul.f32 1.0, %v1290
  %v1292 = vtanh.pop %v1236
  %v1293 = vmul.f32 %v1291, %v1145
  %1295 = vrot.lane.b32.xlu0 %v1292, 96
  %v1296 = vpop.permute.xlu0 %1295
  %v1298 = vmul.f32 %v1291, %v1296
  %1300 = vrot.lane.b32.xlu0 %v1298, 16
  %v1301 = vpop.permute.xlu0 %1300
  %v1303 = vadd.f32 %v1293, %v1301
  %v1304 = vtanh.pop %v1303
  %1306 = vrot.lane.b32.xlu0 %v1304, 32
  %v1307 = vpop.permute.xlu0 %1306
  %v1309 = vmul.f32 %v1291, %v1307
  %v1310 = vxor.u32 %v1285, 2147483648
  %v1311 = vmul.f32 %v1310, 1.442695
  %v1312 = vpow.pop %v1311
  %v1313 = vadd.f32 %v1312, 1.0
  %v1314 = vrcp.pop %v1313
  %v1315 = vmul.f32 1.0, %v1314
  %v1316 = vtanh.pop %v1285
  %v1317 = vmul.f32 %v1315, %v1169
  %1319 = vrot.lane.b32.xlu0 %v1316, 96
  %v1320 = vpop.permute.xlu0 %1319
  %v1322 = vmul.f32 %v1315, %v1320
  %1324 = vrot.lane.b32.xlu0 %v1322, 16
  %v1325 = vpop.permute.xlu0 %1324
  %v1327 = vadd.f32 %v1317, %v1325
  %v1328 = vtanh.pop %v1327
  %1330 = vrot.lane.b32.xlu0 %v1328, 32
  %v1331 = vpop.permute.xlu0 %1330
  %v1333 = vmul.f32 %v1315, %v1331
  %1335 = vrot.lane.b32.xlu0 %v1309, 80
  %v1336 = vpop.permute.xlu0 %1335
  %s1338 = scalar_lea.vmem [#allocation4], 12
  %1339 = vst.msk [vmem:[%s1338] sm:$0x3] %vm390, %v1336
  %1341 = vrot.lane.b32.xlu0 %v1333, 80
  %v1342 = vpop.permute.xlu0 %1341
  %s1344 = scalar_lea.vmem [#allocation5], 2
  %1345 = vst.msk [vmem:[%s1344] sm:$0x3] %vm390, %v1342
  %v1346 = vld [vmem:[#allocation2 + $0xe] sm:$0x3]
  %v1347 = vpack.c.bf16 %v1309, %v1309
  %1349 = vrot.lane.b32.xlu0 %v1347, 80
  %v1350 = vpop.permute.xlu0 %1349
  %v1352 = vsel %vm233, %v1350, 0
  %1354 = vmatprep.subr.bf16.mxu0 0
  %1355 = vmatpush1.bf16.msra.mxu0 0
  %1356 = vmatprep.subr.bf16.mxu0 0
  %1357 = vmatpush1.bf16.msra.mxu0 0
  %1358 = vmatprep.subr.bf16.mxu0 0
  %1359 = vmatpush1.bf16.msra.mxu0 0
  %1360 = vmatprep.subr.bf16.mxu0 0
  %1361 = vmatpush1.bf16.msra.mxu0 0
  %1362 = vmatprep.subr.bf16.mxu0 0
  %1363 = vmatpush1.bf16.msra.mxu0 0
  %1364 = vmatprep.subr.bf16.mxu0 0
  %1365 = vmatpush1.bf16.msra.mxu0 0
  %1366 = vmatprep.subr.bf16.mxu0 0
  %1367 = vmatpush1.bf16.msra.mxu0 0
  %1368 = vmatprep.subr.bf16.mxu0 0
  %1369 = vmatpush1.bf16.msra.mxu0 %v231
  %1370 = vmatprep.subr.bf16.mxu0 0
  %1371 = vmatpush2.bf16.msra.mxu0 0
  %1372 = vmatprep.subr.bf16.mxu0 0
  %1373 = vmatpush2.bf16.msra.mxu0 0
  %1374 = vmatprep.subr.bf16.mxu0 0
  %1375 = vmatpush2.bf16.msra.mxu0 0
  %1376 = vmatprep.subr.bf16.mxu0 0
  %1377 = vmatpush2.bf16.msra.mxu0 0
  %1378 = vmatprep.subr.bf16.mxu0 0
  %1379 = vmatpush2.bf16.msra.mxu0 0
  %1380 = vmatprep.subr.bf16.mxu0 0
  %1381 = vmatpush2.bf16.msra.mxu0 0
  %1382 = vmatprep.subr.bf16.mxu0 0
  %1383 = vmatpush2.bf16.msra.mxu0 0
  %1384 = vmatprep.subr.bf16.mxu0 0
  %1385 = vmatpush2.bf16.msra.mxu0 0
  %1386 = vmatprep.mubr.bf16.mxu0 0
  %1387 = vmatmul.mubr.bf16.gmra.mxu0 %v1352
  %v1388 = vpop.f32.mrf.mxu0
  %v1389 = vadd.f32 0.0, %v1388
  %v1390 = vpop.f32.mrf.mxu0
  %v1391 = vpop.f32.mrf.mxu0
  %v1392 = vpop.f32.mrf.mxu0
  %1393 = vdwg.mxu0
  %v1394 = vadd.f32 %v1346, %v1389
  %v1395 = vld [vmem:[#allocation3] sm:$0x3]
  %v1396 = vpack.c.bf16 %v1333, %v1333
  %1398 = vrot.lane.b32.xlu0 %v1396, 80
  %v1399 = vpop.permute.xlu0 %1398
  %v1401 = vsel %vm233, %v1399, 0
  %1403 = vmatprep.subr.bf16.mxu0 0
  %1404 = vmatpush1.bf16.msra.mxu0 0
  %1405 = vmatprep.subr.bf16.mxu0 0
  %1406 = vmatpush1.bf16.msra.mxu0 0
  %1407 = vmatprep.subr.bf16.mxu0 0
  %1408 = vmatpush1.bf16.msra.mxu0 0
  %1409 = vmatprep.subr.bf16.mxu0 0
  %1410 = vmatpush1.bf16.msra.mxu0 0
  %1411 = vmatprep.subr.bf16.mxu0 0
  %1412 = vmatpush1.bf16.msra.mxu0 0
  %1413 = vmatprep.subr.bf16.mxu0 0
  %1414 = vmatpush1.bf16.msra.mxu0 0
  %1415 = vmatprep.subr.bf16.mxu0 0
  %1416 = vmatpush1.bf16.msra.mxu0 0
  %1417 = vmatprep.subr.bf16.mxu0 0
  %1418 = vmatpush1.bf16.msra.mxu0 %v284
  %1419 = vmatprep.subr.bf16.mxu0 0
  %1420 = vmatpush2.bf16.msra.mxu0 0
  %1421 = vmatprep.subr.bf16.mxu0 0
  %1422 = vmatpush2.bf16.msra.mxu0 0
  %1423 = vmatprep.subr.bf16.mxu0 0
  %1424 = vmatpush2.bf16.msra.mxu0 0
  %1425 = vmatprep.subr.bf16.mxu0 0
  %1426 = vmatpush2.bf16.msra.mxu0 0
  %1427 = vmatprep.subr.bf16.mxu0 0
  %1428 = vmatpush2.bf16.msra.mxu0 0
  %1429 = vmatprep.subr.bf16.mxu0 0
  %1430 = vmatpush2.bf16.msra.mxu0 0
  %1431 = vmatprep.subr.bf16.mxu0 0
  %1432 = vmatpush2.bf16.msra.mxu0 0
  %1433 = vmatprep.subr.bf16.mxu0 0
  %1434 = vmatpush2.bf16.msra.mxu0 0
  %1435 = vmatprep.mubr.bf16.mxu0 0
  %1436 = vmatmul.mubr.bf16.gmra.mxu0 %v1401
  %v1437 = vpop.f32.mrf.mxu0
  %v1438 = vadd.f32 0.0, %v1437
  %v1439 = vpop.f32.mrf.mxu0
  %v1440 = vpop.f32.mrf.mxu0
  %v1441 = vpop.f32.mrf.mxu0
  %1442 = vdwg.mxu0
  %v1443 = vadd.f32 %v1395, %v1438
  %v1444 = vxor.u32 %v1394, 2147483648
  %v1445 = vmul.f32 %v1444, 1.442695
  %v1446 = vpow.pop %v1445
  %v1447 = vadd.f32 %v1446, 1.0
  %v1448 = vrcp.pop %v1447
  %v1449 = vmul.f32 1.0, %v1448
  %v1450 = vtanh.pop %v1394
  %v1451 = vmul.f32 %v1449, %v1303
  %1453 = vrot.lane.b32.xlu0 %v1450, 96
  %v1454 = vpop.permute.xlu0 %1453
  %v1456 = vmul.f32 %v1449, %v1454
  %1458 = vrot.lane.b32.xlu0 %v1456, 16
  %v1459 = vpop.permute.xlu0 %1458
  %v1461 = vadd.f32 %v1451, %v1459
  %v1462 = vtanh.pop %v1461
  %1464 = vrot.lane.b32.xlu0 %v1462, 32
  %v1465 = vpop.permute.xlu0 %1464
  %v1467 = vmul.f32 %v1449, %v1465
  %v1468 = vxor.u32 %v1443, 2147483648
  %v1469 = vmul.f32 %v1468, 1.442695
  %v1470 = vpow.pop %v1469
  %v1471 = vadd.f32 %v1470, 1.0
  %v1472 = vrcp.pop %v1471
  %v1473 = vmul.f32 1.0, %v1472
  %v1474 = vtanh.pop %v1443
  %v1475 = vmul.f32 %v1473, %v1327
  %1477 = vrot.lane.b32.xlu0 %v1474, 96
  %v1478 = vpop.permute.xlu0 %1477
  %v1480 = vmul.f32 %v1473, %v1478
  %1482 = vrot.lane.b32.xlu0 %v1480, 16
  %v1483 = vpop.permute.xlu0 %1482
  %v1485 = vadd.f32 %v1475, %v1483
  %v1486 = vtanh.pop %v1485
  %1488 = vrot.lane.b32.xlu0 %v1486, 32
  %v1489 = vpop.permute.xlu0 %1488
  %v1491 = vmul.f32 %v1473, %v1489
  %1493 = vrot.lane.b32.xlu0 %v1467, 80
  %v1494 = vpop.permute.xlu0 %1493
  %s1496 = scalar_lea.vmem [#allocation4], 14
  %1497 = vst.msk [vmem:[%s1496] sm:$0x3] %vm390, %v1494
  %1499 = vrot.lane.b32.xlu0 %v1491, 80
  %v1500 = vpop.permute.xlu0 %1499
  %1502 = vst.msk [vmem:[#allocation5] sm:$0x3] %vm390, %v1500
  %1503 = vst.msk [vmem:[#allocation6] sm:$0x3] %vm390, %v1494
  %1505 = vrot.lane.b32.xlu0 %v1461, 112
  %v1506 = vpop.permute.xlu0 %1505
  %1508 = vst.msk [vmem:[#allocation7] sm:$0x3] %vm390, %v1506
  %1509 = vst.msk [vmem:[#allocation8] sm:$0x3] %vm390, %v1500
  %1511 = vrot.lane.b32.xlu0 %v1485, 112
  %v1512 = vpop.permute.xlu0 %1511
  %1514 = vst.msk [vmem:[#allocation9] sm:$0x3] %vm390, %v1512
  %v1515 = vld [vmem:[#allocation4] sm:$0x3]
  %v1516 = vld [vmem:[#allocation4 + $0x2] sm:$0x3]
  %v1517 = vld [vmem:[#allocation4 + $0x4] sm:$0x3]
  %v1518 = vld [vmem:[#allocation4 + $0x6] sm:$0x3]
  %v1519 = vld [vmem:[#allocation4 + $0x8] sm:$0x3]
  %v1520 = vld [vmem:[#allocation4 + $0xa] sm:$0x3]
  %v1521 = vld [vmem:[#allocation4 + $0xc] sm:$0x3]
  %v1522 = vld [vmem:[#allocation4 + $0xe] sm:$0x3]
  %v1523 = vpack.c.bf16 %v1515, %v1515
  %v1524 = vpack.c.bf16 %v1516, %v1516
  %v1525 = vpack.c.bf16 %v1517, %v1517
  %v1526 = vpack.c.bf16 %v1518, %v1518
  %v1527 = vpack.c.bf16 %v1519, %v1519
  %v1528 = vpack.c.bf16 %v1520, %v1520
  %v1529 = vpack.c.bf16 %v1521, %v1521
  %v1530 = vpack.c.bf16 %v1522, %v1522
  %vm1531 = vcmask 122880
  %1532 = vst.msk [vmem:[%s5] sm:$0x1] %vm1531, %v1523
  %1533 = vst.msk [vmem:[%s5 + $0x1] sm:$0x1] %vm1531, %v1524
  %1534 = vst.msk [vmem:[%s5 + $0x2] sm:$0x1] %vm1531, %v1525
  %1535 = vst.msk [vmem:[%s5 + $0x3] sm:$0x1] %vm1531, %v1526
  %1536 = vst.msk [vmem:[%s5 + $0x4] sm:$0x1] %vm1531, %v1527
  %1537 = vst.msk [vmem:[%s5 + $0x5] sm:$0x1] %vm1531, %v1528
  %1538 = vst.msk [vmem:[%s5 + $0x6] sm:$0x1] %vm1531, %v1529
  %1539 = vst.msk [vmem:[%s5 + $0x7] sm:$0x1] %vm1531, %v1530
  %v1540 = vld [vmem:[#allocation5] sm:$0x3]
  %v1541 = vld [vmem:[#allocation5 + $0x2] sm:$0x3]
  %v1542 = vld [vmem:[#allocation5 + $0x4] sm:$0x3]
  %v1543 = vld [vmem:[#allocation5 + $0x6] sm:$0x3]
  %v1544 = vld [vmem:[#allocation5 + $0x8] sm:$0x3]
  %v1545 = vld [vmem:[#allocation5 + $0xa] sm:$0x3]
  %v1546 = vld [vmem:[#allocation5 + $0xc] sm:$0x3]
  %v1547 = vld [vmem:[#allocation5 + $0xe] sm:$0x3]
  %v1548 = vpack.c.bf16 %v1540, %v1540
  %v1549 = vpack.c.bf16 %v1541, %v1541
  %v1550 = vpack.c.bf16 %v1542, %v1542
  %v1551 = vpack.c.bf16 %v1543, %v1543
  %v1552 = vpack.c.bf16 %v1544, %v1544
  %v1553 = vpack.c.bf16 %v1545, %v1545
  %v1554 = vpack.c.bf16 %v1546, %v1546
  %v1555 = vpack.c.bf16 %v1547, %v1547
  %1556 = vst.msk [vmem:[%s53] sm:$0x1] %vm1531, %v1548
  %1557 = vst.msk [vmem:[%s53 + $0x1] sm:$0x1] %vm1531, %v1549
  %1558 = vst.msk [vmem:[%s53 + $0x2] sm:$0x1] %vm1531, %v1550
  %1559 = vst.msk [vmem:[%s53 + $0x3] sm:$0x1] %vm1531, %v1551
  %1560 = vst.msk [vmem:[%s53 + $0x4] sm:$0x1] %vm1531, %v1552
  %1561 = vst.msk [vmem:[%s53 + $0x5] sm:$0x1] %vm1531, %v1553
  %1562 = vst.msk [vmem:[%s53 + $0x6] sm:$0x1] %vm1531, %v1554
  %1563 = vst.msk [vmem:[%s53 + $0x7] sm:$0x1] %vm1531, %v1555
  %s1564 = ssub.s32 0, 0
  %s1565 = smul.u32 8, %s1564
  %p1566 = scmp.lt.s32.totalorder %s1565, 7
  %s1567 = scalar_select %p1566, %s1565, 7
  %s1568 = scalar_lea.vmem %s6, %s1567
  // Predicated region
  $region26: #{lstm_module_forward.2} parent=0 // pred_check
    _
  $region27: #{lstm_module_forward.2} parent=0 // pred_check_branch
    %1570 = sbr.rel (0) target = $region29
  $region28: #{lstm_module_forward.2} parent=0 // pred_region
    _
  $region29: #{lstm_module_forward.2} parent=0 // pred_fallthru
    _
  // Predicated region
  $region30: #{lstm_module_forward.2} parent=0 // pred_check
    _
  $region31: #{lstm_module_forward.2} parent=0 // pred_check_branch
    %1572 = sbr.rel (0) target = $region33
  $region32: #{lstm_module_forward.2} parent=0 // pred_region
    %s1573 = ssub.s32 0, 0
    %s1574 = smul.u32 8, %s1573
  $region33: #{lstm_module_forward.2} parent=0 // pred_fallthru
    _
  // Predicated region
  $region34: #{lstm_module_forward.2} parent=0 // pred_check
    _
  $region35: #{lstm_module_forward.2} parent=0 // pred_check_branch
    %1576 = sbr.rel (0) target = $region37
  $region36: #{lstm_module_forward.2} parent=0 // pred_region
    _
  $region37: #{lstm_module_forward.2} parent=0 // pred_fallthru
    _
  // Predicated region
  $region38: #{lstm_module_forward.2} parent=0 // pred_check
    _
  $region39: #{lstm_module_forward.2} parent=0 // pred_check_branch
    %1578 = sbr.rel (0) target = $region41
  $region40: #{lstm_module_forward.2} parent=0 // pred_region
    %s1579 = ssub.s32 0, 0
    %s1580 = smul.u32 8, %s1579
    %p1581 = scmp.lt.s32.totalorder %s1580, 7
    %s1582 = scalar_select %p1581, %s1580, 7
    %s1583 = scalar_lea.vmem %s6, %s1582
  $region41: #{lstm_module_forward.2} parent=0 // pred_fallthru
    _

</llo_original>
